<compile_context>
chip_gen: v5e
topology: v5e:2x2
jax: 0.10.0
libtpu: 0.0.40
codegen_flags: <defaults>
</compile_context>

<pallas_src>
import functools

import jax
import jax.numpy as jnp
from jax.experimental import pallas as pl
from jax.experimental.pallas import tpu as pltpu

BN_EPS = 1e-5
# The PyTorch module defaults to training mode -> BatchNorm1d normalizes with
# batch statistics.  Set to False for inference-mode (running-stat) BatchNorm.
BN_USE_BATCH_STATS = True


# ------------------------------ kernel helpers ------------------------------

def _bn(y, gamma, beta, batch_stats):
    """BatchNorm1d over rows (batch*length) of a (M, C) f32 array."""
    if batch_stats:
        # NOTE: valid because every kernel uses grid=(1,) and its block spans
        # all M rows; if M were ever tiled this would need a two-pass scheme.
        mean = jnp.mean(y, axis=0, keepdims=True)
        var = jnp.mean(jnp.square(y - mean), axis=0, keepdims=True)
        y = (y - mean) * jax.lax.rsqrt(var + BN_EPS)
    return y * gamma + beta


def _full_spec(shape):
    zeros = (0,) * len(shape)
    return pl.BlockSpec(shape, lambda i: zeros)


def _bn_affine(bn):
    c = bn["gamma"].shape[0]
    if BN_USE_BATCH_STATS:
        return bn["gamma"].reshape(1, c), bn["beta"].reshape(1, c)
    scale = bn["gamma"] * jax.lax.rsqrt(bn["running_var"] + BN_EPS)
    shift = bn["beta"] - bn["running_mean"] * scale
    return scale.reshape(1, c), shift.reshape(1, c)


def _zero_padded_rows(y, B, L, D):
    """(B*L, D) f32 -> (B*(L+2), D) with one zero row per batch at each end."""
    zrow = jnp.zeros((1, D), jnp.float32)
    pieces = []
    for b in range(B):
        pieces += [zrow, y[b * L:(b + 1) * L, :], zrow]
    return jnp.concatenate(pieces, axis=0)


# ------------------------------- Pallas kernels ------------------------------

def _stem_kernel(cfg, x_ref, w_ref, g_ref, b_ref, o_ref):
    """conv1d(3->64, k=3, s=1, p=1) + BN + ReLU, fused."""
    B, L, Cin, batch_stats = cfg
    f32 = jnp.float32
    xv = x_ref[...].astype(f32)                             # (B*L, Cin)
    xpad = _zero_padded_rows(xv, B, L, Cin).astype(jnp.bfloat16)
    zk = [jnp.dot(xpad, w_ref[k], preferred_element_type=f32) for k in range(3)]
    rows = []
    for b in range(B):
        o = b * (L + 2)
        rows.append(zk[0][o:o + L] + zk[1][o + 1:o + 1 + L]
                    + zk[2][o + 2:o + 2 + L])
    y = jnp.concatenate(rows, axis=0)                        # (B*L, Cout) f32
    y = jnp.maximum(_bn(y, g_ref[...], b_ref[...], batch_stats), 0.0)
    o_ref[...] = y.astype(o_ref.dtype)


def _bottleneck_kernel(cfg, *refs):
    """Whole ResNeXt bottleneck fused into one kernel (VMEM-resident)."""
    (B, L, L2, stride, groups, D, Cg, Cout,
     has_sc, sc_sep, batch_stats) = cfg
    refs = list(refs)
    x_ref = refs.pop(0)
    xs_ref = refs.pop(0) if sc_sep else None
    wr_ref, g1_ref, b1_ref = refs.pop(0), refs.pop(0), refs.pop(0)
    wc_ref, g2_ref, b2_ref = refs.pop(0), refs.pop(0), refs.pop(0)
    we_ref, g3_ref, b3_ref = refs.pop(0), refs.pop(0), refs.pop(0)
    if has_sc:
        ws_ref, gs_ref, bs_ref = refs.pop(0), refs.pop(0), refs.pop(0)
    o_ref = refs.pop(0)

    f32 = jnp.float32
    x = x_ref[...]                                           # (B*L, Cin) bf16

    # ---- conv_reduce (1x1) + bn_reduce + ReLU ----
    y1 = jnp.dot(x, wr_ref[...], preferred_element_type=f32)
    y1 = jnp.maximum(_bn(y1, g1_ref[...], b1_ref[...], batch_stats), 0.0)

    # zero-pad along length per batch (stays in registers/VMEM)
    y1pad = _zero_padded_rows(y1, B, L, D).astype(jnp.bfloat16)  # (B*(L+2), D)

    # stride>1 downsampling as a tiny selection matmul (avoids strided slices)
    if stride > 1:
        ti = jax.lax.broadcasted_iota(jnp.int32, (L2, L), 0)
        ri = jax.lax.broadcasted_iota(jnp.int32, (L2, L), 1)
        sel = (ri == ti * stride).astype(f32)                # (L2, L)

    # ---- grouped 3-tap conv: per-group matmuls, shifted-tap accumulation ----
    parts = [[None] * groups for _ in range(B)]
    for g in range(groups):
        xg = y1pad[:, g * Cg:(g + 1) * Cg]                   # (B*(L+2), Cg)
        zk = [jnp.dot(xg, wc_ref[g * 3 + k], preferred_element_type=f32)
              for k in range(3)]                             # each (B*(L+2), Cg)
        for b in range(B):
            o = b * (L + 2)
            zs = (zk[0][o:o + L] + zk[1][o + 1:o + 1 + L]
                  + zk[2][o + 2:o + 2 + L])                  # (L, Cg)
            parts[b][g] = zs if stride == 1 else jnp.dot(
                sel, zs, preferred_element_type=f32)         # (L2, Cg)
    y2 = jnp.concatenate(
        [jnp.concatenate(parts[b], axis=1) for b in range(B)], axis=0)

    # ---- bn + ReLU ----
    y2 = jnp.maximum(_bn(y2, g2_ref[...], b2_ref[...], batch_stats), 0.0)

    # ---- conv_expand (1x1) + bn_expand (no ReLU yet) ----
    y3 = jnp.dot(y2.astype(jnp.bfloat16), we_ref[...],
                 preferred_element_type=f32)                 # (B*L2, Cout)
    y3 = _bn(y3, g3_ref[...], b3_ref[...], batch_stats)

    # ---- shortcut path ----
    if has_sc:
        xs = xs_ref[...] if sc_sep else x                    # bf16
        rs = jnp.dot(xs, ws_ref[...], preferred_element_type=f32)
        rs = _bn(rs, gs_ref[...], bs_ref[...], batch_stats)
    else:
        rs = x.astype(f32)                                   # identity (stride==1)

    o_ref[...] = jnp.maximum(y3 + rs, 0.0).astype(o_ref.dtype)


def _head_kernel(B, Lp, x_ref, w_ref, b_ref, o_ref):
    """avg_pool1d(Lp) + Linear (lane-padded output), fused."""
    f32 = jnp.float32
    xv = x_ref[...].astype(f32)                              # (B*Lp, C)
    bi = jax.lax.broadcasted_iota(jnp.int32, (B, B * Lp), 0)
    ri = jax.lax.broadcasted_iota(jnp.int32, (B, B * Lp), 1)
    mask = (ri >= bi * Lp) & (ri < (bi + 1) * Lp)
    pool = jnp.where(mask, 1.0 / Lp, 0.0).astype(f32)        # (B, B*Lp)
    pooled = jnp.dot(pool, xv, preferred_element_type=f32)   # (B, C)
    logits = jnp.dot(pooled.astype(jnp.bfloat16), w_ref[...],
                     preferred_element_type=f32) + b_ref[...]
    o_ref[...] = logits


# ------------------------------ kernel wrappers ------------------------------

_CPARAMS = pltpu.CompilerParams(dimension_semantics=("arbitrary",))


def stem_forward(x_blc, w, bn):
    B, L, Cin = x_blc.shape
    Cout = w.shape[2]
    g, b = _bn_affine(bn)
    x_flat = x_blc.reshape(B * L, Cin)
    out = pl.pallas_call(
        functools.partial(_stem_kernel, (B, L, Cin, BN_USE_BATCH_STATS)),
        out_shape=jax.ShapeDtypeStruct((B * L, Cout), jnp.bfloat16),
        grid=(1,),
        in_specs=[_full_spec(x_flat.shape), _full_spec(w.shape),
                  _full_spec(g.shape), _full_spec(b.shape)],
        out_specs=_full_spec((B * L, Cout)),
        compiler_params=_CPARAMS,
    )(x_flat, w, g, b)
    return out.reshape(B, L, Cout)


def bottleneck_forward(x_blc, p, stride, cardinality):
    B, L, Cin = x_blc.shape
    D = p["w_reduce"].shape[1]
    Cout = p["w_expand"].shape[1]
    Cg = D // cardinality
    L2 = (L + 2 - 3) // stride + 1
    has_sc = "w_shortcut" in p
    sc_sep = has_sc and stride > 1
    if not has_sc:
        assert stride == 1  # identity shortcut implies stride 1 (as in PyTorch)

    x_flat = x_blc.reshape(B * L, Cin)
    inputs = [x_flat]
    if sc_sep:  # shortcut sees the stride-subsampled input
        inputs.append(x_blc[:, ::stride, :].reshape(B * L2, Cin))
    g1, b1 = _bn_affine(p["bn_reduce"])
    g2, b2 = _bn_affine(p["bn"])
    g3, b3 = _bn_affine(p["bn_expand"])
    inputs += [p["w_reduce"], g1, b1, p["w_conv"], g2, b2,
               p["w_expand"], g3, b3]
    if has_sc:
        gs, bs = _bn_affine(p["bn_shortcut"])
        inputs += [p["w_shortcut"], gs, bs]

    cfg = (B, L, L2, stride, cardinality, D, Cg, Cout,
           has_sc, sc_sep, BN_USE_BATCH_STATS)
    out = pl.pallas_call(
        functools.partial(_bottleneck_kernel, cfg),
        out_shape=jax.ShapeDtypeStruct((B * L2, Cout), jnp.bfloat16),
        grid=(1,),
        in_specs=[_full_spec(a.shape) for a in inputs],
        out_specs=_full_spec((B * L2, Cout)),
        compiler_params=_CPARAMS,
    )(*inputs)
    return out.reshape(B, L2, Cout)


def head_forward(x_flat, w, bias, B, Lp):
    NP = w.shape[1]
    return pl.pallas_call(
        functools.partial(_head_kernel, B, Lp),
        out_shape=jax.ShapeDtypeStruct((B, NP), jnp.float32),
        grid=(1,),
        in_specs=[_full_spec(x_flat.shape), _full_spec(w.shape),
                  _full_spec(bias.shape)],
        out_specs=_full_spec((B, NP)),
        compiler_params=_CPARAMS,
    )(x_flat, w, bias)


# ------------------------------- parameters ---------------------------------

def _key_stream(key):
    while True:
        key, sub = jax.random.split(key)
        yield sub


def _kaiming(key, shape, fan):
    return (2.0 / fan) ** 0.5 * jax.random.normal(key, shape, dtype=jnp.float32)


def _bn_params(c):
    return {
        "gamma": jnp.ones((c,), jnp.float32),
        "beta": jnp.zeros((c,), jnp.float32),
        "running_mean": jnp.zeros((c,), jnp.float32),
        "running_var": jnp.ones((c,), jnp.float32),
    }


def _round_up(n, m):
    return ((n + m - 1) // m) * m


def _make_bottleneck_params(ks, in_c, out_c, cardinality, base_width,
                            widen_factor):
    width_ratio = out_c / (widen_factor * 64.0)
    D = cardinality * int(base_width * width_ratio)
    Cg = D // cardinality
    p = {
        # all weights stored matmul-ready (K, N), bf16 for the MXU
        "w_reduce": _kaiming(next(ks), (in_c, D), D).astype(jnp.bfloat16),
        "bn_reduce": _bn_params(D),
        # grouped conv weights: index [g*3 + k] -> (Cg, Cg) tap-k weight
        "w_conv": _kaiming(next(ks), (cardinality * 3, Cg, Cg),
                           D * 3).astype(jnp.bfloat16),
        "bn": _bn_params(D),
        "w_expand": _kaiming(next(ks), (D, out_c), out_c).astype(jnp.bfloat16),
        "bn_expand": _bn_params(out_c),
    }
    if in_c != out_c:
        p["w_shortcut"] = _kaiming(next(ks), (in_c, out_c),
                                   out_c).astype(jnp.bfloat16)
        p["bn_shortcut"] = _bn_params(out_c)
    return p


def make_resnext_params(key, cardinality, depth, nlabels, base_width,
                        widen_factor):
    ks = _key_stream(key)
    block_depth = (depth - 2) // 9
    stages = [64, 64 * widen_factor, 128 * widen_factor, 256 * widen_factor]
    npad = _round_up(nlabels, 128)  # lane-dense classifier output

    params = {
        "w_stem": _kaiming(next(ks), (3, 3, 64), 64 * 3).astype(jnp.bfloat16),
        "bn_stem": _bn_params(64),
    }
    w_cls = _kaiming(next(ks), (stages[3], nlabels), stages[3])
    params["w_cls"] = (jnp.zeros((stages[3], npad), jnp.float32)
                       .at[:, :nlabels].set(w_cls).astype(jnp.bfloat16))
    params["b_cls"] = jnp.zeros((1, npad), jnp.float32)

    def make_stage(in_c, out_c, pool_stride):
        blocks, strides = [], []
        for i in range(block_depth):
            ic = in_c if i == 0 else out_c
            st = pool_stride if i == 0 else 1
            blocks.append(_make_bottleneck_params(
                ks, ic, out_c, cardinality, base_width, widen_factor))
            strides.append(st)
        return blocks, tuple(strides)

    all_strides = []
    stage_cfgs = ((stages[0], stages[1], 1),
                  (stages[1], stages[2], 2),
                  (stages[2], stages[3], 2))
    for name, (ic, oc, ps) in zip(("stage_1", "stage_2", "stage_3"),
                                  stage_cfgs):
        blocks, strides = make_stage(ic, oc, ps)
        params[name] = blocks
        all_strides.append(strides)
    return params, stages, tuple(all_strides)


# --------------------------------- forward ----------------------------------

def resnext_forward(x_ncl, params, *, cardinality, strides, nlabels,
                    stages_last):
    B, _, L = x_ncl.shape
    # single channels-last transpose of the tiny input; everything downstream
    # stays channels-last (lane = channel)
    x_blc = jnp.transpose(x_ncl, (0, 2, 1)).astype(jnp.bfloat16)

    y = stem_forward(x_blc, params["w_stem"], params["bn_stem"])
    for sname, sstrides in zip(("stage_1", "stage_2", "stage_3"), strides):
        for bp, stride in zip(params[sname], sstrides):
            y = bottleneck_forward(y, bp, stride, cardinality)

    Bf, Lf, Cf = y.shape
    # F.avg_pool1d(x, 7) + view(-1, stages[3]) requires the remaining length
    # to be exactly 7 (single pooling window).
    assert Lf == 7 and Cf == stages_last
    logits = head_forward(y.reshape(Bf * Lf, Cf), params["w_cls"],
                          params["b_cls"], Bf, Lf)
    return logits[:, :nlabels]


resnext_forward_jit = jax.jit(
    resnext_forward,
    static_argnames=("cardinality", "strides", "nlabels", "stages_last"))


# ----------------------------------- main ------------------------------------

if __name__ == "__main__":
    # Small but structurally faithful config:
    #   cardinality=2, depth=11 (-> block_depth=1), nlabels=10,
    #   base_width=4, widen_factor=1  => stages [64, 64, 128, 256]
    cardinality, depth, nlabels, base_width, widen_factor = 2, 11, 10, 4, 1
    key = jax.random.PRNGKey(0)
    pkey, xkey = jax.random.split(key)
    params, stages, strides = make_resnext_params(
        pkey, cardinality, depth, nlabels, base_width, widen_factor)

    # length 28 -> stage_2 stride 2 -> 14 -> stage_3 stride 2 -> 7, so the
    # avg_pool1d(7) window covers the whole remaining sequence.
    x = jax.random.normal(xkey, (2, 3, 28), dtype=jnp.float32)

    out = resnext_forward_jit(x, params, cardinality=cardinality,
                              strides=strides, nlabels=nlabels,
                              stages_last=stages[3])
    out = jax.block_until_ready(out)
    assert out.shape == (2, nlabels)
    assert bool(jnp.all(jnp.isfinite(out)))
    # TODO(synk): BatchNorm running-stat buffer updates (training-mode side
    # effect, does not change the forward output) are not reproduced.
    print("KERNEL_OK")
</pallas_src>

<mosaic_0001>
module attributes {stable_mosaic.version = 11 : i64} {
  func.func @_stem_kernel(%arg0: i32, %arg1: memref<56x3xbf16, #tpu.memory_space<vmem>>, %arg2: memref<3x3x64xbf16, #tpu.memory_space<vmem>>, %arg3: memref<1x64xf32, #tpu.memory_space<vmem>>, %arg4: memref<1x64xf32, #tpu.memory_space<vmem>>, %arg5: memref<56x64xbf16, #tpu.memory_space<vmem>>) attributes {dimension_semantics = [#tpu.dimension_semantics<arbitrary>], iteration_bounds = array<i64: 1>, scalar_prefetch = 0 : i64, scratch_operands = 0 : i64, tpu.core_type = #tpu.core_type<tc>, window_params = [{pipeline_mode = #tpu.pipeline_mode<synchronous>, transform_indices = @transform_0, window_bounds = array<i64: 56, 3>}, {pipeline_mode = #tpu.pipeline_mode<synchronous>, transform_indices = @transform_1, window_bounds = array<i64: 3, 3, 64>}, {pipeline_mode = #tpu.pipeline_mode<synchronous>, transform_indices = @transform_2, window_bounds = array<i64: 1, 64>}, {pipeline_mode = #tpu.pipeline_mode<synchronous>, transform_indices = @transform_3, window_bounds = array<i64: 1, 64>}, {pipeline_mode = #tpu.pipeline_mode<synchronous>, transform_indices = @transform_4, window_bounds = array<i64: 56, 64>}]} {
    %c0 = arith.constant 0 : index
    %c0_0 = arith.constant 0 : index
    %0 = vector.load %arg1[%c0, %c0_0] : memref<56x3xbf16, #tpu.memory_space<vmem>>, vector<56x3xbf16>
    %1 = arith.extf %0 : vector<56x3xbf16> to vector<56x3xf32>
    %cst = arith.constant 0.000000e+00 : f32
    %2 = vector.broadcast %cst : f32 to vector<1x3xf32>
    %3 = vector.extract_strided_slice %1 {offsets = [0, 0], sizes = [28, 3], strides = [1, 1]} : vector<56x3xf32> to vector<28x3xf32>
    %4 = vector.extract_strided_slice %1 {offsets = [28, 0], sizes = [28, 3], strides = [1, 1]} : vector<56x3xf32> to vector<28x3xf32>
    %5 = tpu.concatenate %2, %3, %2, %2, %4, %2 in 0 : vector<1x3xf32>, vector<28x3xf32>, vector<1x3xf32>, vector<1x3xf32>, vector<28x3xf32>, vector<1x3xf32> -> vector<60x3xf32>
    %6 = arith.truncf %5 : vector<60x3xf32> to vector<60x3xbf16>
    %c0_1 = arith.constant 0 : index
    %c0_2 = arith.constant 0 : index
    %c0_3 = arith.constant 0 : index
    %7 = vector.load %arg2[%c0_1, %c0_2, %c0_3] : memref<3x3x64xbf16, #tpu.memory_space<vmem>>, vector<1x3x64xbf16>
    %8 = vector.shape_cast %7 : vector<1x3x64xbf16> to vector<3x64xbf16>
    %cst_4 = arith.constant dense<0.000000e+00> : vector<60x64xf32>
    %9 = tpu.matmul %6, %8, %cst_4 {dimension_numbers = #tpu.dot_dimension_numbers<[1], [0], [0], [1], [0, 0, 1, 1], [], []>} : vector<60x3xbf16>, vector<3x64xbf16>, vector<60x64xf32> -> vector<60x64xf32>
    %c1 = arith.constant 1 : index
    %c0_5 = arith.constant 0 : index
    %c0_6 = arith.constant 0 : index
    %10 = vector.load %arg2[%c1, %c0_5, %c0_6] : memref<3x3x64xbf16, #tpu.memory_space<vmem>>, vector<1x3x64xbf16>
    %11 = vector.shape_cast %10 : vector<1x3x64xbf16> to vector<3x64xbf16>
    %cst_7 = arith.constant dense<0.000000e+00> : vector<60x64xf32>
    %12 = tpu.matmul %6, %11, %cst_7 {dimension_numbers = #tpu.dot_dimension_numbers<[1], [0], [0], [1], [0, 0, 1, 1], [], []>} : vector<60x3xbf16>, vector<3x64xbf16>, vector<60x64xf32> -> vector<60x64xf32>
    %c2 = arith.constant 2 : index
    %c0_8 = arith.constant 0 : index
    %c0_9 = arith.constant 0 : index
    %13 = vector.load %arg2[%c2, %c0_8, %c0_9] : memref<3x3x64xbf16, #tpu.memory_space<vmem>>, vector<1x3x64xbf16>
    %14 = vector.shape_cast %13 : vector<1x3x64xbf16> to vector<3x64xbf16>
    %cst_10 = arith.constant dense<0.000000e+00> : vector<60x64xf32>
    %15 = tpu.matmul %6, %14, %cst_10 {dimension_numbers = #tpu.dot_dimension_numbers<[1], [0], [0], [1], [0, 0, 1, 1], [], []>} : vector<60x3xbf16>, vector<3x64xbf16>, vector<60x64xf32> -> vector<60x64xf32>
    %16 = vector.extract_strided_slice %9 {offsets = [0, 0], sizes = [28, 64], strides = [1, 1]} : vector<60x64xf32> to vector<28x64xf32>
    %17 = vector.extract_strided_slice %12 {offsets = [1, 0], sizes = [28, 64], strides = [1, 1]} : vector<60x64xf32> to vector<28x64xf32>
    %18 = arith.addf %16, %17 : vector<28x64xf32>
    %19 = vector.extract_strided_slice %15 {offsets = [2, 0], sizes = [28, 64], strides = [1, 1]} : vector<60x64xf32> to vector<28x64xf32>
    %20 = arith.addf %18, %19 : vector<28x64xf32>
    %21 = vector.extract_strided_slice %9 {offsets = [30, 0], sizes = [28, 64], strides = [1, 1]} : vector<60x64xf32> to vector<28x64xf32>
    %22 = vector.extract_strided_slice %12 {offsets = [31, 0], sizes = [28, 64], strides = [1, 1]} : vector<60x64xf32> to vector<28x64xf32>
    %23 = arith.addf %21, %22 : vector<28x64xf32>
    %24 = vector.extract_strided_slice %15 {offsets = [32, 0], sizes = [28, 64], strides = [1, 1]} : vector<60x64xf32> to vector<28x64xf32>
    %25 = arith.addf %23, %24 : vector<28x64xf32>
    %26 = tpu.concatenate %20, %25 in 0 : vector<28x64xf32>, vector<28x64xf32> -> vector<56x64xf32>
    %c0_11 = arith.constant 0 : index
    %c0_12 = arith.constant 0 : index
    %27 = vector.load %arg3[%c0_11, %c0_12] : memref<1x64xf32, #tpu.memory_space<vmem>>, vector<1x64xf32>
    %c0_13 = arith.constant 0 : index
    %c0_14 = arith.constant 0 : index
    %28 = vector.load %arg4[%c0_13, %c0_14] : memref<1x64xf32, #tpu.memory_space<vmem>>, vector<1x64xf32>
    %cst_15 = arith.constant dense<0.000000e+00> : vector<64xf32>
    %29 = vector.multi_reduction <add>, %26, %cst_15 [0] : vector<56x64xf32> to vector<64xf32>
    %30 = vector.shape_cast %29 : vector<64xf32> to vector<1x64xf32>
    %cst_16 = arith.constant 5.600000e+01 : f32
    %31 = vector.broadcast %cst_16 : f32 to vector<1x64xf32>
    %32 = arith.divf %30, %31 : vector<1x64xf32>
    %33 = vector.broadcast %32 : vector<1x64xf32> to vector<56x64xf32>
    %34 = arith.subf %26, %33 : vector<56x64xf32>
    %35 = arith.mulf %34, %34 : vector<56x64xf32>
    %cst_17 = arith.constant dense<0.000000e+00> : vector<64xf32>
    %36 = vector.multi_reduction <add>, %35, %cst_17 [0] : vector<56x64xf32> to vector<64xf32>
    %37 = vector.shape_cast %36 : vector<64xf32> to vector<1x64xf32>
    %cst_18 = arith.constant 5.600000e+01 : f32
    %38 = vector.broadcast %cst_18 : f32 to vector<1x64xf32>
    %39 = arith.divf %37, %38 : vector<1x64xf32>
    %40 = vector.broadcast %32 : vector<1x64xf32> to vector<56x64xf32>
    %41 = arith.subf %26, %40 : vector<56x64xf32>
    %cst_19 = arith.constant 9.99999974E-6 : f32
    %42 = vector.broadcast %cst_19 : f32 to vector<1x64xf32>
    %43 = arith.addf %39, %42 : vector<1x64xf32>
    %44 = math.rsqrt %43 : vector<1x64xf32>
    %45 = vector.broadcast %44 : vector<1x64xf32> to vector<56x64xf32>
    %46 = arith.mulf %41, %45 : vector<56x64xf32>
    %47 = vector.broadcast %27 : vector<1x64xf32> to vector<56x64xf32>
    %48 = arith.mulf %46, %47 : vector<56x64xf32>
    %49 = vector.broadcast %28 : vector<1x64xf32> to vector<56x64xf32>
    %50 = arith.addf %48, %49 : vector<56x64xf32>
    %cst_20 = arith.constant 0.000000e+00 : f32
    %51 = vector.broadcast %cst_20 : f32 to vector<56x64xf32>
    %52 = arith.maximumf %50, %51 : vector<56x64xf32>
    %53 = arith.truncf %52 : vector<56x64xf32> to vector<56x64xbf16>
    %c0_21 = arith.constant 0 : index
    %c0_22 = arith.constant 0 : index
    %54 = vector.load %arg5[%c0_21, %c0_22] : memref<56x64xbf16, #tpu.memory_space<vmem>>, vector<56x64xbf16>
    tpu.vector_store %arg5[%c0_21, %c0_22], %53 {strides = array<i32>} : memref<56x64xbf16, #tpu.memory_space<vmem>>, vector<56x64xbf16>,
    return
  }
  func.func @transform_0(%arg0: i32) -> (i32, i32) {
    %c0_i32 = arith.constant 0 : i32
    %c0_i32_0 = arith.constant 0 : i32
    %c0_i32_1 = arith.constant 0 : i32
    return %c0_i32, %c0_i32_0 : i32, i32
  }
  func.func @transform_1(%arg0: i32) -> (i32, i32, i32) {
    %c0_i32 = arith.constant 0 : i32
    %c0_i32_0 = arith.constant 0 : i32
    %c0_i32_1 = arith.constant 0 : i32
    %c0_i32_2 = arith.constant 0 : i32
    return %c0_i32, %c0_i32_0, %c0_i32_1 : i32, i32, i32
  }
  func.func @transform_2(%arg0: i32) -> (i32, i32) {
    %c0_i32 = arith.constant 0 : i32
    %c0_i32_0 = arith.constant 0 : i32
    %c0_i32_1 = arith.constant 0 : i32
    return %c0_i32, %c0_i32_0 : i32, i32
  }
  func.func @transform_3(%arg0: i32) -> (i32, i32) {
    %c0_i32 = arith.constant 0 : i32
    %c0_i32_0 = arith.constant 0 : i32
    %c0_i32_1 = arith.constant 0 : i32
    return %c0_i32, %c0_i32_0 : i32, i32
  }
  func.func @transform_4(%arg0: i32) -> (i32, i32) {
    %c0_i32 = arith.constant 0 : i32
    %c0_i32_0 = arith.constant 0 : i32
    %c0_i32_1 = arith.constant 0 : i32
    return %c0_i32, %c0_i32_0 : i32, i32
  }
}

module attributes {stable_mosaic.version = 11 : i64} {
  func.func @_bottleneck_kernel(%arg0: i32, %arg1: memref<56x64xbf16, #tpu.memory_space<vmem>>, %arg2: memref<64x8xbf16, #tpu.memory_space<vmem>>, %arg3: memref<1x8xf32, #tpu.memory_space<vmem>>, %arg4: memref<1x8xf32, #tpu.memory_space<vmem>>, %arg5: memref<6x4x4xbf16, #tpu.memory_space<vmem>>, %arg6: memref<1x8xf32, #tpu.memory_space<vmem>>, %arg7: memref<1x8xf32, #tpu.memory_space<vmem>>, %arg8: memref<8x64xbf16, #tpu.memory_space<vmem>>, %arg9: memref<1x64xf32, #tpu.memory_space<vmem>>, %arg10: memref<1x64xf32, #tpu.memory_space<vmem>>, %arg11: memref<56x64xbf16, #tpu.memory_space<vmem>>) attributes {dimension_semantics = [#tpu.dimension_semantics<arbitrary>], iteration_bounds = array<i64: 1>, scalar_prefetch = 0 : i64, scratch_operands = 0 : i64, tpu.core_type = #tpu.core_type<tc>, window_params = [{pipeline_mode = #tpu.pipeline_mode<synchronous>, transform_indices = @transform_0, window_bounds = array<i64: 56, 64>}, {pipeline_mode = #tpu.pipeline_mode<synchronous>, transform_indices = @transform_1, window_bounds = array<i64: 64, 8>}, {pipeline_mode = #tpu.pipeline_mode<synchronous>, transform_indices = @transform_2, window_bounds = array<i64: 1, 8>}, {pipeline_mode = #tpu.pipeline_mode<synchronous>, transform_indices = @transform_3, window_bounds = array<i64: 1, 8>}, {pipeline_mode = #tpu.pipeline_mode<synchronous>, transform_indices = @transform_4, window_bounds = array<i64: 6, 4, 4>}, {pipeline_mode = #tpu.pipeline_mode<synchronous>, transform_indices = @transform_5, window_bounds = array<i64: 1, 8>}, {pipeline_mode = #tpu.pipeline_mode<synchronous>, transform_indices = @transform_6, window_bounds = array<i64: 1, 8>}, {pipeline_mode = #tpu.pipeline_mode<synchronous>, transform_indices = @transform_7, window_bounds = array<i64: 8, 64>}, {pipeline_mode = #tpu.pipeline_mode<synchronous>, transform_indices = @transform_8, window_bounds = array<i64: 1, 64>}, {pipeline_mode = #tpu.pipeline_mode<synchronous>, transform_indices = @transform_9, window_bounds = array<i64: 1, 64>}, {pipeline_mode = #tpu.pipeline_mode<synchronous>, transform_indices = @transform_10, window_bounds = array<i64: 56, 64>}]} {
    %c0 = arith.constant 0 : index
    %c0_0 = arith.constant 0 : index
    %0 = vector.load %arg1[%c0, %c0_0] : memref<56x64xbf16, #tpu.memory_space<vmem>>, vector<56x64xbf16>
    %c0_1 = arith.constant 0 : index
    %c0_2 = arith.constant 0 : index
    %1 = vector.load %arg2[%c0_1, %c0_2] : memref<64x8xbf16, #tpu.memory_space<vmem>>, vector<64x8xbf16>
    %cst = arith.constant dense<0.000000e+00> : vector<56x8xf32>
    %2 = tpu.matmul %0, %1, %cst {dimension_numbers = #tpu.dot_dimension_numbers<[1], [0], [0], [1], [0, 0, 1, 1], [], []>} : vector<56x64xbf16>, vector<64x8xbf16>, vector<56x8xf32> -> vector<56x8xf32>
    %c0_3 = arith.constant 0 : index
    %c0_4 = arith.constant 0 : index
    %3 = vector.load %arg3[%c0_3, %c0_4] : memref<1x8xf32, #tpu.memory_space<vmem>>, vector<1x8xf32>
    %c0_5 = arith.constant 0 : index
    %c0_6 = arith.constant 0 : index
    %4 = vector.load %arg4[%c0_5, %c0_6] : memref<1x8xf32, #tpu.memory_space<vmem>>, vector<1x8xf32>
    %cst_7 = arith.constant dense<0.000000e+00> : vector<8xf32>
    %5 = vector.multi_reduction <add>, %2, %cst_7 [0] : vector<56x8xf32> to vector<8xf32>
    %6 = vector.shape_cast %5 : vector<8xf32> to vector<1x8xf32>
    %cst_8 = arith.constant 5.600000e+01 : f32
    %7 = vector.broadcast %cst_8 : f32 to vector<1x8xf32>
    %8 = arith.divf %6, %7 : vector<1x8xf32>
    %9 = vector.broadcast %8 : vector<1x8xf32> to vector<56x8xf32>
    %10 = arith.subf %2, %9 : vector<56x8xf32>
    %11 = arith.mulf %10, %10 : vector<56x8xf32>
    %cst_9 = arith.constant dense<0.000000e+00> : vector<8xf32>
    %12 = vector.multi_reduction <add>, %11, %cst_9 [0] : vector<56x8xf32> to vector<8xf32>
    %13 = vector.shape_cast %12 : vector<8xf32> to vector<1x8xf32>
    %cst_10 = arith.constant 5.600000e+01 : f32
    %14 = vector.broadcast %cst_10 : f32 to vector<1x8xf32>
    %15 = arith.divf %13, %14 : vector<1x8xf32>
    %16 = vector.broadcast %8 : vector<1x8xf32> to vector<56x8xf32>
    %17 = arith.subf %2, %16 : vector<56x8xf32>
    %cst_11 = arith.constant 9.99999974E-6 : f32
    %18 = vector.broadcast %cst_11 : f32 to vector<1x8xf32>
    %19 = arith.addf %15, %18 : vector<1x8xf32>
    %20 = math.rsqrt %19 : vector<1x8xf32>
    %21 = vector.broadcast %20 : vector<1x8xf32> to vector<56x8xf32>
    %22 = arith.mulf %17, %21 : vector<56x8xf32>
    %23 = vector.broadcast %3 : vector<1x8xf32> to vector<56x8xf32>
    %24 = arith.mulf %22, %23 : vector<56x8xf32>
    %25 = vector.broadcast %4 : vector<1x8xf32> to vector<56x8xf32>
    %26 = arith.addf %24, %25 : vector<56x8xf32>
    %cst_12 = arith.constant 0.000000e+00 : f32
    %27 = vector.broadcast %cst_12 : f32 to vector<56x8xf32>
    %28 = arith.maximumf %26, %27 : vector<56x8xf32>
    %cst_13 = arith.constant 0.000000e+00 : f32
    %29 = vector.broadcast %cst_13 : f32 to vector<1x8xf32>
    %30 = vector.extract_strided_slice %28 {offsets = [0, 0], sizes = [28, 8], strides = [1, 1]} : vector<56x8xf32> to vector<28x8xf32>
    %31 = vector.extract_strided_slice %28 {offsets = [28, 0], sizes = [28, 8], strides = [1, 1]} : vector<56x8xf32> to vector<28x8xf32>
    %32 = tpu.concatenate %29, %30, %29, %29, %31, %29 in 0 : vector<1x8xf32>, vector<28x8xf32>, vector<1x8xf32>, vector<1x8xf32>, vector<28x8xf32>, vector<1x8xf32> -> vector<60x8xf32>
    %33 = arith.truncf %32 : vector<60x8xf32> to vector<60x8xbf16>
    %34 = vector.extract_strided_slice %33 {offsets = [0, 0], sizes = [60, 4], strides = [1, 1]} : vector<60x8xbf16> to vector<60x4xbf16>
    %c0_14 = arith.constant 0 : index
    %c0_15 = arith.constant 0 : index
    %c0_16 = arith.constant 0 : index
    %35 = vector.load %arg5[%c0_14, %c0_15, %c0_16] : memref<6x4x4xbf16, #tpu.memory_space<vmem>>, vector<1x4x4xbf16>
    %36 = vector.shape_cast %35 : vector<1x4x4xbf16> to vector<4x4xbf16>
    %cst_17 = arith.constant dense<0.000000e+00> : vector<60x4xf32>
    %37 = tpu.matmul %34, %36, %cst_17 {dimension_numbers = #tpu.dot_dimension_numbers<[1], [0], [0], [1], [0, 0, 1, 1], [], []>} : vector<60x4xbf16>, vector<4x4xbf16>, vector<60x4xf32> -> vector<60x4xf32>
    %c1 = arith.constant 1 : index
    %c0_18 = arith.constant 0 : index
    %c0_19 = arith.constant 0 : index
    %38 = vector.load %arg5[%c1, %c0_18, %c0_19] : memref<6x4x4xbf16, #tpu.memory_space<vmem>>, vector<1x4x4xbf16>
    %39 = vector.shape_cast %38 : vector<1x4x4xbf16> to vector<4x4xbf16>
    %cst_20 = arith.constant dense<0.000000e+00> : vector<60x4xf32>
    %40 = tpu.matmul %34, %39, %cst_20 {dimension_numbers = #tpu.dot_dimension_numbers<[1], [0], [0], [1], [0, 0, 1, 1], [], []>} : vector<60x4xbf16>, vector<4x4xbf16>, vector<60x4xf32> -> vector<60x4xf32>
    %c2 = arith.constant 2 : index
    %c0_21 = arith.constant 0 : index
    %c0_22 = arith.constant 0 : index
    %41 = vector.load %arg5[%c2, %c0_21, %c0_22] : memref<6x4x4xbf16, #tpu.memory_space<vmem>>, vector<1x4x4xbf16>
    %42 = vector.shape_cast %41 : vector<1x4x4xbf16> to vector<4x4xbf16>
    %cst_23 = arith.constant dense<0.000000e+00> : vector<60x4xf32>
    %43 = tpu.matmul %34, %42, %cst_23 {dimension_numbers = #tpu.dot_dimension_numbers<[1], [0], [0], [1], [0, 0, 1, 1], [], []>} : vector<60x4xbf16>, vector<4x4xbf16>, vector<60x4xf32> -> vector<60x4xf32>
    %44 = vector.extract_strided_slice %37 {offsets = [0, 0], sizes = [28, 4], strides = [1, 1]} : vector<60x4xf32> to vector<28x4xf32>
    %45 = vector.extract_strided_slice %40 {offsets = [1, 0], sizes = [28, 4], strides = [1, 1]} : vector<60x4xf32> to vector<28x4xf32>
    %46 = arith.addf %44, %45 : vector<28x4xf32>
    %47 = vector.extract_strided_slice %43 {offsets = [2, 0], sizes = [28, 4], strides = [1, 1]} : vector<60x4xf32> to vector<28x4xf32>
    %48 = arith.addf %46, %47 : vector<28x4xf32>
    %49 = vector.extract_strided_slice %37 {offsets = [30, 0], sizes = [28, 4], strides = [1, 1]} : vector<60x4xf32> to vector<28x4xf32>
    %50 = vector.extract_strided_slice %40 {offsets = [31, 0], sizes = [28, 4], strides = [1, 1]} : vector<60x4xf32> to vector<28x4xf32>
    %51 = arith.addf %49, %50 : vector<28x4xf32>
    %52 = vector.extract_strided_slice %43 {offsets = [32, 0], sizes = [28, 4], strides = [1, 1]} : vector<60x4xf32> to vector<28x4xf32>
    %53 = arith.addf %51, %52 : vector<28x4xf32>
    %54 = vector.extract_strided_slice %33 {offsets = [0, 4], sizes = [60, 4], strides = [1, 1]} : vector<60x8xbf16> to vector<60x4xbf16>
    %c3 = arith.constant 3 : index
    %c0_24 = arith.constant 0 : index
    %c0_25 = arith.constant 0 : index
    %55 = vector.load %arg5[%c3, %c0_24, %c0_25] : memref<6x4x4xbf16, #tpu.memory_space<vmem>>, vector<1x4x4xbf16>
    %56 = vector.shape_cast %55 : vector<1x4x4xbf16> to vector<4x4xbf16>
    %cst_26 = arith.constant dense<0.000000e+00> : vector<60x4xf32>
    %57 = tpu.matmul %54, %56, %cst_26 {dimension_numbers = #tpu.dot_dimension_numbers<[1], [0], [0], [1], [0, 0, 1, 1], [], []>} : vector<60x4xbf16>, vector<4x4xbf16>, vector<60x4xf32> -> vector<60x4xf32>
    %c4 = arith.constant 4 : index
    %c0_27 = arith.constant 0 : index
    %c0_28 = arith.constant 0 : index
    %58 = vector.load %arg5[%c4, %c0_27, %c0_28] : memref<6x4x4xbf16, #tpu.memory_space<vmem>>, vector<1x4x4xbf16>
    %59 = vector.shape_cast %58 : vector<1x4x4xbf16> to vector<4x4xbf16>
    %cst_29 = arith.constant dense<0.000000e+00> : vector<60x4xf32>
    %60 = tpu.matmul %54, %59, %cst_29 {dimension_numbers = #tpu.dot_dimension_numbers<[1], [0], [0], [1], [0, 0, 1, 1], [], []>} : vector<60x4xbf16>, vector<4x4xbf16>, vector<60x4xf32> -> vector<60x4xf32>
    %c5 = arith.constant 5 : index
    %c0_30 = arith.constant 0 : index
    %c0_31 = arith.constant 0 : index
    %61 = vector.load %arg5[%c5, %c0_30, %c0_31] : memref<6x4x4xbf16, #tpu.memory_space<vmem>>, vector<1x4x4xbf16>
    %62 = vector.shape_cast %61 : vector<1x4x4xbf16> to vector<4x4xbf16>
    %cst_32 = arith.constant dense<0.000000e+00> : vector<60x4xf32>
    %63 = tpu.matmul %54, %62, %cst_32 {dimension_numbers = #tpu.dot_dimension_numbers<[1], [0], [0], [1], [0, 0, 1, 1], [], []>} : vector<60x4xbf16>, vector<4x4xbf16>, vector<60x4xf32> -> vector<60x4xf32>
    %64 = vector.extract_strided_slice %57 {offsets = [0, 0], sizes = [28, 4], strides = [1, 1]} : vector<60x4xf32> to vector<28x4xf32>
    %65 = vector.extract_strided_slice %60 {offsets = [1, 0], sizes = [28, 4], strides = [1, 1]} : vector<60x4xf32> to vector<28x4xf32>
    %66 = arith.addf %64, %65 : vector<28x4xf32>
    %67 = vector.extract_strided_slice %63 {offsets = [2, 0], sizes = [28, 4], strides = [1, 1]} : vector<60x4xf32> to vector<28x4xf32>
    %68 = arith.addf %66, %67 : vector<28x4xf32>
    %69 = vector.extract_strided_slice %57 {offsets = [30, 0], sizes = [28, 4], strides = [1, 1]} : vector<60x4xf32> to vector<28x4xf32>
    %70 = vector.extract_strided_slice %60 {offsets = [31, 0], sizes = [28, 4], strides = [1, 1]} : vector<60x4xf32> to vector<28x4xf32>
    %71 = arith.addf %69, %70 : vector<28x4xf32>
    %72 = vector.extract_strided_slice %63 {offsets = [32, 0], sizes = [28, 4], strides = [1, 1]} : vector<60x4xf32> to vector<28x4xf32>
    %73 = arith.addf %71, %72 : vector<28x4xf32>
    %74 = tpu.concatenate %48, %68 in 1 : vector<28x4xf32>, vector<28x4xf32> -> vector<28x8xf32>
    %75 = tpu.concatenate %53, %73 in 1 : vector<28x4xf32>, vector<28x4xf32> -> vector<28x8xf32>
    %76 = tpu.concatenate %74, %75 in 0 : vector<28x8xf32>, vector<28x8xf32> -> vector<56x8xf32>
    %c0_33 = arith.constant 0 : index
    %c0_34 = arith.constant 0 : index
    %77 = vector.load %arg6[%c0_33, %c0_34] : memref<1x8xf32, #tpu.memory_space<vmem>>, vector<1x8xf32>
    %c0_35 = arith.constant 0 : index
    %c0_36 = arith.constant 0 : index
    %78 = vector.load %arg7[%c0_35, %c0_36] : memref<1x8xf32, #tpu.memory_space<vmem>>, vector<1x8xf32>
    %cst_37 = arith.constant dense<0.000000e+00> : vector<8xf32>
    %79 = vector.multi_reduction <add>, %76, %cst_37 [0] : vector<56x8xf32> to vector<8xf32>
    %80 = vector.shape_cast %79 : vector<8xf32> to vector<1x8xf32>
    %cst_38 = arith.constant 5.600000e+01 : f32
    %81 = vector.broadcast %cst_38 : f32 to vector<1x8xf32>
    %82 = arith.divf %80, %81 : vector<1x8xf32>
    %83 = vector.broadcast %82 : vector<1x8xf32> to vector<56x8xf32>
    %84 = arith.subf %76, %83 : vector<56x8xf32>
    %85 = arith.mulf %84, %84 : vector<56x8xf32>
    %cst_39 = arith.constant dense<0.000000e+00> : vector<8xf32>
    %86 = vector.multi_reduction <add>, %85, %cst_39 [0] : vector<56x8xf32> to vector<8xf32>
    %87 = vector.shape_cast %86 : vector<8xf32> to vector<1x8xf32>
    %cst_40 = arith.constant 5.600000e+01 : f32
    %88 = vector.broadcast %cst_40 : f32 to vector<1x8xf32>
    %89 = arith.divf %87, %88 : vector<1x8xf32>
    %90 = vector.broadcast %82 : vector<1x8xf32> to vector<56x8xf32>
    %91 = arith.subf %76, %90 : vector<56x8xf32>
    %cst_41 = arith.constant 9.99999974E-6 : f32
    %92 = vector.broadcast %cst_41 : f32 to vector<1x8xf32>
    %93 = arith.addf %89, %92 : vector<1x8xf32>
    %94 = math.rsqrt %93 : vector<1x8xf32>
    %95 = vector.broadcast %94 : vector<1x8xf32> to vector<56x8xf32>
    %96 = arith.mulf %91, %95 : vector<56x8xf32>
    %97 = vector.broadcast %77 : vector<1x8xf32> to vector<56x8xf32>
    %98 = arith.mulf %96, %97 : vector<56x8xf32>
    %99 = vector.broadcast %78 : vector<1x8xf32> to vector<56x8xf32>
    %100 = arith.addf %98, %99 : vector<56x8xf32>
    %cst_42 = arith.constant 0.000000e+00 : f32
    %101 = vector.broadcast %cst_42 : f32 to vector<56x8xf32>
    %102 = arith.maximumf %100, %101 : vector<56x8xf32>
    %103 = arith.truncf %102 : vector<56x8xf32> to vector<56x8xbf16>
    %c0_43 = arith.constant 0 : index
    %c0_44 = arith.constant 0 : index
    %104 = vector.load %arg8[%c0_43, %c0_44] : memref<8x64xbf16, #tpu.memory_space<vmem>>, vector<8x64xbf16>
    %cst_45 = arith.constant dense<0.000000e+00> : vector<56x64xf32>
    %105 = tpu.matmul %103, %104, %cst_45 {dimension_numbers = #tpu.dot_dimension_numbers<[1], [0], [0], [1], [0, 0, 1, 1], [], []>} : vector<56x8xbf16>, vector<8x64xbf16>, vector<56x64xf32> -> vector<56x64xf32>
    %c0_46 = arith.constant 0 : index
    %c0_47 = arith.constant 0 : index
    %106 = vector.load %arg9[%c0_46, %c0_47] : memref<1x64xf32, #tpu.memory_space<vmem>>, vector<1x64xf32>
    %c0_48 = arith.constant 0 : index
    %c0_49 = arith.constant 0 : index
    %107 = vector.load %arg10[%c0_48, %c0_49] : memref<1x64xf32, #tpu.memory_space<vmem>>, vector<1x64xf32>
    %cst_50 = arith.constant dense<0.000000e+00> : vector<64xf32>
    %108 = vector.multi_reduction <add>, %105, %cst_50 [0] : vector<56x64xf32> to vector<64xf32>
    %109 = vector.shape_cast %108 : vector<64xf32> to vector<1x64xf32>
    %cst_51 = arith.constant 5.600000e+01 : f32
    %110 = vector.broadcast %cst_51 : f32 to vector<1x64xf32>
    %111 = arith.divf %109, %110 : vector<1x64xf32>
    %112 = vector.broadcast %111 : vector<1x64xf32> to vector<56x64xf32>
    %113 = arith.subf %105, %112 : vector<56x64xf32>
    %114 = arith.mulf %113, %113 : vector<56x64xf32>
    %cst_52 = arith.constant dense<0.000000e+00> : vector<64xf32>
    %115 = vector.multi_reduction <add>, %114, %cst_52 [0] : vector<56x64xf32> to vector<64xf32>
    %116 = vector.shape_cast %115 : vector<64xf32> to vector<1x64xf32>
    %cst_53 = arith.constant 5.600000e+01 : f32
    %117 = vector.broadcast %cst_53 : f32 to vector<1x64xf32>
    %118 = arith.divf %116, %117 : vector<1x64xf32>
    %119 = vector.broadcast %111 : vector<1x64xf32> to vector<56x64xf32>
    %120 = arith.subf %105, %119 : vector<56x64xf32>
    %cst_54 = arith.constant 9.99999974E-6 : f32
    %121 = vector.broadcast %cst_54 : f32 to vector<1x64xf32>
    %122 = arith.addf %118, %121 : vector<1x64xf32>
    %123 = math.rsqrt %122 : vector<1x64xf32>
    %124 = vector.broadcast %123 : vector<1x64xf32> to vector<56x64xf32>
    %125 = arith.mulf %120, %124 : vector<56x64xf32>
    %126 = vector.broadcast %106 : vector<1x64xf32> to vector<56x64xf32>
    %127 = arith.mulf %125, %126 : vector<56x64xf32>
    %128 = vector.broadcast %107 : vector<1x64xf32> to vector<56x64xf32>
    %129 = arith.addf %127, %128 : vector<56x64xf32>
    %130 = arith.extf %0 : vector<56x64xbf16> to vector<56x64xf32>
    %131 = arith.addf %129, %130 : vector<56x64xf32>
    %cst_55 = arith.constant 0.000000e+00 : f32
    %132 = vector.broadcast %cst_55 : f32 to vector<56x64xf32>
    %133 = arith.maximumf %131, %132 : vector<56x64xf32>
    %134 = arith.truncf %133 : vector<56x64xf32> to vector<56x64xbf16>
    %c0_56 = arith.constant 0 : index
    %c0_57 = arith.constant 0 : index
    %135 = vector.load %arg11[%c0_56, %c0_57] : memref<56x64xbf16, #tpu.memory_space<vmem>>, vector<56x64xbf16>
    tpu.vector_store %arg11[%c0_56, %c0_57], %134 {strides = array<i32>} : memref<56x64xbf16, #tpu.memory_space<vmem>>, vector<56x64xbf16>,
    return
  }
  func.func @transform_0(%arg0: i32) -> (i32, i32) {
    %c0_i32 = arith.constant 0 : i32
    %c0_i32_0 = arith.constant 0 : i32
    %c0_i32_1 = arith.constant 0 : i32
    return %c0_i32, %c0_i32_0 : i32, i32
  }
  func.func @transform_1(%arg0: i32) -> (i32, i32) {
    %c0_i32 = arith.constant 0 : i32
    %c0_i32_0 = arith.constant 0 : i32
    %c0_i32_1 = arith.constant 0 : i32
    return %c0_i32, %c0_i32_0 : i32, i32
  }
  func.func @transform_2(%arg0: i32) -> (i32, i32) {
    %c0_i32 = arith.constant 0 : i32
    %c0_i32_0 = arith.constant 0 : i32
    %c0_i32_1 = arith.constant 0 : i32
    return %c0_i32, %c0_i32_0 : i32, i32
  }
  func.func @transform_3(%arg0: i32) -> (i32, i32) {
    %c0_i32 = arith.constant 0 : i32
    %c0_i32_0 = arith.constant 0 : i32
    %c0_i32_1 = arith.constant 0 : i32
    return %c0_i32, %c0_i32_0 : i32, i32
  }
  func.func @transform_4(%arg0: i32) -> (i32, i32, i32) {
    %c0_i32 = arith.constant 0 : i32
    %c0_i32_0 = arith.constant 0 : i32
    %c0_i32_1 = arith.constant 0 : i32
    %c0_i32_2 = arith.constant 0 : i32
    return %c0_i32, %c0_i32_0, %c0_i32_1 : i32, i32, i32
  }
  func.func @transform_5(%arg0: i32) -> (i32, i32) {
    %c0_i32 = arith.constant 0 : i32
    %c0_i32_0 = arith.constant 0 : i32
    %c0_i32_1 = arith.constant 0 : i32
    return %c0_i32, %c0_i32_0 : i32, i32
  }
  func.func @transform_6(%arg0: i32) -> (i32, i32) {
    %c0_i32 = arith.constant 0 : i32
    %c0_i32_0 = arith.constant 0 : i32
    %c0_i32_1 = arith.constant 0 : i32
    return %c0_i32, %c0_i32_0 : i32, i32
  }
  func.func @transform_7(%arg0: i32) -> (i32, i32) {
    %c0_i32 = arith.constant 0 : i32
    %c0_i32_0 = arith.constant 0 : i32
    %c0_i32_1 = arith.constant 0 : i32
    return %c0_i32, %c0_i32_0 : i32, i32
  }
  func.func @transform_8(%arg0: i32) -> (i32, i32) {
    %c0_i32 = arith.constant 0 : i32
    %c0_i32_0 = arith.constant 0 : i32
    %c0_i32_1 = arith.constant 0 : i32
    return %c0_i32, %c0_i32_0 : i32, i32
  }
  func.func @transform_9(%arg0: i32) -> (i32, i32) {
    %c0_i32 = arith.constant 0 : i32
    %c0_i32_0 = arith.constant 0 : i32
    %c0_i32_1 = arith.constant 0 : i32
    return %c0_i32, %c0_i32_0 : i32, i32
  }
  func.func @transform_10(%arg0: i32) -> (i32, i32) {
    %c0_i32 = arith.constant 0 : i32
    %c0_i32_0 = arith.constant 0 : i32
    %c0_i32_1 = arith.constant 0 : i32
    return %c0_i32, %c0_i32_0 : i32, i32
  }
}

module attributes {stable_mosaic.version = 11 : i64} {
  func.func @_bottleneck_kernel(%arg0: i32, %arg1: memref<56x64xbf16, #tpu.memory_space<vmem>>, %arg2: memref<28x64xbf16, #tpu.memory_space<vmem>>, %arg3: memref<64x16xbf16, #tpu.memory_space<vmem>>, %arg4: memref<1x16xf32, #tpu.memory_space<vmem>>, %arg5: memref<1x16xf32, #tpu.memory_space<vmem>>, %arg6: memref<6x8x8xbf16, #tpu.memory_space<vmem>>, %arg7: memref<1x16xf32, #tpu.memory_space<vmem>>, %arg8: memref<1x16xf32, #tpu.memory_space<vmem>>, %arg9: memref<16x128xbf16, #tpu.memory_space<vmem>>, %arg10: memref<1x128xf32, #tpu.memory_space<vmem>>, %arg11: memref<1x128xf32, #tpu.memory_space<vmem>>, %arg12: memref<64x128xbf16, #tpu.memory_space<vmem>>, %arg13: memref<1x128xf32, #tpu.memory_space<vmem>>, %arg14: memref<1x128xf32, #tpu.memory_space<vmem>>, %arg15: memref<28x128xbf16, #tpu.memory_space<vmem>>) attributes {dimension_semantics = [#tpu.dimension_semantics<arbitrary>], iteration_bounds = array<i64: 1>, scalar_prefetch = 0 : i64, scratch_operands = 0 : i64, tpu.core_type = #tpu.core_type<tc>, window_params = [{pipeline_mode = #tpu.pipeline_mode<synchronous>, transform_indices = @transform_0, window_bounds = array<i64: 56, 64>}, {pipeline_mode = #tpu.pipeline_mode<synchronous>, transform_indices = @transform_1, window_bounds = array<i64: 28, 64>}, {pipeline_mode = #tpu.pipeline_mode<synchronous>, transform_indices = @transform_2, window_bounds = array<i64: 64, 16>}, {pipeline_mode = #tpu.pipeline_mode<synchronous>, transform_indices = @transform_3, window_bounds = array<i64: 1, 16>}, {pipeline_mode = #tpu.pipeline_mode<synchronous>, transform_indices = @transform_4, window_bounds = array<i64: 1, 16>}, {pipeline_mode = #tpu.pipeline_mode<synchronous>, transform_indices = @transform_5, window_bounds = array<i64: 6, 8, 8>}, {pipeline_mode = #tpu.pipeline_mode<synchronous>, transform_indices = @transform_6, window_bounds = array<i64: 1, 16>}, {pipeline_mode = #tpu.pipeline_mode<synchronous>, transform_indices = @transform_7, window_bounds = array<i64: 1, 16>}, {pipeline_mode = #tpu.pipeline_mode<synchronous>, transform_indices = @transform_8, window_bounds = array<i64: 16, 128>}, {pipeline_mode = #tpu.pipeline_mode<synchronous>, transform_indices = @transform_9, window_bounds = array<i64: 1, 128>}, {pipeline_mode = #tpu.pipeline_mode<synchronous>, transform_indices = @transform_10, window_bounds = array<i64: 1, 128>}, {pipeline_mode = #tpu.pipeline_mode<synchronous>, transform_indices = @transform_11, window_bounds = array<i64: 64, 128>}, {pipeline_mode = #tpu.pipeline_mode<synchronous>, transform_indices = @transform_12, window_bounds = array<i64: 1, 128>}, {pipeline_mode = #tpu.pipeline_mode<synchronous>, transform_indices = @transform_13, window_bounds = array<i64: 1, 128>}, {pipeline_mode = #tpu.pipeline_mode<synchronous>, transform_indices = @transform_14, window_bounds = array<i64: 28, 128>}]} {
    %c0 = arith.constant 0 : index
    %c0_0 = arith.constant 0 : index
    %0 = vector.load %arg1[%c0, %c0_0] : memref<56x64xbf16, #tpu.memory_space<vmem>>, vector<56x64xbf16>
    %c0_1 = arith.constant 0 : index
    %c0_2 = arith.constant 0 : index
    %1 = vector.load %arg3[%c0_1, %c0_2] : memref<64x16xbf16, #tpu.memory_space<vmem>>, vector<64x16xbf16>
    %cst = arith.constant dense<0.000000e+00> : vector<56x16xf32>
    %2 = tpu.matmul %0, %1, %cst {dimension_numbers = #tpu.dot_dimension_numbers<[1], [0], [0], [1], [0, 0, 1, 1], [], []>} : vector<56x64xbf16>, vector<64x16xbf16>, vector<56x16xf32> -> vector<56x16xf32>
    %c0_3 = arith.constant 0 : index
    %c0_4 = arith.constant 0 : index
    %3 = vector.load %arg4[%c0_3, %c0_4] : memref<1x16xf32, #tpu.memory_space<vmem>>, vector<1x16xf32>
    %c0_5 = arith.constant 0 : index
    %c0_6 = arith.constant 0 : index
    %4 = vector.load %arg5[%c0_5, %c0_6] : memref<1x16xf32, #tpu.memory_space<vmem>>, vector<1x16xf32>
    %cst_7 = arith.constant dense<0.000000e+00> : vector<16xf32>
    %5 = vector.multi_reduction <add>, %2, %cst_7 [0] : vector<56x16xf32> to vector<16xf32>
    %6 = vector.shape_cast %5 : vector<16xf32> to vector<1x16xf32>
    %cst_8 = arith.constant 5.600000e+01 : f32
    %7 = vector.broadcast %cst_8 : f32 to vector<1x16xf32>
    %8 = arith.divf %6, %7 : vector<1x16xf32>
    %9 = vector.broadcast %8 : vector<1x16xf32> to vector<56x16xf32>
    %10 = arith.subf %2, %9 : vector<56x16xf32>
    %11 = arith.mulf %10, %10 : vector<56x16xf32>
    %cst_9 = arith.constant dense<0.000000e+00> : vector<16xf32>
    %12 = vector.multi_reduction <add>, %11, %cst_9 [0] : vector<56x16xf32> to vector<16xf32>
    %13 = vector.shape_cast %12 : vector<16xf32> to vector<1x16xf32>
    %cst_10 = arith.constant 5.600000e+01 : f32
    %14 = vector.broadcast %cst_10 : f32 to vector<1x16xf32>
    %15 = arith.divf %13, %14 : vector<1x16xf32>
    %16 = vector.broadcast %8 : vector<1x16xf32> to vector<56x16xf32>
    %17 = arith.subf %2, %16 : vector<56x16xf32>
    %cst_11 = arith.constant 9.99999974E-6 : f32
    %18 = vector.broadcast %cst_11 : f32 to vector<1x16xf32>
    %19 = arith.addf %15, %18 : vector<1x16xf32>
    %20 = math.rsqrt %19 : vector<1x16xf32>
    %21 = vector.broadcast %20 : vector<1x16xf32> to vector<56x16xf32>
    %22 = arith.mulf %17, %21 : vector<56x16xf32>
    %23 = vector.broadcast %3 : vector<1x16xf32> to vector<56x16xf32>
    %24 = arith.mulf %22, %23 : vector<56x16xf32>
    %25 = vector.broadcast %4 : vector<1x16xf32> to vector<56x16xf32>
    %26 = arith.addf %24, %25 : vector<56x16xf32>
    %cst_12 = arith.constant 0.000000e+00 : f32
    %27 = vector.broadcast %cst_12 : f32 to vector<56x16xf32>
    %28 = arith.maximumf %26, %27 : vector<56x16xf32>
    %cst_13 = arith.constant 0.000000e+00 : f32
    %29 = vector.broadcast %cst_13 : f32 to vector<1x16xf32>
    %30 = vector.extract_strided_slice %28 {offsets = [0, 0], sizes = [28, 16], strides = [1, 1]} : vector<56x16xf32> to vector<28x16xf32>
    %31 = vector.extract_strided_slice %28 {offsets = [28, 0], sizes = [28, 16], strides = [1, 1]} : vector<56x16xf32> to vector<28x16xf32>
    %32 = tpu.concatenate %29, %30, %29, %29, %31, %29 in 0 : vector<1x16xf32>, vector<28x16xf32>, vector<1x16xf32>, vector<1x16xf32>, vector<28x16xf32>, vector<1x16xf32> -> vector<60x16xf32>
    %33 = arith.truncf %32 : vector<60x16xf32> to vector<60x16xbf16>
    %34 = tpu.iota {dimensions = array<i32: 0>} : vector<14x28xi32>
    %35 = tpu.iota {dimensions = array<i32: 1>} : vector<14x28xi32>
    %c2_i32 = arith.constant 2 : i32
    %36 = vector.broadcast %c2_i32 : i32 to vector<14x28xi32>
    %37 = arith.muli %34, %36 : vector<14x28xi32>
    %38 = arith.cmpi eq, %35, %37 : vector<14x28xi32>
    %39 = arith.extui %38 : vector<14x28xi1> to vector<14x28xi32>
    %40 = arith.sitofp %39 : vector<14x28xi32> to vector<14x28xf32>
    %41 = vector.extract_strided_slice %33 {offsets = [0, 0], sizes = [60, 8], strides = [1, 1]} : vector<60x16xbf16> to vector<60x8xbf16>
    %c0_14 = arith.constant 0 : index
    %c0_15 = arith.constant 0 : index
    %c0_16 = arith.constant 0 : index
    %42 = vector.load %arg6[%c0_14, %c0_15, %c0_16] : memref<6x8x8xbf16, #tpu.memory_space<vmem>>, vector<1x8x8xbf16>
    %43 = vector.shape_cast %42 : vector<1x8x8xbf16> to vector<8x8xbf16>
    %cst_17 = arith.constant dense<0.000000e+00> : vector<60x8xf32>
    %44 = tpu.matmul %41, %43, %cst_17 {dimension_numbers = #tpu.dot_dimension_numbers<[1], [0], [0], [1], [0, 0, 1, 1], [], []>} : vector<60x8xbf16>, vector<8x8xbf16>, vector<60x8xf32> -> vector<60x8xf32>
    %c1 = arith.constant 1 : index
    %c0_18 = arith.constant 0 : index
    %c0_19 = arith.constant 0 : index
    %45 = vector.load %arg6[%c1, %c0_18, %c0_19] : memref<6x8x8xbf16, #tpu.memory_space<vmem>>, vector<1x8x8xbf16>
    %46 = vector.shape_cast %45 : vector<1x8x8xbf16> to vector<8x8xbf16>
    %cst_20 = arith.constant dense<0.000000e+00> : vector<60x8xf32>
    %47 = tpu.matmul %41, %46, %cst_20 {dimension_numbers = #tpu.dot_dimension_numbers<[1], [0], [0], [1], [0, 0, 1, 1], [], []>} : vector<60x8xbf16>, vector<8x8xbf16>, vector<60x8xf32> -> vector<60x8xf32>
    %c2 = arith.constant 2 : index
    %c0_21 = arith.constant 0 : index
    %c0_22 = arith.constant 0 : index
    %48 = vector.load %arg6[%c2, %c0_21, %c0_22] : memref<6x8x8xbf16, #tpu.memory_space<vmem>>, vector<1x8x8xbf16>
    %49 = vector.shape_cast %48 : vector<1x8x8xbf16> to vector<8x8xbf16>
    %cst_23 = arith.constant dense<0.000000e+00> : vector<60x8xf32>
    %50 = tpu.matmul %41, %49, %cst_23 {dimension_numbers = #tpu.dot_dimension_numbers<[1], [0], [0], [1], [0, 0, 1, 1], [], []>} : vector<60x8xbf16>, vector<8x8xbf16>, vector<60x8xf32> -> vector<60x8xf32>
    %51 = vector.extract_strided_slice %44 {offsets = [0, 0], sizes = [28, 8], strides = [1, 1]} : vector<60x8xf32> to vector<28x8xf32>
    %52 = vector.extract_strided_slice %47 {offsets = [1, 0], sizes = [28, 8], strides = [1, 1]} : vector<60x8xf32> to vector<28x8xf32>
    %53 = arith.addf %51, %52 : vector<28x8xf32>
    %54 = vector.extract_strided_slice %50 {offsets = [2, 0], sizes = [28, 8], strides = [1, 1]} : vector<60x8xf32> to vector<28x8xf32>
    %55 = arith.addf %53, %54 : vector<28x8xf32>
    %cst_24 = arith.constant dense<0.000000e+00> : vector<14x8xf32>
    %56 = tpu.matmul %40, %55, %cst_24 {dimension_numbers = #tpu.dot_dimension_numbers<[1], [0], [0], [1], [0, 0, 1, 1], [], []>} : vector<14x28xf32>, vector<28x8xf32>, vector<14x8xf32> -> vector<14x8xf32>
    %57 = vector.extract_strided_slice %44 {offsets = [30, 0], sizes = [28, 8], strides = [1, 1]} : vector<60x8xf32> to vector<28x8xf32>
    %58 = vector.extract_strided_slice %47 {offsets = [31, 0], sizes = [28, 8], strides = [1, 1]} : vector<60x8xf32> to vector<28x8xf32>
    %59 = arith.addf %57, %58 : vector<28x8xf32>
    %60 = vector.extract_strided_slice %50 {offsets = [32, 0], sizes = [28, 8], strides = [1, 1]} : vector<60x8xf32> to vector<28x8xf32>
    %61 = arith.addf %59, %60 : vector<28x8xf32>
    %cst_25 = arith.constant dense<0.000000e+00> : vector<14x8xf32>
    %62 = tpu.matmul %40, %61, %cst_25 {dimension_numbers = #tpu.dot_dimension_numbers<[1], [0], [0], [1], [0, 0, 1, 1], [], []>} : vector<14x28xf32>, vector<28x8xf32>, vector<14x8xf32> -> vector<14x8xf32>
    %63 = vector.extract_strided_slice %33 {offsets = [0, 8], sizes = [60, 8], strides = [1, 1]} : vector<60x16xbf16> to vector<60x8xbf16>
    %c3 = arith.constant 3 : index
    %c0_26 = arith.constant 0 : index
    %c0_27 = arith.constant 0 : index
    %64 = vector.load %arg6[%c3, %c0_26, %c0_27] : memref<6x8x8xbf16, #tpu.memory_space<vmem>>, vector<1x8x8xbf16>
    %65 = vector.shape_cast %64 : vector<1x8x8xbf16> to vector<8x8xbf16>
    %cst_28 = arith.constant dense<0.000000e+00> : vector<60x8xf32>
    %66 = tpu.matmul %63, %65, %cst_28 {dimension_numbers = #tpu.dot_dimension_numbers<[1], [0], [0], [1], [0, 0, 1, 1], [], []>} : vector<60x8xbf16>, vector<8x8xbf16>, vector<60x8xf32> -> vector<60x8xf32>
    %c4 = arith.constant 4 : index
    %c0_29 = arith.constant 0 : index
    %c0_30 = arith.constant 0 : index
    %67 = vector.load %arg6[%c4, %c0_29, %c0_30] : memref<6x8x8xbf16, #tpu.memory_space<vmem>>, vector<1x8x8xbf16>
    %68 = vector.shape_cast %67 : vector<1x8x8xbf16> to vector<8x8xbf16>
    %cst_31 = arith.constant dense<0.000000e+00> : vector<60x8xf32>
    %69 = tpu.matmul %63, %68, %cst_31 {dimension_numbers = #tpu.dot_dimension_numbers<[1], [0], [0], [1], [0, 0, 1, 1], [], []>} : vector<60x8xbf16>, vector<8x8xbf16>, vector<60x8xf32> -> vector<60x8xf32>
    %c5 = arith.constant 5 : index
    %c0_32 = arith.constant 0 : index
    %c0_33 = arith.constant 0 : index
    %70 = vector.load %arg6[%c5, %c0_32, %c0_33] : memref<6x8x8xbf16, #tpu.memory_space<vmem>>, vector<1x8x8xbf16>
    %71 = vector.shape_cast %70 : vector<1x8x8xbf16> to vector<8x8xbf16>
    %cst_34 = arith.constant dense<0.000000e+00> : vector<60x8xf32>
    %72 = tpu.matmul %63, %71, %cst_34 {dimension_numbers = #tpu.dot_dimension_numbers<[1], [0], [0], [1], [0, 0, 1, 1], [], []>} : vector<60x8xbf16>, vector<8x8xbf16>, vector<60x8xf32> -> vector<60x8xf32>
    %73 = vector.extract_strided_slice %66 {offsets = [0, 0], sizes = [28, 8], strides = [1, 1]} : vector<60x8xf32> to vector<28x8xf32>
    %74 = vector.extract_strided_slice %69 {offsets = [1, 0], sizes = [28, 8], strides = [1, 1]} : vector<60x8xf32> to vector<28x8xf32>
    %75 = arith.addf %73, %74 : vector<28x8xf32>
    %76 = vector.extract_strided_slice %72 {offsets = [2, 0], sizes = [28, 8], strides = [1, 1]} : vector<60x8xf32> to vector<28x8xf32>
    %77 = arith.addf %75, %76 : vector<28x8xf32>
    %cst_35 = arith.constant dense<0.000000e+00> : vector<14x8xf32>
    %78 = tpu.matmul %40, %77, %cst_35 {dimension_numbers = #tpu.dot_dimension_numbers<[1], [0], [0], [1], [0, 0, 1, 1], [], []>} : vector<14x28xf32>, vector<28x8xf32>, vector<14x8xf32> -> vector<14x8xf32>
    %79 = vector.extract_strided_slice %66 {offsets = [30, 0], sizes = [28, 8], strides = [1, 1]} : vector<60x8xf32> to vector<28x8xf32>
    %80 = vector.extract_strided_slice %69 {offsets = [31, 0], sizes = [28, 8], strides = [1, 1]} : vector<60x8xf32> to vector<28x8xf32>
    %81 = arith.addf %79, %80 : vector<28x8xf32>
    %82 = vector.extract_strided_slice %72 {offsets = [32, 0], sizes = [28, 8], strides = [1, 1]} : vector<60x8xf32> to vector<28x8xf32>
    %83 = arith.addf %81, %82 : vector<28x8xf32>
    %cst_36 = arith.constant dense<0.000000e+00> : vector<14x8xf32>
    %84 = tpu.matmul %40, %83, %cst_36 {dimension_numbers = #tpu.dot_dimension_numbers<[1], [0], [0], [1], [0, 0, 1, 1], [], []>} : vector<14x28xf32>, vector<28x8xf32>, vector<14x8xf32> -> vector<14x8xf32>
    %85 = tpu.concatenate %56, %78 in 1 : vector<14x8xf32>, vector<14x8xf32> -> vector<14x16xf32>
    %86 = tpu.concatenate %62, %84 in 1 : vector<14x8xf32>, vector<14x8xf32> -> vector<14x16xf32>
    %87 = tpu.concatenate %85, %86 in 0 : vector<14x16xf32>, vector<14x16xf32> -> vector<28x16xf32>
    %c0_37 = arith.constant 0 : index
    %c0_38 = arith.constant 0 : index
    %88 = vector.load %arg7[%c0_37, %c0_38] : memref<1x16xf32, #tpu.memory_space<vmem>>, vector<1x16xf32>
    %c0_39 = arith.constant 0 : index
    %c0_40 = arith.constant 0 : index
    %89 = vector.load %arg8[%c0_39, %c0_40] : memref<1x16xf32, #tpu.memory_space<vmem>>, vector<1x16xf32>
    %cst_41 = arith.constant dense<0.000000e+00> : vector<16xf32>
    %90 = vector.multi_reduction <add>, %87, %cst_41 [0] : vector<28x16xf32> to vector<16xf32>
    %91 = vector.shape_cast %90 : vector<16xf32> to vector<1x16xf32>
    %cst_42 = arith.constant 2.800000e+01 : f32
    %92 = vector.broadcast %cst_42 : f32 to vector<1x16xf32>
    %93 = arith.divf %91, %92 : vector<1x16xf32>
    %94 = vector.broadcast %93 : vector<1x16xf32> to vector<28x16xf32>
    %95 = arith.subf %87, %94 : vector<28x16xf32>
    %96 = arith.mulf %95, %95 : vector<28x16xf32>
    %cst_43 = arith.constant dense<0.000000e+00> : vector<16xf32>
    %97 = vector.multi_reduction <add>, %96, %cst_43 [0] : vector<28x16xf32> to vector<16xf32>
    %98 = vector.shape_cast %97 : vector<16xf32> to vector<1x16xf32>
    %cst_44 = arith.constant 2.800000e+01 : f32
    %99 = vector.broadcast %cst_44 : f32 to vector<1x16xf32>
    %100 = arith.divf %98, %99 : vector<1x16xf32>
    %101 = vector.broadcast %93 : vector<1x16xf32> to vector<28x16xf32>
    %102 = arith.subf %87, %101 : vector<28x16xf32>
    %cst_45 = arith.constant 9.99999974E-6 : f32
    %103 = vector.broadcast %cst_45 : f32 to vector<1x16xf32>
    %104 = arith.addf %100, %103 : vector<1x16xf32>
    %105 = math.rsqrt %104 : vector<1x16xf32>
    %106 = vector.broadcast %105 : vector<1x16xf32> to vector<28x16xf32>
    %107 = arith.mulf %102, %106 : vector<28x16xf32>
    %108 = vector.broadcast %88 : vector<1x16xf32> to vector<28x16xf32>
    %109 = arith.mulf %107, %108 : vector<28x16xf32>
    %110 = vector.broadcast %89 : vector<1x16xf32> to vector<28x16xf32>
    %111 = arith.addf %109, %110 : vector<28x16xf32>
    %cst_46 = arith.constant 0.000000e+00 : f32
    %112 = vector.broadcast %cst_46 : f32 to vector<28x16xf32>
    %113 = arith.maximumf %111, %112 : vector<28x16xf32>
    %114 = arith.truncf %113 : vector<28x16xf32> to vector<28x16xbf16>
    %c0_47 = arith.constant 0 : index
    %c0_48 = arith.constant 0 : index
    %115 = vector.load %arg9[%c0_47, %c0_48] : memref<16x128xbf16, #tpu.memory_space<vmem>>, vector<16x128xbf16>
    %cst_49 = arith.constant dense<0.000000e+00> : vector<28x128xf32>
    %116 = tpu.matmul %114, %115, %cst_49 {dimension_numbers = #tpu.dot_dimension_numbers<[1], [0], [0], [1], [0, 0, 1, 1], [], []>} : vector<28x16xbf16>, vector<16x128xbf16>, vector<28x128xf32> -> vector<28x128xf32>
    %c0_50 = arith.constant 0 : index
    %c0_51 = arith.constant 0 : index
    %117 = vector.load %arg10[%c0_50, %c0_51] : memref<1x128xf32, #tpu.memory_space<vmem>>, vector<1x128xf32>
    %c0_52 = arith.constant 0 : index
    %c0_53 = arith.constant 0 : index
    %118 = vector.load %arg11[%c0_52, %c0_53] : memref<1x128xf32, #tpu.memory_space<vmem>>, vector<1x128xf32>
    %cst_54 = arith.constant dense<0.000000e+00> : vector<128xf32>
    %119 = vector.multi_reduction <add>, %116, %cst_54 [0] : vector<28x128xf32> to vector<128xf32>
    %120 = vector.shape_cast %119 : vector<128xf32> to vector<1x128xf32>
    %cst_55 = arith.constant 2.800000e+01 : f32
    %121 = vector.broadcast %cst_55 : f32 to vector<1x128xf32>
    %122 = arith.divf %120, %121 : vector<1x128xf32>
    %123 = vector.broadcast %122 : vector<1x128xf32> to vector<28x128xf32>
    %124 = arith.subf %116, %123 : vector<28x128xf32>
    %125 = arith.mulf %124, %124 : vector<28x128xf32>
    %cst_56 = arith.constant dense<0.000000e+00> : vector<128xf32>
    %126 = vector.multi_reduction <add>, %125, %cst_56 [0] : vector<28x128xf32> to vector<128xf32>
    %127 = vector.shape_cast %126 : vector<128xf32> to vector<1x128xf32>
    %cst_57 = arith.constant 2.800000e+01 : f32
    %128 = vector.broadcast %cst_57 : f32 to vector<1x128xf32>
    %129 = arith.divf %127, %128 : vector<1x128xf32>
    %130 = vector.broadcast %122 : vector<1x128xf32> to vector<28x128xf32>
    %131 = arith.subf %116, %130 : vector<28x128xf32>
    %cst_58 = arith.constant 9.99999974E-6 : f32
    %132 = vector.broadcast %cst_58 : f32 to vector<1x128xf32>
    %133 = arith.addf %129, %132 : vector<1x128xf32>
    %134 = math.rsqrt %133 : vector<1x128xf32>
    %135 = vector.broadcast %134 : vector<1x128xf32> to vector<28x128xf32>
    %136 = arith.mulf %131, %135 : vector<28x128xf32>
    %137 = vector.broadcast %117 : vector<1x128xf32> to vector<28x128xf32>
    %138 = arith.mulf %136, %137 : vector<28x128xf32>
    %139 = vector.broadcast %118 : vector<1x128xf32> to vector<28x128xf32>
    %140 = arith.addf %138, %139 : vector<28x128xf32>
    %c0_59 = arith.constant 0 : index
    %c0_60 = arith.constant 0 : index
    %141 = vector.load %arg2[%c0_59, %c0_60] : memref<28x64xbf16, #tpu.memory_space<vmem>>, vector<28x64xbf16>
    %c0_61 = arith.constant 0 : index
    %c0_62 = arith.constant 0 : index
    %142 = vector.load %arg12[%c0_61, %c0_62] : memref<64x128xbf16, #tpu.memory_space<vmem>>, vector<64x128xbf16>
    %cst_63 = arith.constant dense<0.000000e+00> : vector<28x128xf32>
    %143 = tpu.matmul %141, %142, %cst_63 {dimension_numbers = #tpu.dot_dimension_numbers<[1], [0], [0], [1], [0, 0, 1, 1], [], []>} : vector<28x64xbf16>, vector<64x128xbf16>, vector<28x128xf32> -> vector<28x128xf32>
    %c0_64 = arith.constant 0 : index
    %c0_65 = arith.constant 0 : index
    %144 = vector.load %arg13[%c0_64, %c0_65] : memref<1x128xf32, #tpu.memory_space<vmem>>, vector<1x128xf32>
    %c0_66 = arith.constant 0 : index
    %c0_67 = arith.constant 0 : index
    %145 = vector.load %arg14[%c0_66, %c0_67] : memref<1x128xf32, #tpu.memory_space<vmem>>, vector<1x128xf32>
    %cst_68 = arith.constant dense<0.000000e+00> : vector<128xf32>
    %146 = vector.multi_reduction <add>, %143, %cst_68 [0] : vector<28x128xf32> to vector<128xf32>
    %147 = vector.shape_cast %146 : vector<128xf32> to vector<1x128xf32>
    %cst_69 = arith.constant 2.800000e+01 : f32
    %148 = vector.broadcast %cst_69 : f32 to vector<1x128xf32>
    %149 = arith.divf %147, %148 : vector<1x128xf32>
    %150 = vector.broadcast %149 : vector<1x128xf32> to vector<28x128xf32>
    %151 = arith.subf %143, %150 : vector<28x128xf32>
    %152 = arith.mulf %151, %151 : vector<28x128xf32>
    %cst_70 = arith.constant dense<0.000000e+00> : vector<128xf32>
    %153 = vector.multi_reduction <add>, %152, %cst_70 [0] : vector<28x128xf32> to vector<128xf32>
    %154 = vector.shape_cast %153 : vector<128xf32> to vector<1x128xf32>
    %cst_71 = arith.constant 2.800000e+01 : f32
    %155 = vector.broadcast %cst_71 : f32 to vector<1x128xf32>
    %156 = arith.divf %154, %155 : vector<1x128xf32>
    %157 = vector.broadcast %149 : vector<1x128xf32> to vector<28x128xf32>
    %158 = arith.subf %143, %157 : vector<28x128xf32>
    %cst_72 = arith.constant 9.99999974E-6 : f32
    %159 = vector.broadcast %cst_72 : f32 to vector<1x128xf32>
    %160 = arith.addf %156, %159 : vector<1x128xf32>
    %161 = math.rsqrt %160 : vector<1x128xf32>
    %162 = vector.broadcast %161 : vector<1x128xf32> to vector<28x128xf32>
    %163 = arith.mulf %158, %162 : vector<28x128xf32>
    %164 = vector.broadcast %144 : vector<1x128xf32> to vector<28x128xf32>
    %165 = arith.mulf %163, %164 : vector<28x128xf32>
    %166 = vector.broadcast %145 : vector<1x128xf32> to vector<28x128xf32>
    %167 = arith.addf %165, %166 : vector<28x128xf32>
    %168 = arith.addf %140, %167 : vector<28x128xf32>
    %cst_73 = arith.constant 0.000000e+00 : f32
    %169 = vector.broadcast %cst_73 : f32 to vector<28x128xf32>
    %170 = arith.maximumf %168, %169 : vector<28x128xf32>
    %171 = arith.truncf %170 : vector<28x128xf32> to vector<28x128xbf16>
    %c0_74 = arith.constant 0 : index
    %c0_75 = arith.constant 0 : index
    %172 = vector.load %arg15[%c0_74, %c0_75] : memref<28x128xbf16, #tpu.memory_space<vmem>>, vector<28x128xbf16>
    tpu.vector_store %arg15[%c0_74, %c0_75], %171 {strides = array<i32>} : memref<28x128xbf16, #tpu.memory_space<vmem>>, vector<28x128xbf16>,
    return
  }
  func.func @transform_0(%arg0: i32) -> (i32, i32) {
    %c0_i32 = arith.constant 0 : i32
    %c0_i32_0 = arith.constant 0 : i32
    %c0_i32_1 = arith.constant 0 : i32
    return %c0_i32, %c0_i32_0 : i32, i32
  }
  func.func @transform_1(%arg0: i32) -> (i32, i32) {
    %c0_i32 = arith.constant 0 : i32
    %c0_i32_0 = arith.constant 0 : i32
    %c0_i32_1 = arith.constant 0 : i32
    return %c0_i32, %c0_i32_0 : i32, i32
  }
  func.func @transform_2(%arg0: i32) -> (i32, i32) {
    %c0_i32 = arith.constant 0 : i32
    %c0_i32_0 = arith.constant 0 : i32
    %c0_i32_1 = arith.constant 0 : i32
    return %c0_i32, %c0_i32_0 : i32, i32
  }
  func.func @transform_3(%arg0: i32) -> (i32, i32) {
    %c0_i32 = arith.constant 0 : i32
    %c0_i32_0 = arith.constant 0 : i32
    %c0_i32_1 = arith.constant 0 : i32
    return %c0_i32, %c0_i32_0 : i32, i32
  }
  func.func @transform_4(%arg0: i32) -> (i32, i32) {
    %c0_i32 = arith.constant 0 : i32
    %c0_i32_0 = arith.constant 0 : i32
    %c0_i32_1 = arith.constant 0 : i32
    return %c0_i32, %c0_i32_0 : i32, i32
  }
  func.func @transform_5(%arg0: i32) -> (i32, i32, i32) {
    %c0_i32 = arith.constant 0 : i32
    %c0_i32_0 = arith.constant 0 : i32
    %c0_i32_1 = arith.constant 0 : i32
    %c0_i32_2 = arith.constant 0 : i32
    return %c0_i32, %c0_i32_0, %c0_i32_1 : i32, i32, i32
  }
  func.func @transform_6(%arg0: i32) -> (i32, i32) {
    %c0_i32 = arith.constant 0 : i32
    %c0_i32_0 = arith.constant 0 : i32
    %c0_i32_1 = arith.constant 0 : i32
    return %c0_i32, %c0_i32_0 : i32, i32
  }
  func.func @transform_7(%arg0: i32) -> (i32, i32) {
    %c0_i32 = arith.constant 0 : i32
    %c0_i32_0 = arith.constant 0 : i32
    %c0_i32_1 = arith.constant 0 : i32
    return %c0_i32, %c0_i32_0 : i32, i32
  }
  func.func @transform_8(%arg0: i32) -> (i32, i32) {
    %c0_i32 = arith.constant 0 : i32
    %c0_i32_0 = arith.constant 0 : i32
    %c0_i32_1 = arith.constant 0 : i32
    return %c0_i32, %c0_i32_0 : i32, i32
  }
  func.func @transform_9(%arg0: i32) -> (i32, i32) {
    %c0_i32 = arith.constant 0 : i32
    %c0_i32_0 = arith.constant 0 : i32
    %c0_i32_1 = arith.constant 0 : i32
    return %c0_i32, %c0_i32_0 : i32, i32
  }
  func.func @transform_10(%arg0: i32) -> (i32, i32) {
    %c0_i32 = arith.constant 0 : i32
    %c0_i32_0 = arith.constant 0 : i32
    %c0_i32_1 = arith.constant 0 : i32
    return %c0_i32, %c0_i32_0 : i32, i32
  }
  func.func @transform_11(%arg0: i32) -> (i32, i32) {
    %c0_i32 = arith.constant 0 : i32
    %c0_i32_0 = arith.constant 0 : i32
    %c0_i32_1 = arith.constant 0 : i32
    return %c0_i32, %c0_i32_0 : i32, i32
  }
  func.func @transform_12(%arg0: i32) -> (i32, i32) {
    %c0_i32 = arith.constant 0 : i32
    %c0_i32_0 = arith.constant 0 : i32
    %c0_i32_1 = arith.constant 0 : i32
    return %c0_i32, %c0_i32_0 : i32, i32
  }
  func.func @transform_13(%arg0: i32) -> (i32, i32) {
    %c0_i32 = arith.constant 0 : i32
    %c0_i32_0 = arith.constant 0 : i32
    %c0_i32_1 = arith.constant 0 : i32
    return %c0_i32, %c0_i32_0 : i32, i32
  }
  func.func @transform_14(%arg0: i32) -> (i32, i32) {
    %c0_i32 = arith.constant 0 : i32
    %c0_i32_0 = arith.constant 0 : i32
    %c0_i32_1 = arith.constant 0 : i32
    return %c0_i32, %c0_i32_0 : i32, i32
  }
}

module attributes {stable_mosaic.version = 11 : i64} {
  func.func @_bottleneck_kernel(%arg0: i32, %arg1: memref<28x128xbf16, #tpu.memory_space<vmem>>, %arg2: memref<14x128xbf16, #tpu.memory_space<vmem>>, %arg3: memref<128x32xbf16, #tpu.memory_space<vmem>>, %arg4: memref<1x32xf32, #tpu.memory_space<vmem>>, %arg5: memref<1x32xf32, #tpu.memory_space<vmem>>, %arg6: memref<6x16x16xbf16, #tpu.memory_space<vmem>>, %arg7: memref<1x32xf32, #tpu.memory_space<vmem>>, %arg8: memref<1x32xf32, #tpu.memory_space<vmem>>, %arg9: memref<32x256xbf16, #tpu.memory_space<vmem>>, %arg10: memref<1x256xf32, #tpu.memory_space<vmem>>, %arg11: memref<1x256xf32, #tpu.memory_space<vmem>>, %arg12: memref<128x256xbf16, #tpu.memory_space<vmem>>, %arg13: memref<1x256xf32, #tpu.memory_space<vmem>>, %arg14: memref<1x256xf32, #tpu.memory_space<vmem>>, %arg15: memref<14x256xbf16, #tpu.memory_space<vmem>>) attributes {dimension_semantics = [#tpu.dimension_semantics<arbitrary>], iteration_bounds = array<i64: 1>, scalar_prefetch = 0 : i64, scratch_operands = 0 : i64, tpu.core_type = #tpu.core_type<tc>, window_params = [{pipeline_mode = #tpu.pipeline_mode<synchronous>, transform_indices = @transform_0, window_bounds = array<i64: 28, 128>}, {pipeline_mode = #tpu.pipeline_mode<synchronous>, transform_indices = @transform_1, window_bounds = array<i64: 14, 128>}, {pipeline_mode = #tpu.pipeline_mode<synchronous>, transform_indices = @transform_2, window_bounds = array<i64: 128, 32>}, {pipeline_mode = #tpu.pipeline_mode<synchronous>, transform_indices = @transform_3, window_bounds = array<i64: 1, 32>}, {pipeline_mode = #tpu.pipeline_mode<synchronous>, transform_indices = @transform_4, window_bounds = array<i64: 1, 32>}, {pipeline_mode = #tpu.pipeline_mode<synchronous>, transform_indices = @transform_5, window_bounds = array<i64: 6, 16, 16>}, {pipeline_mode = #tpu.pipeline_mode<synchronous>, transform_indices = @transform_6, window_bounds = array<i64: 1, 32>}, {pipeline_mode = #tpu.pipeline_mode<synchronous>, transform_indices = @transform_7, window_bounds = array<i64: 1, 32>}, {pipeline_mode = #tpu.pipeline_mode<synchronous>, transform_indices = @transform_8, window_bounds = array<i64: 32, 256>}, {pipeline_mode = #tpu.pipeline_mode<synchronous>, transform_indices = @transform_9, window_bounds = array<i64: 1, 256>}, {pipeline_mode = #tpu.pipeline_mode<synchronous>, transform_indices = @transform_10, window_bounds = array<i64: 1, 256>}, {pipeline_mode = #tpu.pipeline_mode<synchronous>, transform_indices = @transform_11, window_bounds = array<i64: 128, 256>}, {pipeline_mode = #tpu.pipeline_mode<synchronous>, transform_indices = @transform_12, window_bounds = array<i64: 1, 256>}, {pipeline_mode = #tpu.pipeline_mode<synchronous>, transform_indices = @transform_13, window_bounds = array<i64: 1, 256>}, {pipeline_mode = #tpu.pipeline_mode<synchronous>, transform_indices = @transform_14, window_bounds = array<i64: 14, 256>}]} {
    %c0 = arith.constant 0 : index
    %c0_0 = arith.constant 0 : index
    %0 = vector.load %arg1[%c0, %c0_0] : memref<28x128xbf16, #tpu.memory_space<vmem>>, vector<28x128xbf16>
    %c0_1 = arith.constant 0 : index
    %c0_2 = arith.constant 0 : index
    %1 = vector.load %arg3[%c0_1, %c0_2] : memref<128x32xbf16, #tpu.memory_space<vmem>>, vector<128x32xbf16>
    %cst = arith.constant dense<0.000000e+00> : vector<28x32xf32>
    %2 = tpu.matmul %0, %1, %cst {dimension_numbers = #tpu.dot_dimension_numbers<[1], [0], [0], [1], [0, 0, 1, 1], [], []>} : vector<28x128xbf16>, vector<128x32xbf16>, vector<28x32xf32> -> vector<28x32xf32>
    %c0_3 = arith.constant 0 : index
    %c0_4 = arith.constant 0 : index
    %3 = vector.load %arg4[%c0_3, %c0_4] : memref<1x32xf32, #tpu.memory_space<vmem>>, vector<1x32xf32>
    %c0_5 = arith.constant 0 : index
    %c0_6 = arith.constant 0 : index
    %4 = vector.load %arg5[%c0_5, %c0_6] : memref<1x32xf32, #tpu.memory_space<vmem>>, vector<1x32xf32>
    %cst_7 = arith.constant dense<0.000000e+00> : vector<32xf32>
    %5 = vector.multi_reduction <add>, %2, %cst_7 [0] : vector<28x32xf32> to vector<32xf32>
    %6 = vector.shape_cast %5 : vector<32xf32> to vector<1x32xf32>
    %cst_8 = arith.constant 2.800000e+01 : f32
    %7 = vector.broadcast %cst_8 : f32 to vector<1x32xf32>
    %8 = arith.divf %6, %7 : vector<1x32xf32>
    %9 = vector.broadcast %8 : vector<1x32xf32> to vector<28x32xf32>
    %10 = arith.subf %2, %9 : vector<28x32xf32>
    %11 = arith.mulf %10, %10 : vector<28x32xf32>
    %cst_9 = arith.constant dense<0.000000e+00> : vector<32xf32>
    %12 = vector.multi_reduction <add>, %11, %cst_9 [0] : vector<28x32xf32> to vector<32xf32>
    %13 = vector.shape_cast %12 : vector<32xf32> to vector<1x32xf32>
    %cst_10 = arith.constant 2.800000e+01 : f32
    %14 = vector.broadcast %cst_10 : f32 to vector<1x32xf32>
    %15 = arith.divf %13, %14 : vector<1x32xf32>
    %16 = vector.broadcast %8 : vector<1x32xf32> to vector<28x32xf32>
    %17 = arith.subf %2, %16 : vector<28x32xf32>
    %cst_11 = arith.constant 9.99999974E-6 : f32
    %18 = vector.broadcast %cst_11 : f32 to vector<1x32xf32>
    %19 = arith.addf %15, %18 : vector<1x32xf32>
    %20 = math.rsqrt %19 : vector<1x32xf32>
    %21 = vector.broadcast %20 : vector<1x32xf32> to vector<28x32xf32>
    %22 = arith.mulf %17, %21 : vector<28x32xf32>
    %23 = vector.broadcast %3 : vector<1x32xf32> to vector<28x32xf32>
    %24 = arith.mulf %22, %23 : vector<28x32xf32>
    %25 = vector.broadcast %4 : vector<1x32xf32> to vector<28x32xf32>
    %26 = arith.addf %24, %25 : vector<28x32xf32>
    %cst_12 = arith.constant 0.000000e+00 : f32
    %27 = vector.broadcast %cst_12 : f32 to vector<28x32xf32>
    %28 = arith.maximumf %26, %27 : vector<28x32xf32>
    %cst_13 = arith.constant 0.000000e+00 : f32
    %29 = vector.broadcast %cst_13 : f32 to vector<1x32xf32>
    %30 = vector.extract_strided_slice %28 {offsets = [0, 0], sizes = [14, 32], strides = [1, 1]} : vector<28x32xf32> to vector<14x32xf32>
    %31 = vector.extract_strided_slice %28 {offsets = [14, 0], sizes = [14, 32], strides = [1, 1]} : vector<28x32xf32> to vector<14x32xf32>
    %32 = tpu.concatenate %29, %30, %29, %29, %31, %29 in 0 : vector<1x32xf32>, vector<14x32xf32>, vector<1x32xf32>, vector<1x32xf32>, vector<14x32xf32>, vector<1x32xf32> -> vector<32x32xf32>
    %33 = arith.truncf %32 : vector<32x32xf32> to vector<32x32xbf16>
    %34 = tpu.iota {dimensions = array<i32: 0>} : vector<7x14xi32>
    %35 = tpu.iota {dimensions = array<i32: 1>} : vector<7x14xi32>
    %c2_i32 = arith.constant 2 : i32
    %36 = vector.broadcast %c2_i32 : i32 to vector<7x14xi32>
    %37 = arith.muli %34, %36 : vector<7x14xi32>
    %38 = arith.cmpi eq, %35, %37 : vector<7x14xi32>
    %39 = arith.extui %38 : vector<7x14xi1> to vector<7x14xi32>
    %40 = arith.sitofp %39 : vector<7x14xi32> to vector<7x14xf32>
    %41 = vector.extract_strided_slice %33 {offsets = [0, 0], sizes = [32, 16], strides = [1, 1]} : vector<32x32xbf16> to vector<32x16xbf16>
    %c0_14 = arith.constant 0 : index
    %c0_15 = arith.constant 0 : index
    %c0_16 = arith.constant 0 : index
    %42 = vector.load %arg6[%c0_14, %c0_15, %c0_16] : memref<6x16x16xbf16, #tpu.memory_space<vmem>>, vector<1x16x16xbf16>
    %43 = vector.shape_cast %42 : vector<1x16x16xbf16> to vector<16x16xbf16>
    %cst_17 = arith.constant dense<0.000000e+00> : vector<32x16xf32>
    %44 = tpu.matmul %41, %43, %cst_17 {dimension_numbers = #tpu.dot_dimension_numbers<[1], [0], [0], [1], [0, 0, 1, 1], [], []>} : vector<32x16xbf16>, vector<16x16xbf16>, vector<32x16xf32> -> vector<32x16xf32>
    %c1 = arith.constant 1 : index
    %c0_18 = arith.constant 0 : index
    %c0_19 = arith.constant 0 : index
    %45 = vector.load %arg6[%c1, %c0_18, %c0_19] : memref<6x16x16xbf16, #tpu.memory_space<vmem>>, vector<1x16x16xbf16>
    %46 = vector.shape_cast %45 : vector<1x16x16xbf16> to vector<16x16xbf16>
    %cst_20 = arith.constant dense<0.000000e+00> : vector<32x16xf32>
    %47 = tpu.matmul %41, %46, %cst_20 {dimension_numbers = #tpu.dot_dimension_numbers<[1], [0], [0], [1], [0, 0, 1, 1], [], []>} : vector<32x16xbf16>, vector<16x16xbf16>, vector<32x16xf32> -> vector<32x16xf32>
    %c2 = arith.constant 2 : index
    %c0_21 = arith.constant 0 : index
    %c0_22 = arith.constant 0 : index
    %48 = vector.load %arg6[%c2, %c0_21, %c0_22] : memref<6x16x16xbf16, #tpu.memory_space<vmem>>, vector<1x16x16xbf16>
    %49 = vector.shape_cast %48 : vector<1x16x16xbf16> to vector<16x16xbf16>
    %cst_23 = arith.constant dense<0.000000e+00> : vector<32x16xf32>
    %50 = tpu.matmul %41, %49, %cst_23 {dimension_numbers = #tpu.dot_dimension_numbers<[1], [0], [0], [1], [0, 0, 1, 1], [], []>} : vector<32x16xbf16>, vector<16x16xbf16>, vector<32x16xf32> -> vector<32x16xf32>
    %51 = vector.extract_strided_slice %44 {offsets = [0, 0], sizes = [14, 16], strides = [1, 1]} : vector<32x16xf32> to vector<14x16xf32>
    %52 = vector.extract_strided_slice %47 {offsets = [1, 0], sizes = [14, 16], strides = [1, 1]} : vector<32x16xf32> to vector<14x16xf32>
    %53 = arith.addf %51, %52 : vector<14x16xf32>
    %54 = vector.extract_strided_slice %50 {offsets = [2, 0], sizes = [14, 16], strides = [1, 1]} : vector<32x16xf32> to vector<14x16xf32>
    %55 = arith.addf %53, %54 : vector<14x16xf32>
    %cst_24 = arith.constant dense<0.000000e+00> : vector<7x16xf32>
    %56 = tpu.matmul %40, %55, %cst_24 {dimension_numbers = #tpu.dot_dimension_numbers<[1], [0], [0], [1], [0, 0, 1, 1], [], []>} : vector<7x14xf32>, vector<14x16xf32>, vector<7x16xf32> -> vector<7x16xf32>
    %57 = vector.extract_strided_slice %44 {offsets = [16, 0], sizes = [14, 16], strides = [1, 1]} : vector<32x16xf32> to vector<14x16xf32>
    %58 = vector.extract_strided_slice %47 {offsets = [17, 0], sizes = [14, 16], strides = [1, 1]} : vector<32x16xf32> to vector<14x16xf32>
    %59 = arith.addf %57, %58 : vector<14x16xf32>
    %60 = vector.extract_strided_slice %50 {offsets = [18, 0], sizes = [14, 16], strides = [1, 1]} : vector<32x16xf32> to vector<14x16xf32>
    %61 = arith.addf %59, %60 : vector<14x16xf32>
    %cst_25 = arith.constant dense<0.000000e+00> : vector<7x16xf32>
    %62 = tpu.matmul %40, %61, %cst_25 {dimension_numbers = #tpu.dot_dimension_numbers<[1], [0], [0], [1], [0, 0, 1, 1], [], []>} : vector<7x14xf32>, vector<14x16xf32>, vector<7x16xf32> -> vector<7x16xf32>
    %63 = vector.extract_strided_slice %33 {offsets = [0, 16], sizes = [32, 16], strides = [1, 1]} : vector<32x32xbf16> to vector<32x16xbf16>
    %c3 = arith.constant 3 : index
    %c0_26 = arith.constant 0 : index
    %c0_27 = arith.constant 0 : index
    %64 = vector.load %arg6[%c3, %c0_26, %c0_27] : memref<6x16x16xbf16, #tpu.memory_space<vmem>>, vector<1x16x16xbf16>
    %65 = vector.shape_cast %64 : vector<1x16x16xbf16> to vector<16x16xbf16>
    %cst_28 = arith.constant dense<0.000000e+00> : vector<32x16xf32>
    %66 = tpu.matmul %63, %65, %cst_28 {dimension_numbers = #tpu.dot_dimension_numbers<[1], [0], [0], [1], [0, 0, 1, 1], [], []>} : vector<32x16xbf16>, vector<16x16xbf16>, vector<32x16xf32> -> vector<32x16xf32>
    %c4 = arith.constant 4 : index
    %c0_29 = arith.constant 0 : index
    %c0_30 = arith.constant 0 : index
    %67 = vector.load %arg6[%c4, %c0_29, %c0_30] : memref<6x16x16xbf16, #tpu.memory_space<vmem>>, vector<1x16x16xbf16>
    %68 = vector.shape_cast %67 : vector<1x16x16xbf16> to vector<16x16xbf16>
    %cst_31 = arith.constant dense<0.000000e+00> : vector<32x16xf32>
    %69 = tpu.matmul %63, %68, %cst_31 {dimension_numbers = #tpu.dot_dimension_numbers<[1], [0], [0], [1], [0, 0, 1, 1], [], []>} : vector<32x16xbf16>, vector<16x16xbf16>, vector<32x16xf32> -> vector<32x16xf32>
    %c5 = arith.constant 5 : index
    %c0_32 = arith.constant 0 : index
    %c0_33 = arith.constant 0 : index
    %70 = vector.load %arg6[%c5, %c0_32, %c0_33] : memref<6x16x16xbf16, #tpu.memory_space<vmem>>, vector<1x16x16xbf16>
    %71 = vector.shape_cast %70 : vector<1x16x16xbf16> to vector<16x16xbf16>
    %cst_34 = arith.constant dense<0.000000e+00> : vector<32x16xf32>
    %72 = tpu.matmul %63, %71, %cst_34 {dimension_numbers = #tpu.dot_dimension_numbers<[1], [0], [0], [1], [0, 0, 1, 1], [], []>} : vector<32x16xbf16>, vector<16x16xbf16>, vector<32x16xf32> -> vector<32x16xf32>
    %73 = vector.extract_strided_slice %66 {offsets = [0, 0], sizes = [14, 16], strides = [1, 1]} : vector<32x16xf32> to vector<14x16xf32>
    %74 = vector.extract_strided_slice %69 {offsets = [1, 0], sizes = [14, 16], strides = [1, 1]} : vector<32x16xf32> to vector<14x16xf32>
    %75 = arith.addf %73, %74 : vector<14x16xf32>
    %76 = vector.extract_strided_slice %72 {offsets = [2, 0], sizes = [14, 16], strides = [1, 1]} : vector<32x16xf32> to vector<14x16xf32>
    %77 = arith.addf %75, %76 : vector<14x16xf32>
    %cst_35 = arith.constant dense<0.000000e+00> : vector<7x16xf32>
    %78 = tpu.matmul %40, %77, %cst_35 {dimension_numbers = #tpu.dot_dimension_numbers<[1], [0], [0], [1], [0, 0, 1, 1], [], []>} : vector<7x14xf32>, vector<14x16xf32>, vector<7x16xf32> -> vector<7x16xf32>
    %79 = vector.extract_strided_slice %66 {offsets = [16, 0], sizes = [14, 16], strides = [1, 1]} : vector<32x16xf32> to vector<14x16xf32>
    %80 = vector.extract_strided_slice %69 {offsets = [17, 0], sizes = [14, 16], strides = [1, 1]} : vector<32x16xf32> to vector<14x16xf32>
    %81 = arith.addf %79, %80 : vector<14x16xf32>
    %82 = vector.extract_strided_slice %72 {offsets = [18, 0], sizes = [14, 16], strides = [1, 1]} : vector<32x16xf32> to vector<14x16xf32>
    %83 = arith.addf %81, %82 : vector<14x16xf32>
    %cst_36 = arith.constant dense<0.000000e+00> : vector<7x16xf32>
    %84 = tpu.matmul %40, %83, %cst_36 {dimension_numbers = #tpu.dot_dimension_numbers<[1], [0], [0], [1], [0, 0, 1, 1], [], []>} : vector<7x14xf32>, vector<14x16xf32>, vector<7x16xf32> -> vector<7x16xf32>
    %85 = tpu.concatenate %56, %78 in 1 : vector<7x16xf32>, vector<7x16xf32> -> vector<7x32xf32>
    %86 = tpu.concatenate %62, %84 in 1 : vector<7x16xf32>, vector<7x16xf32> -> vector<7x32xf32>
    %87 = tpu.concatenate %85, %86 in 0 : vector<7x32xf32>, vector<7x32xf32> -> vector<14x32xf32>
    %c0_37 = arith.constant 0 : index
    %c0_38 = arith.constant 0 : index
    %88 = vector.load %arg7[%c0_37, %c0_38] : memref<1x32xf32, #tpu.memory_space<vmem>>, vector<1x32xf32>
    %c0_39 = arith.constant 0 : index
    %c0_40 = arith.constant 0 : index
    %89 = vector.load %arg8[%c0_39, %c0_40] : memref<1x32xf32, #tpu.memory_space<vmem>>, vector<1x32xf32>
    %cst_41 = arith.constant dense<0.000000e+00> : vector<32xf32>
    %90 = vector.multi_reduction <add>, %87, %cst_41 [0] : vector<14x32xf32> to vector<32xf32>
    %91 = vector.shape_cast %90 : vector<32xf32> to vector<1x32xf32>
    %cst_42 = arith.constant 1.400000e+01 : f32
    %92 = vector.broadcast %cst_42 : f32 to vector<1x32xf32>
    %93 = arith.divf %91, %92 : vector<1x32xf32>
    %94 = vector.broadcast %93 : vector<1x32xf32> to vector<14x32xf32>
    %95 = arith.subf %87, %94 : vector<14x32xf32>
    %96 = arith.mulf %95, %95 : vector<14x32xf32>
    %cst_43 = arith.constant dense<0.000000e+00> : vector<32xf32>
    %97 = vector.multi_reduction <add>, %96, %cst_43 [0] : vector<14x32xf32> to vector<32xf32>
    %98 = vector.shape_cast %97 : vector<32xf32> to vector<1x32xf32>
    %cst_44 = arith.constant 1.400000e+01 : f32
    %99 = vector.broadcast %cst_44 : f32 to vector<1x32xf32>
    %100 = arith.divf %98, %99 : vector<1x32xf32>
    %101 = vector.broadcast %93 : vector<1x32xf32> to vector<14x32xf32>
    %102 = arith.subf %87, %101 : vector<14x32xf32>
    %cst_45 = arith.constant 9.99999974E-6 : f32
    %103 = vector.broadcast %cst_45 : f32 to vector<1x32xf32>
    %104 = arith.addf %100, %103 : vector<1x32xf32>
    %105 = math.rsqrt %104 : vector<1x32xf32>
    %106 = vector.broadcast %105 : vector<1x32xf32> to vector<14x32xf32>
    %107 = arith.mulf %102, %106 : vector<14x32xf32>
    %108 = vector.broadcast %88 : vector<1x32xf32> to vector<14x32xf32>
    %109 = arith.mulf %107, %108 : vector<14x32xf32>
    %110 = vector.broadcast %89 : vector<1x32xf32> to vector<14x32xf32>
    %111 = arith.addf %109, %110 : vector<14x32xf32>
    %cst_46 = arith.constant 0.000000e+00 : f32
    %112 = vector.broadcast %cst_46 : f32 to vector<14x32xf32>
    %113 = arith.maximumf %111, %112 : vector<14x32xf32>
    %114 = arith.truncf %113 : vector<14x32xf32> to vector<14x32xbf16>
    %c0_47 = arith.constant 0 : index
    %c0_48 = arith.constant 0 : index
    %115 = vector.load %arg9[%c0_47, %c0_48] : memref<32x256xbf16, #tpu.memory_space<vmem>>, vector<32x256xbf16>
    %cst_49 = arith.constant dense<0.000000e+00> : vector<14x256xf32>
    %116 = tpu.matmul %114, %115, %cst_49 {dimension_numbers = #tpu.dot_dimension_numbers<[1], [0], [0], [1], [0, 0, 1, 1], [], []>} : vector<14x32xbf16>, vector<32x256xbf16>, vector<14x256xf32> -> vector<14x256xf32>
    %c0_50 = arith.constant 0 : index
    %c0_51 = arith.constant 0 : index
    %117 = vector.load %arg10[%c0_50, %c0_51] : memref<1x256xf32, #tpu.memory_space<vmem>>, vector<1x256xf32>
    %c0_52 = arith.constant 0 : index
    %c0_53 = arith.constant 0 : index
    %118 = vector.load %arg11[%c0_52, %c0_53] : memref<1x256xf32, #tpu.memory_space<vmem>>, vector<1x256xf32>
    %cst_54 = arith.constant dense<0.000000e+00> : vector<256xf32>
    %119 = vector.multi_reduction <add>, %116, %cst_54 [0] : vector<14x256xf32> to vector<256xf32>
    %120 = vector.shape_cast %119 : vector<256xf32> to vector<1x256xf32>
    %cst_55 = arith.constant 1.400000e+01 : f32
    %121 = vector.broadcast %cst_55 : f32 to vector<1x256xf32>
    %122 = arith.divf %120, %121 : vector<1x256xf32>
    %123 = vector.broadcast %122 : vector<1x256xf32> to vector<14x256xf32>
    %124 = arith.subf %116, %123 : vector<14x256xf32>
    %125 = arith.mulf %124, %124 : vector<14x256xf32>
    %cst_56 = arith.constant dense<0.000000e+00> : vector<256xf32>
    %126 = vector.multi_reduction <add>, %125, %cst_56 [0] : vector<14x256xf32> to vector<256xf32>
    %127 = vector.shape_cast %126 : vector<256xf32> to vector<1x256xf32>
    %cst_57 = arith.constant 1.400000e+01 : f32
    %128 = vector.broadcast %cst_57 : f32 to vector<1x256xf32>
    %129 = arith.divf %127, %128 : vector<1x256xf32>
    %130 = vector.broadcast %122 : vector<1x256xf32> to vector<14x256xf32>
    %131 = arith.subf %116, %130 : vector<14x256xf32>
    %cst_58 = arith.constant 9.99999974E-6 : f32
    %132 = vector.broadcast %cst_58 : f32 to vector<1x256xf32>
    %133 = arith.addf %129, %132 : vector<1x256xf32>
    %134 = math.rsqrt %133 : vector<1x256xf32>
    %135 = vector.broadcast %134 : vector<1x256xf32> to vector<14x256xf32>
    %136 = arith.mulf %131, %135 : vector<14x256xf32>
    %137 = vector.broadcast %117 : vector<1x256xf32> to vector<14x256xf32>
    %138 = arith.mulf %136, %137 : vector<14x256xf32>
    %139 = vector.broadcast %118 : vector<1x256xf32> to vector<14x256xf32>
    %140 = arith.addf %138, %139 : vector<14x256xf32>
    %c0_59 = arith.constant 0 : index
    %c0_60 = arith.constant 0 : index
    %141 = vector.load %arg2[%c0_59, %c0_60] : memref<14x128xbf16, #tpu.memory_space<vmem>>, vector<14x128xbf16>
    %c0_61 = arith.constant 0 : index
    %c0_62 = arith.constant 0 : index
    %142 = vector.load %arg12[%c0_61, %c0_62] : memref<128x256xbf16, #tpu.memory_space<vmem>>, vector<128x256xbf16>
    %cst_63 = arith.constant dense<0.000000e+00> : vector<14x256xf32>
    %143 = tpu.matmul %141, %142, %cst_63 {dimension_numbers = #tpu.dot_dimension_numbers<[1], [0], [0], [1], [0, 0, 1, 1], [], []>} : vector<14x128xbf16>, vector<128x256xbf16>, vector<14x256xf32> -> vector<14x256xf32>
    %c0_64 = arith.constant 0 : index
    %c0_65 = arith.constant 0 : index
    %144 = vector.load %arg13[%c0_64, %c0_65] : memref<1x256xf32, #tpu.memory_space<vmem>>, vector<1x256xf32>
    %c0_66 = arith.constant 0 : index
    %c0_67 = arith.constant 0 : index
    %145 = vector.load %arg14[%c0_66, %c0_67] : memref<1x256xf32, #tpu.memory_space<vmem>>, vector<1x256xf32>
    %cst_68 = arith.constant dense<0.000000e+00> : vector<256xf32>
    %146 = vector.multi_reduction <add>, %143, %cst_68 [0] : vector<14x256xf32> to vector<256xf32>
    %147 = vector.shape_cast %146 : vector<256xf32> to vector<1x256xf32>
    %cst_69 = arith.constant 1.400000e+01 : f32
    %148 = vector.broadcast %cst_69 : f32 to vector<1x256xf32>
    %149 = arith.divf %147, %148 : vector<1x256xf32>
    %150 = vector.broadcast %149 : vector<1x256xf32> to vector<14x256xf32>
    %151 = arith.subf %143, %150 : vector<14x256xf32>
    %152 = arith.mulf %151, %151 : vector<14x256xf32>
    %cst_70 = arith.constant dense<0.000000e+00> : vector<256xf32>
    %153 = vector.multi_reduction <add>, %152, %cst_70 [0] : vector<14x256xf32> to vector<256xf32>
    %154 = vector.shape_cast %153 : vector<256xf32> to vector<1x256xf32>
    %cst_71 = arith.constant 1.400000e+01 : f32
    %155 = vector.broadcast %cst_71 : f32 to vector<1x256xf32>
    %156 = arith.divf %154, %155 : vector<1x256xf32>
    %157 = vector.broadcast %149 : vector<1x256xf32> to vector<14x256xf32>
    %158 = arith.subf %143, %157 : vector<14x256xf32>
    %cst_72 = arith.constant 9.99999974E-6 : f32
    %159 = vector.broadcast %cst_72 : f32 to vector<1x256xf32>
    %160 = arith.addf %156, %159 : vector<1x256xf32>
    %161 = math.rsqrt %160 : vector<1x256xf32>
    %162 = vector.broadcast %161 : vector<1x256xf32> to vector<14x256xf32>
    %163 = arith.mulf %158, %162 : vector<14x256xf32>
    %164 = vector.broadcast %144 : vector<1x256xf32> to vector<14x256xf32>
    %165 = arith.mulf %163, %164 : vector<14x256xf32>
    %166 = vector.broadcast %145 : vector<1x256xf32> to vector<14x256xf32>
    %167 = arith.addf %165, %166 : vector<14x256xf32>
    %168 = arith.addf %140, %167 : vector<14x256xf32>
    %cst_73 = arith.constant 0.000000e+00 : f32
    %169 = vector.broadcast %cst_73 : f32 to vector<14x256xf32>
    %170 = arith.maximumf %168, %169 : vector<14x256xf32>
    %171 = arith.truncf %170 : vector<14x256xf32> to vector<14x256xbf16>
    %c0_74 = arith.constant 0 : index
    %c0_75 = arith.constant 0 : index
    %172 = vector.load %arg15[%c0_74, %c0_75] : memref<14x256xbf16, #tpu.memory_space<vmem>>, vector<14x256xbf16>
    tpu.vector_store %arg15[%c0_74, %c0_75], %171 {strides = array<i32>} : memref<14x256xbf16, #tpu.memory_space<vmem>>, vector<14x256xbf16>,
    return
  }
  func.func @transform_0(%arg0: i32) -> (i32, i32) {
    %c0_i32 = arith.constant 0 : i32
    %c0_i32_0 = arith.constant 0 : i32
    %c0_i32_1 = arith.constant 0 : i32
    return %c0_i32, %c0_i32_0 : i32, i32
  }
  func.func @transform_1(%arg0: i32) -> (i32, i32) {
    %c0_i32 = arith.constant 0 : i32
    %c0_i32_0 = arith.constant 0 : i32
    %c0_i32_1 = arith.constant 0 : i32
    return %c0_i32, %c0_i32_0 : i32, i32
  }
  func.func @transform_2(%arg0: i32) -> (i32, i32) {
    %c0_i32 = arith.constant 0 : i32
    %c0_i32_0 = arith.constant 0 : i32
    %c0_i32_1 = arith.constant 0 : i32
    return %c0_i32, %c0_i32_0 : i32, i32
  }
  func.func @transform_3(%arg0: i32) -> (i32, i32) {
    %c0_i32 = arith.constant 0 : i32
    %c0_i32_0 = arith.constant 0 : i32
    %c0_i32_1 = arith.constant 0 : i32
    return %c0_i32, %c0_i32_0 : i32, i32
  }
  func.func @transform_4(%arg0: i32) -> (i32, i32) {
    %c0_i32 = arith.constant 0 : i32
    %c0_i32_0 = arith.constant 0 : i32
    %c0_i32_1 = arith.constant 0 : i32
    return %c0_i32, %c0_i32_0 : i32, i32
  }
  func.func @transform_5(%arg0: i32) -> (i32, i32, i32) {
    %c0_i32 = arith.constant 0 : i32
    %c0_i32_0 = arith.constant 0 : i32
    %c0_i32_1 = arith.constant 0 : i32
    %c0_i32_2 = arith.constant 0 : i32
    return %c0_i32, %c0_i32_0, %c0_i32_1 : i32, i32, i32
  }
  func.func @transform_6(%arg0: i32) -> (i32, i32) {
    %c0_i32 = arith.constant 0 : i32
    %c0_i32_0 = arith.constant 0 : i32
    %c0_i32_1 = arith.constant 0 : i32
    return %c0_i32, %c0_i32_0 : i32, i32
  }
  func.func @transform_7(%arg0: i32) -> (i32, i32) {
    %c0_i32 = arith.constant 0 : i32
    %c0_i32_0 = arith.constant 0 : i32
    %c0_i32_1 = arith.constant 0 : i32
    return %c0_i32, %c0_i32_0 : i32, i32
  }
  func.func @transform_8(%arg0: i32) -> (i32, i32) {
    %c0_i32 = arith.constant 0 : i32
    %c0_i32_0 = arith.constant 0 : i32
    %c0_i32_1 = arith.constant 0 : i32
    return %c0_i32, %c0_i32_0 : i32, i32
  }
  func.func @transform_9(%arg0: i32) -> (i32, i32) {
    %c0_i32 = arith.constant 0 : i32
    %c0_i32_0 = arith.constant 0 : i32
    %c0_i32_1 = arith.constant 0 : i32
    return %c0_i32, %c0_i32_0 : i32, i32
  }
  func.func @transform_10(%arg0: i32) -> (i32, i32) {
    %c0_i32 = arith.constant 0 : i32
    %c0_i32_0 = arith.constant 0 : i32
    %c0_i32_1 = arith.constant 0 : i32
    return %c0_i32, %c0_i32_0 : i32, i32
  }
  func.func @transform_11(%arg0: i32) -> (i32, i32) {
    %c0_i32 = arith.constant 0 : i32
    %c0_i32_0 = arith.constant 0 : i32
    %c0_i32_1 = arith.constant 0 : i32
    return %c0_i32, %c0_i32_0 : i32, i32
  }
  func.func @transform_12(%arg0: i32) -> (i32, i32) {
    %c0_i32 = arith.constant 0 : i32
    %c0_i32_0 = arith.constant 0 : i32
    %c0_i32_1 = arith.constant 0 : i32
    return %c0_i32, %c0_i32_0 : i32, i32
  }
  func.func @transform_13(%arg0: i32) -> (i32, i32) {
    %c0_i32 = arith.constant 0 : i32
    %c0_i32_0 = arith.constant 0 : i32
    %c0_i32_1 = arith.constant 0 : i32
    return %c0_i32, %c0_i32_0 : i32, i32
  }
  func.func @transform_14(%arg0: i32) -> (i32, i32) {
    %c0_i32 = arith.constant 0 : i32
    %c0_i32_0 = arith.constant 0 : i32
    %c0_i32_1 = arith.constant 0 : i32
    return %c0_i32, %c0_i32_0 : i32, i32
  }
}

module attributes {stable_mosaic.version = 11 : i64} {
  func.func @_head_kernel(%arg0: i32, %arg1: memref<14x256xbf16, #tpu.memory_space<vmem>>, %arg2: memref<256x128xbf16, #tpu.memory_space<vmem>>, %arg3: memref<1x128xf32, #tpu.memory_space<vmem>>, %arg4: memref<2x128xf32, #tpu.memory_space<vmem>>) attributes {dimension_semantics = [#tpu.dimension_semantics<arbitrary>], iteration_bounds = array<i64: 1>, scalar_prefetch = 0 : i64, scratch_operands = 0 : i64, tpu.core_type = #tpu.core_type<tc>, window_params = [{pipeline_mode = #tpu.pipeline_mode<synchronous>, transform_indices = @transform_0, window_bounds = array<i64: 14, 256>}, {pipeline_mode = #tpu.pipeline_mode<synchronous>, transform_indices = @transform_1, window_bounds = array<i64: 256, 128>}, {pipeline_mode = #tpu.pipeline_mode<synchronous>, transform_indices = @transform_2, window_bounds = array<i64: 1, 128>}, {pipeline_mode = #tpu.pipeline_mode<synchronous>, transform_indices = @transform_3, window_bounds = array<i64: 2, 128>}]} {
    %c0 = arith.constant 0 : index
    %c0_0 = arith.constant 0 : index
    %0 = vector.load %arg1[%c0, %c0_0] : memref<14x256xbf16, #tpu.memory_space<vmem>>, vector<14x256xbf16>
    %1 = arith.extf %0 : vector<14x256xbf16> to vector<14x256xf32>
    %2 = tpu.iota {dimensions = array<i32: 0>} : vector<2x14xi32>
    %3 = tpu.iota {dimensions = array<i32: 1>} : vector<2x14xi32>
    %c7_i32 = arith.constant 7 : i32
    %4 = vector.broadcast %c7_i32 : i32 to vector<2x14xi32>
    %5 = arith.muli %2, %4 : vector<2x14xi32>
    %6 = arith.cmpi sge, %3, %5 : vector<2x14xi32>
    %c1_i32 = arith.constant 1 : i32
    %7 = vector.broadcast %c1_i32 : i32 to vector<2x14xi32>
    %8 = arith.addi %2, %7 : vector<2x14xi32>
    %c7_i32_1 = arith.constant 7 : i32
    %9 = vector.broadcast %c7_i32_1 : i32 to vector<2x14xi32>
    %10 = arith.muli %8, %9 : vector<2x14xi32>
    %11 = arith.cmpi slt, %3, %10 : vector<2x14xi32>
    %12 = arith.andi %6, %11 : vector<2x14xi1>
    %cst = arith.constant 0.142857149 : f32
    %cst_2 = arith.constant 0.000000e+00 : f32
    %13 = vector.broadcast %cst : f32 to vector<2x14xf32>
    %14 = vector.broadcast %cst_2 : f32 to vector<2x14xf32>
    %15 = arith.select %12, %13, %14 : vector<2x14xi1>, vector<2x14xf32>
    %cst_3 = arith.constant dense<0.000000e+00> : vector<2x256xf32>
    %16 = tpu.matmul %15, %1, %cst_3 {dimension_numbers = #tpu.dot_dimension_numbers<[1], [0], [0], [1], [0, 0, 1, 1], [], []>} : vector<2x14xf32>, vector<14x256xf32>, vector<2x256xf32> -> vector<2x256xf32>
    %17 = arith.truncf %16 : vector<2x256xf32> to vector<2x256xbf16>
    %c0_4 = arith.constant 0 : index
    %c0_5 = arith.constant 0 : index
    %18 = vector.load %arg2[%c0_4, %c0_5] : memref<256x128xbf16, #tpu.memory_space<vmem>>, vector<256x128xbf16>
    %cst_6 = arith.constant dense<0.000000e+00> : vector<2x128xf32>
    %19 = tpu.matmul %17, %18, %cst_6 {dimension_numbers = #tpu.dot_dimension_numbers<[1], [0], [0], [1], [0, 0, 1, 1], [], []>} : vector<2x256xbf16>, vector<256x128xbf16>, vector<2x128xf32> -> vector<2x128xf32>
    %c0_7 = arith.constant 0 : index
    %c0_8 = arith.constant 0 : index
    %20 = vector.load %arg3[%c0_7, %c0_8] : memref<1x128xf32, #tpu.memory_space<vmem>>, vector<1x128xf32>
    %21 = vector.broadcast %20 : vector<1x128xf32> to vector<2x128xf32>
    %22 = arith.addf %19, %21 : vector<2x128xf32>
    %c0_9 = arith.constant 0 : index
    %c0_10 = arith.constant 0 : index
    %23 = vector.load %arg4[%c0_9, %c0_10] : memref<2x128xf32, #tpu.memory_space<vmem>>, vector<2x128xf32>
    tpu.vector_store %arg4[%c0_9, %c0_10], %22 {strides = array<i32>} : memref<2x128xf32, #tpu.memory_space<vmem>>, vector<2x128xf32>,
    return
  }
  func.func @transform_0(%arg0: i32) -> (i32, i32) {
    %c0_i32 = arith.constant 0 : i32
    %c0_i32_0 = arith.constant 0 : i32
    %c0_i32_1 = arith.constant 0 : i32
    return %c0_i32, %c0_i32_0 : i32, i32
  }
  func.func @transform_1(%arg0: i32) -> (i32, i32) {
    %c0_i32 = arith.constant 0 : i32
    %c0_i32_0 = arith.constant 0 : i32
    %c0_i32_1 = arith.constant 0 : i32
    return %c0_i32, %c0_i32_0 : i32, i32
  }
  func.func @transform_2(%arg0: i32) -> (i32, i32) {
    %c0_i32 = arith.constant 0 : i32
    %c0_i32_0 = arith.constant 0 : i32
    %c0_i32_1 = arith.constant 0 : i32
    return %c0_i32, %c0_i32_0 : i32, i32
  }
  func.func @transform_3(%arg0: i32) -> (i32, i32) {
    %c0_i32 = arith.constant 0 : i32
    %c0_i32_0 = arith.constant 0 : i32
    %c0_i32_1 = arith.constant 0 : i32
    return %c0_i32, %c0_i32_0 : i32, i32
  }
}

</mosaic_0001>

<llo_original>
// kernel: resnext_forward.5
$region0: #{resnext_forward.5}
  #allocation0 [shape = 'u32[]', space=smem, size = 0x4, offset = 0x4, fixed_abs, tag = 'smem constant byte address 0x4 - core index']
  #allocation1 [shape = 'u32[72,128]{1,0:T(1,128)}', space=vmem, size = 0x9000, scoped, tag = 'internal scratch']
  %s0 = inlined_call_operand.vmem [shape: bf16[56,3], index: 0, kind: input, shape index: {}]
  %s1 = inlined_call_operand.vmem [shape: bf16[3,3,64], index: 1, kind: input, shape index: {}]
  %s2 = inlined_call_operand.vmem [shape: f32[1,64], index: 2, kind: input, shape index: {}]
  %s3 = inlined_call_operand.vmem [shape: f32[1,64], index: 3, kind: input, shape index: {}]
  %s4 = inlined_call_operand.vmem [shape: bf16[56,64], index: 4, kind: output, shape index: {}]
  %s5 = sld [smem:[#allocation0]]
  $region26: #{resnext_forward.5} parent=0
    _
  %s7 = ssub.s32 1, %s5
  %s8 = scalar_select 0, %s7, %s5
  // Predicated region
  $region2: #{resnext_forward.5} parent=0 // pred_check
    _
  $region3: #{resnext_forward.5} parent=0 // pred_check_branch
    %10 = sbr.rel (0) target = $region5
  $region4: #{resnext_forward.5} parent=0 // pred_region
    _
  $region5: #{resnext_forward.5} parent=0 // pred_fallthru
    _
  // Predicated region
  $region6: #{resnext_forward.5} parent=0 // pred_check
    _
  $region7: #{resnext_forward.5} parent=0 // pred_check_branch
    %12 = sbr.rel (0) target = $region9
  $region8: #{resnext_forward.5} parent=0 // pred_region
    _
  $region9: #{resnext_forward.5} parent=0 // pred_fallthru
    _
  // Predicated region
  $region10: #{resnext_forward.5} parent=0 // pred_check
    _
  $region11: #{resnext_forward.5} parent=0 // pred_check_branch
    %14 = sbr.rel (0) target = $region13
  $region12: #{resnext_forward.5} parent=0 // pred_region
    _
  $region13: #{resnext_forward.5} parent=0 // pred_fallthru
    _
  // Predicated region
  $region14: #{resnext_forward.5} parent=0 // pred_check
    _
  $region15: #{resnext_forward.5} parent=0 // pred_check_branch
    %16 = sbr.rel (0) target = $region17
  $region16: #{resnext_forward.5} parent=0 // pred_region
    _
  $region17: #{resnext_forward.5} parent=0 // pred_fallthru
    _
  %v18 = vld [vmem:[%s0] sm:$0xf]
  %v19 = vld [vmem:[%s0 + $0x4] sm:$0xf]
  %v20 = vld [vmem:[%s0 + $0x8] sm:$0xf]
  %v21 = vld [vmem:[%s0 + $0xc] sm:$0xf]
  %v22 = vld [vmem:[%s0 + $0x10] sm:$0xf]
  %v23 = vld [vmem:[%s0 + $0x14] sm:$0xf]
  %v24 = vld [vmem:[%s0 + $0x18] sm:$0xf]
  %v25 = vunpack.c.l.bf16 %v18
  %v26 = vunpack.c.l.bf16 %v19
  %v27 = vunpack.c.l.bf16 %v20
  %v28 = vunpack.c.l.bf16 %v21
  %v29 = vunpack.c.l.bf16 %v22
  %v30 = vunpack.c.l.bf16 %v23
  %v31 = vunpack.c.l.bf16 %v24
  %vm36 = vcmask 1040384
  %v37 = vrot.slane %v25, 7
  %v38 = vrot.slane %v26, 7
  %v39 = vsel %vm36, %v37, %v38
  %v40 = vrot.slane %v27, 7
  %v41 = vsel %vm36, %v38, %v40
  %v42 = vrot.slane %v28, 7
  %v43 = vsel %vm36, %v40, %v42
  %vm51 = vcmask 1042432
  %v52 = vrot.slane %v28, 5
  %v53 = vrot.slane %v29, 5
  %v54 = vsel %vm51, %v52, %v53
  %v55 = vrot.slane %v30, 5
  %v56 = vsel %vm51, %v53, %v55
  %v57 = vrot.slane %v31, 5
  %v58 = vsel %vm51, %v55, %v57
  %v64 = vsel %vm36, 0.0, %v37
  %vm65 = vcmask 1044480
  %v66 = vsel %vm65, %v43, 0.0
  %vm67 = vcmask 1045504
  %v68 = vsel %vm67, %v66, 0.0
  %vm69 = vcmask 1046528
  %v70 = vsel %vm69, %v68, %v52
  %v71 = vsel %vm51, %v57, 0.0
  %v72 = vpack.c.bf16 %v39, %v64
  %v73 = vpack.c.bf16 %v70, %v41
  %v74 = vpack.c.bf16 %v56, %v54
  %v75 = vpack.c.bf16 %v71, %v58
  %v76 = vld [vmem:[%s1] sm:$0x3]
  %vm77 = vcmask 23552
  %v79 = vsel %vm77, %v72, 0
  %v82 = vsel %vm77, %v73, 0
  %v85 = vsel %vm77, %v74, 0
  %v88 = vsel %vm77, %v75, 0
  %vm90 = vcmask 1041408
  %v91 = vsel %vm36, 4294967295, 65535
  %v92 = vsel %vm90, %v91, 0
  %v94 = vand.u32 %v76, %v92
  %96 = vmatpush.bf16.msra.mxu0 0
  %97 = vmatpush.bf16.msra.mxu0 0
  %98 = vmatpush.bf16.msra.mxu0 0
  %99 = vmatpush.bf16.msra.mxu0 0
  %100 = vmatpush.bf16.msra.mxu0 0
  %101 = vmatpush.bf16.msra.mxu0 0
  %102 = vmatpush.bf16.msra.mxu0 0
  %103 = vmatpush.bf16.msra.mxu0 %v94
  %104 = vmatmul.bf16.gmra.mxu0 %v79
  %v105 = vpop.f32.mrf.mxu0
  %v106 = vadd.f32 0.0, %v105
  %v107 = vpop.f32.mrf.mxu0
  %v108 = vadd.f32 0.0, %v107
  %109 = vmatmul.bf16.gmra.mxu0 %v82
  %v110 = vpop.f32.mrf.mxu0
  %v111 = vadd.f32 0.0, %v110
  %v112 = vpop.f32.mrf.mxu0
  %v113 = vadd.f32 0.0, %v112
  %114 = vmatmul.bf16.gmra.mxu0 %v85
  %v115 = vpop.f32.mrf.mxu0
  %v116 = vadd.f32 0.0, %v115
  %v117 = vpop.f32.mrf.mxu0
  %v118 = vadd.f32 0.0, %v117
  %119 = vmatmul.bf16.gmra.mxu0 %v88
  %v120 = vpop.f32.mrf.mxu0
  %v121 = vadd.f32 0.0, %v120
  %v122 = vpop.f32.mrf.mxu0
  %v123 = vadd.f32 0.0, %v122
  %124 = vdwg.mxu0
  %s125 = scalar_lea.vmem %s1, 2
  %v126 = vld [vmem:[%s125] sm:$0x3]
  %v128 = vand.u32 %v126, %v92
  %130 = vmatpush.bf16.msra.mxu0 0
  %131 = vmatpush.bf16.msra.mxu0 0
  %132 = vmatpush.bf16.msra.mxu0 0
  %133 = vmatpush.bf16.msra.mxu0 0
  %134 = vmatpush.bf16.msra.mxu0 0
  %135 = vmatpush.bf16.msra.mxu0 0
  %136 = vmatpush.bf16.msra.mxu0 0
  %137 = vmatpush.bf16.msra.mxu0 %v128
  %138 = vmatmul.bf16.gmra.mxu0 %v79
  %v139 = vpop.f32.mrf.mxu0
  %v140 = vadd.f32 0.0, %v139
  %v141 = vpop.f32.mrf.mxu0
  %v142 = vadd.f32 0.0, %v141
  %143 = vmatmul.bf16.gmra.mxu0 %v82
  %v144 = vpop.f32.mrf.mxu0
  %v145 = vadd.f32 0.0, %v144
  %v146 = vpop.f32.mrf.mxu0
  %v147 = vadd.f32 0.0, %v146
  %148 = vmatmul.bf16.gmra.mxu0 %v85
  %v149 = vpop.f32.mrf.mxu0
  %v150 = vadd.f32 0.0, %v149
  %v151 = vpop.f32.mrf.mxu0
  %v152 = vadd.f32 0.0, %v151
  %153 = vmatmul.bf16.gmra.mxu0 %v88
  %v154 = vpop.f32.mrf.mxu0
  %v155 = vadd.f32 0.0, %v154
  %v156 = vpop.f32.mrf.mxu0
  %v157 = vadd.f32 0.0, %v156
  %158 = vdwg.mxu0
  %s159 = scalar_lea.vmem %s1, 4
  %v160 = vld [vmem:[%s159] sm:$0x3]
  %v162 = vand.u32 %v160, %v92
  %164 = vmatpush.bf16.msra.mxu0 0
  %165 = vmatpush.bf16.msra.mxu0 0
  %166 = vmatpush.bf16.msra.mxu0 0
  %167 = vmatpush.bf16.msra.mxu0 0
  %168 = vmatpush.bf16.msra.mxu0 0
  %169 = vmatpush.bf16.msra.mxu0 0
  %170 = vmatpush.bf16.msra.mxu0 0
  %171 = vmatpush.bf16.msra.mxu0 %v162
  %172 = vmatmul.bf16.gmra.mxu0 %v79
  %v173 = vpop.f32.mrf.mxu0
  %v174 = vadd.f32 0.0, %v173
  %v175 = vpop.f32.mrf.mxu0
  %v176 = vadd.f32 0.0, %v175
  %177 = vmatmul.bf16.gmra.mxu0 %v82
  %v178 = vpop.f32.mrf.mxu0
  %v179 = vadd.f32 0.0, %v178
  %v180 = vpop.f32.mrf.mxu0
  %v181 = vadd.f32 0.0, %v180
  %182 = vmatmul.bf16.gmra.mxu0 %v85
  %v183 = vpop.f32.mrf.mxu0
  %v184 = vadd.f32 0.0, %v183
  %v185 = vpop.f32.mrf.mxu0
  %v186 = vadd.f32 0.0, %v185
  %187 = vmatmul.bf16.gmra.mxu0 %v88
  %v188 = vpop.f32.mrf.mxu0
  %v189 = vadd.f32 0.0, %v188
  %v190 = vpop.f32.mrf.mxu0
  %v191 = vadd.f32 0.0, %v190
  %192 = vdwg.mxu0
  %v197 = vrot.slane %v140, 1
  %v198 = vrot.slane %v142, 1
  %v199 = vsel %vm69, %v197, %v198
  %v200 = vrot.slane %v145, 1
  %v201 = vsel %vm69, %v198, %v200
  %v202 = vrot.slane %v147, 1
  %v203 = vsel %vm69, %v200, %v202
  %v208 = vadd.f32 %v106, %v199
  %v209 = vadd.f32 %v108, %v201
  %v210 = vadd.f32 %v111, %v203
  %v211 = vadd.f32 %v113, %v202
  %v216 = vrot.slane %v174, 2
  %v217 = vrot.slane %v176, 2
  %v218 = vsel %vm67, %v216, %v217
  %v219 = vrot.slane %v179, 2
  %v220 = vsel %vm67, %v217, %v219
  %v221 = vrot.slane %v181, 2
  %v222 = vsel %vm67, %v219, %v221
  %v227 = vadd.f32 %v208, %v218
  %v228 = vadd.f32 %v209, %v220
  %v229 = vadd.f32 %v210, %v222
  %v230 = vadd.f32 %v211, %v221
  %v235 = vrot.slane %v150, 1
  %v236 = vsel %vm69, %v202, %v235
  %v237 = vrot.slane %v152, 1
  %v238 = vsel %vm69, %v235, %v237
  %v239 = vrot.slane %v155, 1
  %v240 = vsel %vm69, %v237, %v239
  %v241 = vrot.slane %v157, 1
  %v242 = vsel %vm69, %v239, %v241
  %v248 = vadd.f32 %v113, %v236
  %v249 = vadd.f32 %v116, %v238
  %v250 = vadd.f32 %v118, %v240
  %v251 = vadd.f32 %v121, %v242
  %v252 = vadd.f32 %v123, %v241
  %v257 = vrot.slane %v184, 2
  %v258 = vrot.slane %v186, 2
  %v259 = vsel %vm67, %v257, %v258
  %v260 = vrot.slane %v189, 2
  %v261 = vsel %vm67, %v258, %v260
  %v262 = vrot.slane %v191, 2
  %v263 = vsel %vm67, %v260, %v262
  %v269 = vadd.f32 %v248, %v257
  %v270 = vadd.f32 %v249, %v259
  %v271 = vadd.f32 %v250, %v261
  %v272 = vadd.f32 %v251, %v263
  %v273 = vadd.f32 %v252, %v262
  %v279 = vrot.slane %v269, 2
  %v280 = vrot.slane %v270, 2
  %v281 = vsel %vm67, %v279, %v280
  %v282 = vrot.slane %v271, 2
  %v283 = vsel %vm67, %v280, %v282
  %v284 = vrot.slane %v272, 2
  %v285 = vsel %vm67, %v282, %v284
  %v286 = vrot.slane %v273, 2
  %v287 = vsel %vm67, %v284, %v286
  %vm292 = vcmask 1043456
  %v293 = vsel %vm292, %v230, %v281
  %v294 = vld [vmem:[%s2] sm:$0x1]
  %v295 = vld [vmem:[%s3] sm:$0x1]
  %vm296 = vcmask 523264
  %v297 = vsel %vm296, %v227, 0.0
  %v298 = vsel %vm296, %v228, 0.0
  %v299 = vadd.f32 %v297, %v298
  %v300 = vsel %vm296, %v229, 0.0
  %v301 = vadd.f32 %v299, %v300
  %v302 = vsel %vm296, %v293, 0.0
  %v303 = vadd.f32 %v301, %v302
  %v304 = vsel %vm296, %v283, 0.0
  %v305 = vadd.f32 %v303, %v304
  %v306 = vsel %vm296, %v285, 0.0
  %v307 = vadd.f32 %v305, %v306
  %v308 = vsel %vm296, %v287, 0.0
  %v309 = vadd.f32 %v307, %v308
  %v310 = vrot.slane %v309, 4
  %v311 = vadd.f32 %v309, %v310
  %v312 = vrot.slane %v311, 2
  %v313 = vadd.f32 %v311, %v312
  %v314 = vrot.slane %v313, 1
  %v315 = vadd.f32 %v313, %v314
  %v316 = vrcp.pop 56.0
  %v317 = vmul.f32 56.0, %v316
  %v318 = vsub.f32 1.0, %v317
  %v319 = vmul.f32 %v316, %v318
  %v320 = vadd.f32 %v316, %v319
  %vm321 = vweird.f32 %v316
  %v322 = vsel %vm321, %v316, %v320
  %v323 = vmul.f32 %v315, %v322
  %v324 = vsub.f32 %v227, %v323
  %v325 = vsub.f32 %v228, %v323
  %v326 = vsub.f32 %v229, %v323
  %v327 = vsub.f32 %v293, %v323
  %v328 = vsub.f32 %v283, %v323
  %v329 = vsub.f32 %v285, %v323
  %v330 = vsub.f32 %v287, %v323
  %v331 = vmul.f32 %v324, %v324
  %v332 = vmul.f32 %v325, %v325
  %v333 = vmul.f32 %v326, %v326
  %v334 = vmul.f32 %v327, %v327
  %v335 = vmul.f32 %v328, %v328
  %v336 = vmul.f32 %v329, %v329
  %v337 = vmul.f32 %v330, %v330
  %v338 = vsel %vm296, %v331, 0.0
  %v339 = vsel %vm296, %v332, 0.0
  %v340 = vadd.f32 %v338, %v339
  %v341 = vsel %vm296, %v333, 0.0
  %v342 = vadd.f32 %v340, %v341
  %v343 = vsel %vm296, %v334, 0.0
  %v344 = vadd.f32 %v342, %v343
  %v345 = vsel %vm296, %v335, 0.0
  %v346 = vadd.f32 %v344, %v345
  %v347 = vsel %vm296, %v336, 0.0
  %v348 = vadd.f32 %v346, %v347
  %v349 = vsel %vm296, %v337, 0.0
  %v350 = vadd.f32 %v348, %v349
  %v351 = vrot.slane %v350, 4
  %v352 = vadd.f32 %v350, %v351
  %v353 = vrot.slane %v352, 2
  %v354 = vadd.f32 %v352, %v353
  %v355 = vrot.slane %v354, 1
  %v356 = vadd.f32 %v354, %v355
  %v357 = vmul.f32 %v356, %v322
  %v358 = vadd.f32 %v357, 1e-05
  %v359 = vrsqrt.pop %v358
  %v360 = vmul.f32 %v359, %v358
  %v361 = vmul.f32 %v360, %v359
  %v362 = vmul.f32 0.5, %v361
  %v363 = vsub.f32 1.5, %v362
  %v364 = vmul.f32 %v359, %v363
  %vm365 = vweird.f32 %v358
  %vm366 = vweird.f32 %v359
  %vm367 = vmor %vm365, %vm366
  %v368 = vsel %vm367, %v359, %v364
  %v369 = vmul.f32 %v324, %v368
  %v370 = vmul.f32 %v325, %v368
  %v371 = vmul.f32 %v326, %v368
  %v372 = vmul.f32 %v327, %v368
  %v373 = vmul.f32 %v328, %v368
  %v374 = vmul.f32 %v329, %v368
  %v375 = vmul.f32 %v330, %v368
  %v377 = vperm.slane %v294, 0
  %v379 = vmul.f32 %v369, %v377
  %v380 = vmul.f32 %v370, %v377
  %v381 = vmul.f32 %v371, %v377
  %v382 = vmul.f32 %v372, %v377
  %v383 = vmul.f32 %v373, %v377
  %v384 = vmul.f32 %v374, %v377
  %v385 = vmul.f32 %v375, %v377
  %v387 = vperm.slane %v295, 0
  %v389 = vadd.f32 %v379, %v387
  %v390 = vadd.f32 %v380, %v387
  %v391 = vadd.f32 %v381, %v387
  %v392 = vadd.f32 %v382, %v387
  %v393 = vadd.f32 %v383, %v387
  %v394 = vadd.f32 %v384, %v387
  %v395 = vadd.f32 %v385, %v387
  %v396 = vmax.f32 %v389, 0.0
  %v397 = vmax.f32 %v390, 0.0
  %v398 = vmax.f32 %v391, 0.0
  %v399 = vmax.f32 %v392, 0.0
  %v400 = vmax.f32 %v393, 0.0
  %v401 = vmax.f32 %v394, 0.0
  %v402 = vmax.f32 %v395, 0.0
  %v403 = vpack.c.bf16 %v396, %v396
  %v404 = vpack.c.bf16 %v397, %v397
  %v405 = vpack.c.bf16 %v398, %v398
  %v406 = vpack.c.bf16 %v399, %v399
  %v407 = vpack.c.bf16 %v400, %v400
  %v408 = vpack.c.bf16 %v401, %v401
  %v409 = vpack.c.bf16 %v402, %v402
  %vm410 = vcmask 519168
  %411 = vst.msk [vmem:[%s4] sm:$0xf] %vm410, %v403
  %412 = vst.msk [vmem:[%s4 + $0x4] sm:$0xf] %vm410, %v404
  %413 = vst.msk [vmem:[%s4 + $0x8] sm:$0xf] %vm410, %v405
  %414 = vst.msk [vmem:[%s4 + $0xc] sm:$0xf] %vm410, %v406
  %415 = vst.msk [vmem:[%s4 + $0x10] sm:$0xf] %vm410, %v407
  %416 = vst.msk [vmem:[%s4 + $0x14] sm:$0xf] %vm410, %v408
  %417 = vst.msk [vmem:[%s4 + $0x18] sm:$0xf] %vm410, %v409
  // Predicated region
  $region18: #{resnext_forward.5} parent=0 // pred_check
    _
  $region19: #{resnext_forward.5} parent=0 // pred_check_branch
    %419 = sbr.rel (0) target = $region21
  $region20: #{resnext_forward.5} parent=0 // pred_region
    _
  $region21: #{resnext_forward.5} parent=0 // pred_fallthru
    _
  // Predicated region
  $region22: #{resnext_forward.5} parent=0 // pred_check
    _
  $region23: #{resnext_forward.5} parent=0 // pred_check_branch
    %421 = sbr.rel (0) target = $region25
  $region24: #{resnext_forward.5} parent=0 // pred_region
    _
  $region25: #{resnext_forward.5} parent=0 // pred_fallthru
    _

// kernel: resnext_forward.6
$region0: #{resnext_forward.6}
  #allocation0 [shape = 'u32[]', space=smem, size = 0x4, offset = 0x4, fixed_abs, tag = 'smem constant byte address 0x4 - core index']
  #allocation1 [shape = 'u32[72,128]{1,0:T(1,128)}', space=vmem, size = 0x9000, scoped, tag = 'internal scratch']
  %s0 = inlined_call_operand.vmem [shape: bf16[56,64], index: 0, kind: input, shape index: {}]
  %s1 = inlined_call_operand.vmem [shape: bf16[64,8], index: 1, kind: input, shape index: {}]
  %s2 = inlined_call_operand.vmem [shape: f32[1,8], index: 2, kind: input, shape index: {}]
  %s3 = inlined_call_operand.vmem [shape: f32[1,8], index: 3, kind: input, shape index: {}]
  %s4 = inlined_call_operand.vmem [shape: bf16[6,4,4], index: 4, kind: input, shape index: {}]
  %s5 = inlined_call_operand.vmem [shape: f32[1,8], index: 5, kind: input, shape index: {}]
  %s6 = inlined_call_operand.vmem [shape: f32[1,8], index: 6, kind: input, shape index: {}]
  %s7 = inlined_call_operand.vmem [shape: bf16[8,64], index: 7, kind: input, shape index: {}]
  %s8 = inlined_call_operand.vmem [shape: f32[1,64], index: 8, kind: input, shape index: {}]
  %s9 = inlined_call_operand.vmem [shape: f32[1,64], index: 9, kind: input, shape index: {}]
  %s10 = inlined_call_operand.vmem [shape: bf16[56,64], index: 10, kind: output, shape index: {}]
  %s11 = sld [smem:[#allocation0]]
  $region50: #{resnext_forward.6} parent=0
    _
  %s13 = ssub.s32 1, %s11
  %s14 = scalar_select 0, %s13, %s11
  // Predicated region
  $region2: #{resnext_forward.6} parent=0 // pred_check
    _
  $region3: #{resnext_forward.6} parent=0 // pred_check_branch
    %16 = sbr.rel (0) target = $region5
  $region4: #{resnext_forward.6} parent=0 // pred_region
    _
  $region5: #{resnext_forward.6} parent=0 // pred_fallthru
    _
  // Predicated region
  $region6: #{resnext_forward.6} parent=0 // pred_check
    _
  $region7: #{resnext_forward.6} parent=0 // pred_check_branch
    %18 = sbr.rel (0) target = $region9
  $region8: #{resnext_forward.6} parent=0 // pred_region
    _
  $region9: #{resnext_forward.6} parent=0 // pred_fallthru
    _
  // Predicated region
  $region10: #{resnext_forward.6} parent=0 // pred_check
    _
  $region11: #{resnext_forward.6} parent=0 // pred_check_branch
    %20 = sbr.rel (0) target = $region13
  $region12: #{resnext_forward.6} parent=0 // pred_region
    _
  $region13: #{resnext_forward.6} parent=0 // pred_fallthru
    _
  // Predicated region
  $region14: #{resnext_forward.6} parent=0 // pred_check
    _
  $region15: #{resnext_forward.6} parent=0 // pred_check_branch
    %22 = sbr.rel (0) target = $region17
  $region16: #{resnext_forward.6} parent=0 // pred_region
    _
  $region17: #{resnext_forward.6} parent=0 // pred_fallthru
    _
  // Predicated region
  $region18: #{resnext_forward.6} parent=0 // pred_check
    _
  $region19: #{resnext_forward.6} parent=0 // pred_check_branch
    %24 = sbr.rel (0) target = $region21
  $region20: #{resnext_forward.6} parent=0 // pred_region
    _
  $region21: #{resnext_forward.6} parent=0 // pred_fallthru
    _
  // Predicated region
  $region22: #{resnext_forward.6} parent=0 // pred_check
    _
  $region23: #{resnext_forward.6} parent=0 // pred_check_branch
    %26 = sbr.rel (0) target = $region25
  $region24: #{resnext_forward.6} parent=0 // pred_region
    _
  $region25: #{resnext_forward.6} parent=0 // pred_fallthru
    _
  // Predicated region
  $region26: #{resnext_forward.6} parent=0 // pred_check
    _
  $region27: #{resnext_forward.6} parent=0 // pred_check_branch
    %28 = sbr.rel (0) target = $region29
  $region28: #{resnext_forward.6} parent=0 // pred_region
    _
  $region29: #{resnext_forward.6} parent=0 // pred_fallthru
    _
  // Predicated region
  $region30: #{resnext_forward.6} parent=0 // pred_check
    _
  $region31: #{resnext_forward.6} parent=0 // pred_check_branch
    %30 = sbr.rel (0) target = $region33
  $region32: #{resnext_forward.6} parent=0 // pred_region
    _
  $region33: #{resnext_forward.6} parent=0 // pred_fallthru
    _
  // Predicated region
  $region34: #{resnext_forward.6} parent=0 // pred_check
    _
  $region35: #{resnext_forward.6} parent=0 // pred_check_branch
    %32 = sbr.rel (0) target = $region37
  $region36: #{resnext_forward.6} parent=0 // pred_region
    _
  $region37: #{resnext_forward.6} parent=0 // pred_fallthru
    _
  // Predicated region
  $region38: #{resnext_forward.6} parent=0 // pred_check
    _
  $region39: #{resnext_forward.6} parent=0 // pred_check_branch
    %34 = sbr.rel (0) target = $region41
  $region40: #{resnext_forward.6} parent=0 // pred_region
    _
  $region41: #{resnext_forward.6} parent=0 // pred_fallthru
    _
  %v36 = vld [vmem:[%s0] sm:$0xf]
  %v37 = vld [vmem:[%s0 + $0x4] sm:$0xf]
  %v38 = vld [vmem:[%s0 + $0x8] sm:$0xf]
  %v39 = vld [vmem:[%s0 + $0xc] sm:$0xf]
  %v40 = vld [vmem:[%s0 + $0x10] sm:$0xf]
  %v41 = vld [vmem:[%s0 + $0x14] sm:$0xf]
  %v42 = vld [vmem:[%s0 + $0x18] sm:$0xf]
  %v43 = vld [vmem:[%s1] sm:$0xf]
  %v44 = vld [vmem:[%s1 + $0x4] sm:$0xf]
  %v45 = vld [vmem:[%s1 + $0x8] sm:$0xf]
  %v46 = vld [vmem:[%s1 + $0xc] sm:$0xf]
  %v47 = vld [vmem:[%s1 + $0x10] sm:$0xf]
  %v48 = vld [vmem:[%s1 + $0x14] sm:$0xf]
  %v49 = vld [vmem:[%s1 + $0x18] sm:$0xf]
  %v50 = vld [vmem:[%s1 + $0x1c] sm:$0xf]
  %v58 = vunpack.c.l.b16 %v36
  %v59 = vunpack.c.l.b16 %v37
  %v60 = vunpack.c.l.b16 %v38
  %v61 = vunpack.c.l.b16 %v39
  %v62 = vunpack.c.l.b16 %v40
  %v63 = vunpack.c.l.b16 %v41
  %v64 = vunpack.c.l.b16 %v42
  %v65 = vpack.c.b16 %v59, %v58
  %v66 = vpack.c.b16 %v61, %v60
  %v67 = vpack.c.b16 %v63, %v62
  %v68 = vpack.c.b16 %v64, %v64
  %v77 = vunpack.c.l.b16 %v43
  %v78 = vunpack.c.l.b16 %v44
  %v79 = vunpack.c.l.b16 %v45
  %v80 = vunpack.c.l.b16 %v46
  %v81 = vunpack.c.l.b16 %v47
  %v82 = vunpack.c.l.b16 %v48
  %v83 = vunpack.c.l.b16 %v49
  %v84 = vunpack.c.l.b16 %v50
  %v85 = vpack.c.b16 %v78, %v77
  %v86 = vpack.c.b16 %v80, %v79
  %v87 = vpack.c.b16 %v82, %v81
  %v88 = vpack.c.b16 %v84, %v83
  %vm93 = vcmask 523264
  %v95 = vsel %vm93, %v65, 0
  %v98 = vsel %vm93, %v66, 0
  %v101 = vsel %vm93, %v67, 0
  %v104 = vsel %vm93, %v68, 0
  %106 = vmatpush.bf16.msra.mxu0 0
  %107 = vmatpush.bf16.msra.mxu0 0
  %108 = vmatpush.bf16.msra.mxu0 0
  %109 = vmatpush.bf16.msra.mxu0 0
  %110 = vmatpush.bf16.msra.mxu0 %v88
  %111 = vmatpush.bf16.msra.mxu0 %v87
  %112 = vmatpush.bf16.msra.mxu0 %v86
  %113 = vmatpush.bf16.msra.mxu0 %v85
  %114 = vmatmul.bf16.gmra.mxu0 %v95
  %v115 = vpop.f32.mrf.mxu0
  %v116 = vadd.f32 0.0, %v115
  %v117 = vpop.f32.mrf.mxu0
  %v118 = vadd.f32 0.0, %v117
  %119 = vmatmul.bf16.gmra.mxu0 %v98
  %v120 = vpop.f32.mrf.mxu0
  %v121 = vadd.f32 0.0, %v120
  %v122 = vpop.f32.mrf.mxu0
  %v123 = vadd.f32 0.0, %v122
  %124 = vmatmul.bf16.gmra.mxu0 %v101
  %v125 = vpop.f32.mrf.mxu0
  %v126 = vadd.f32 0.0, %v125
  %v127 = vpop.f32.mrf.mxu0
  %v128 = vadd.f32 0.0, %v127
  %129 = vmatmul.bf16.gmra.mxu0 %v104
  %v130 = vpop.f32.mrf.mxu0
  %v131 = vadd.f32 0.0, %v130
  %v132 = vpop.f32.mrf.mxu0
  %133 = vdwg.mxu0
  %v134 = vld [vmem:[%s2] sm:$0x1]
  %v135 = vld [vmem:[%s3] sm:$0x1]
  %vm136 = vcmask 64512
  %v137 = vsel %vm136, %v116, 0.0
  %v138 = vsel %vm136, %v118, 0.0
  %v139 = vadd.f32 %v137, %v138
  %v140 = vsel %vm136, %v121, 0.0
  %v141 = vadd.f32 %v139, %v140
  %v142 = vsel %vm136, %v123, 0.0
  %v143 = vadd.f32 %v141, %v142
  %v144 = vsel %vm136, %v126, 0.0
  %v145 = vadd.f32 %v143, %v144
  %v146 = vsel %vm136, %v128, 0.0
  %v147 = vadd.f32 %v145, %v146
  %v148 = vsel %vm136, %v131, 0.0
  %v149 = vadd.f32 %v147, %v148
  %v150 = vrot.slane %v149, 4
  %v151 = vadd.f32 %v149, %v150
  %v152 = vrot.slane %v151, 2
  %v153 = vadd.f32 %v151, %v152
  %v154 = vrot.slane %v153, 1
  %v155 = vadd.f32 %v153, %v154
  %v156 = vrcp.pop 56.0
  %v157 = vmul.f32 56.0, %v156
  %v158 = vsub.f32 1.0, %v157
  %v159 = vmul.f32 %v156, %v158
  %v160 = vadd.f32 %v156, %v159
  %vm161 = vweird.f32 %v156
  %v162 = vsel %vm161, %v156, %v160
  %v163 = vmul.f32 %v155, %v162
  %v164 = vsub.f32 %v116, %v163
  %v165 = vsub.f32 %v118, %v163
  %v166 = vsub.f32 %v121, %v163
  %v167 = vsub.f32 %v123, %v163
  %v168 = vsub.f32 %v126, %v163
  %v169 = vsub.f32 %v128, %v163
  %v170 = vsub.f32 %v131, %v163
  %v171 = vmul.f32 %v164, %v164
  %v172 = vmul.f32 %v165, %v165
  %v173 = vmul.f32 %v166, %v166
  %v174 = vmul.f32 %v167, %v167
  %v175 = vmul.f32 %v168, %v168
  %v176 = vmul.f32 %v169, %v169
  %v177 = vmul.f32 %v170, %v170
  %v178 = vsel %vm136, %v171, 0.0
  %v179 = vsel %vm136, %v172, 0.0
  %v180 = vadd.f32 %v178, %v179
  %v181 = vsel %vm136, %v173, 0.0
  %v182 = vadd.f32 %v180, %v181
  %v183 = vsel %vm136, %v174, 0.0
  %v184 = vadd.f32 %v182, %v183
  %v185 = vsel %vm136, %v175, 0.0
  %v186 = vadd.f32 %v184, %v185
  %v187 = vsel %vm136, %v176, 0.0
  %v188 = vadd.f32 %v186, %v187
  %v189 = vsel %vm136, %v177, 0.0
  %v190 = vadd.f32 %v188, %v189
  %v191 = vrot.slane %v190, 4
  %v192 = vadd.f32 %v190, %v191
  %v193 = vrot.slane %v192, 2
  %v194 = vadd.f32 %v192, %v193
  %v195 = vrot.slane %v194, 1
  %v196 = vadd.f32 %v194, %v195
  %v197 = vmul.f32 %v196, %v162
  %v198 = vadd.f32 %v197, 1e-05
  %v199 = vrsqrt.pop %v198
  %v200 = vmul.f32 %v199, %v198
  %v201 = vmul.f32 %v200, %v199
  %v202 = vmul.f32 0.5, %v201
  %v203 = vsub.f32 1.5, %v202
  %v204 = vmul.f32 %v199, %v203
  %vm205 = vweird.f32 %v198
  %vm206 = vweird.f32 %v199
  %vm207 = vmor %vm205, %vm206
  %v208 = vsel %vm207, %v199, %v204
  %v209 = vmul.f32 %v164, %v208
  %v210 = vmul.f32 %v165, %v208
  %v211 = vmul.f32 %v166, %v208
  %v212 = vmul.f32 %v167, %v208
  %v213 = vmul.f32 %v168, %v208
  %v214 = vmul.f32 %v169, %v208
  %v215 = vmul.f32 %v170, %v208
  %v217 = vperm.slane %v134, 0
  %v219 = vmul.f32 %v209, %v217
  %v220 = vmul.f32 %v210, %v217
  %v221 = vmul.f32 %v211, %v217
  %v222 = vmul.f32 %v212, %v217
  %v223 = vmul.f32 %v213, %v217
  %v224 = vmul.f32 %v214, %v217
  %v225 = vmul.f32 %v215, %v217
  %v227 = vperm.slane %v135, 0
  %v229 = vadd.f32 %v219, %v227
  %v230 = vadd.f32 %v220, %v227
  %v231 = vadd.f32 %v221, %v227
  %v232 = vadd.f32 %v222, %v227
  %v233 = vadd.f32 %v223, %v227
  %v234 = vadd.f32 %v224, %v227
  %v235 = vadd.f32 %v225, %v227
  %v236 = vmax.f32 %v229, 0.0
  %v237 = vmax.f32 %v230, 0.0
  %v238 = vmax.f32 %v231, 0.0
  %v239 = vmax.f32 %v232, 0.0
  %v240 = vmax.f32 %v233, 0.0
  %v241 = vmax.f32 %v234, 0.0
  %v242 = vmax.f32 %v235, 0.0
  %vm247 = vcmask 1040384
  %v248 = vrot.slane %v236, 7
  %v249 = vrot.slane %v237, 7
  %v250 = vsel %vm247, %v248, %v249
  %v251 = vrot.slane %v238, 7
  %v252 = vsel %vm247, %v249, %v251
  %v253 = vrot.slane %v239, 7
  %v254 = vsel %vm247, %v251, %v253
  %vm262 = vcmask 1042432
  %v263 = vrot.slane %v239, 5
  %v264 = vrot.slane %v240, 5
  %v265 = vsel %vm262, %v263, %v264
  %v266 = vrot.slane %v241, 5
  %v267 = vsel %vm262, %v264, %v266
  %v268 = vrot.slane %v242, 5
  %v269 = vsel %vm262, %v266, %v268
  %v275 = vsel %vm247, 0.0, %v248
  %vm276 = vcmask 1044480
  %v277 = vsel %vm276, %v254, 0.0
  %vm278 = vcmask 1045504
  %v279 = vsel %vm278, %v277, 0.0
  %vm280 = vcmask 1046528
  %v281 = vsel %vm280, %v279, %v263
  %v282 = vsel %vm262, %v268, 0.0
  %v283 = vpack.c.bf16 %v275, %v275
  %v284 = vpack.c.bf16 %v250, %v250
  %v285 = vpack.c.bf16 %v252, %v252
  %v286 = vpack.c.bf16 %v281, %v281
  %v287 = vpack.c.bf16 %v265, %v265
  %v288 = vpack.c.bf16 %v267, %v267
  %v289 = vpack.c.bf16 %v269, %v269
  %v290 = vpack.c.bf16 %v282, %v282
  %v291 = vld [vmem:[%s4] sm:$0x3]
  %v300 = vunpack.c.l.b16 %v283
  %v301 = vunpack.c.l.b16 %v284
  %v302 = vunpack.c.l.b16 %v285
  %v303 = vunpack.c.l.b16 %v286
  %v304 = vunpack.c.l.b16 %v287
  %v305 = vunpack.c.l.b16 %v288
  %v306 = vunpack.c.l.b16 %v289
  %v307 = vunpack.c.l.b16 %v290
  %v308 = vpack.c.b16 %v301, %v300
  %v309 = vpack.c.b16 %v303, %v302
  %v310 = vpack.c.b16 %v305, %v304
  %v311 = vpack.c.b16 %v307, %v306
  %vm312 = vcmask 31744
  %v314 = vsel %vm312, %v308, 0
  %v317 = vsel %vm312, %v309, 0
  %v320 = vsel %vm312, %v310, 0
  %v323 = vsel %vm312, %v311, 0
  %vm325 = vcmask 1041408
  %v327 = vsel %vm325, %v291, 0
  %329 = vmatpush.bf16.msra.mxu0 0
  %330 = vmatpush.bf16.msra.mxu0 0
  %331 = vmatpush.bf16.msra.mxu0 0
  %332 = vmatpush.bf16.msra.mxu0 0
  %333 = vmatpush.bf16.msra.mxu0 0
  %334 = vmatpush.bf16.msra.mxu0 0
  %335 = vmatpush.bf16.msra.mxu0 0
  %336 = vmatpush.bf16.msra.mxu0 %v327
  %337 = vmatmul.bf16.gmra.mxu0 %v314
  %v338 = vpop.f32.mrf.mxu0
  %v339 = vadd.f32 0.0, %v338
  %v340 = vpop.f32.mrf.mxu0
  %v341 = vadd.f32 0.0, %v340
  %342 = vmatmul.bf16.gmra.mxu0 %v317
  %v343 = vpop.f32.mrf.mxu0
  %v344 = vadd.f32 0.0, %v343
  %v345 = vpop.f32.mrf.mxu0
  %v346 = vadd.f32 0.0, %v345
  %347 = vmatmul.bf16.gmra.mxu0 %v320
  %v348 = vpop.f32.mrf.mxu0
  %v349 = vadd.f32 0.0, %v348
  %v350 = vpop.f32.mrf.mxu0
  %v351 = vadd.f32 0.0, %v350
  %352 = vmatmul.bf16.gmra.mxu0 %v323
  %v353 = vpop.f32.mrf.mxu0
  %v354 = vadd.f32 0.0, %v353
  %v355 = vpop.f32.mrf.mxu0
  %v356 = vadd.f32 0.0, %v355
  %357 = vdwg.mxu0
  %s358 = scalar_lea.vmem %s4, 2
  %v359 = vld [vmem:[%s358] sm:$0x3]
  %v361 = vsel %vm325, %v359, 0
  %363 = vmatpush.bf16.msra.mxu0 0
  %364 = vmatpush.bf16.msra.mxu0 0
  %365 = vmatpush.bf16.msra.mxu0 0
  %366 = vmatpush.bf16.msra.mxu0 0
  %367 = vmatpush.bf16.msra.mxu0 0
  %368 = vmatpush.bf16.msra.mxu0 0
  %369 = vmatpush.bf16.msra.mxu0 0
  %370 = vmatpush.bf16.msra.mxu0 %v361
  %371 = vmatmul.bf16.gmra.mxu0 %v314
  %v372 = vpop.f32.mrf.mxu0
  %v373 = vadd.f32 0.0, %v372
  %v374 = vpop.f32.mrf.mxu0
  %v375 = vadd.f32 0.0, %v374
  %376 = vmatmul.bf16.gmra.mxu0 %v317
  %v377 = vpop.f32.mrf.mxu0
  %v378 = vadd.f32 0.0, %v377
  %v379 = vpop.f32.mrf.mxu0
  %v380 = vadd.f32 0.0, %v379
  %381 = vmatmul.bf16.gmra.mxu0 %v320
  %v382 = vpop.f32.mrf.mxu0
  %v383 = vadd.f32 0.0, %v382
  %v384 = vpop.f32.mrf.mxu0
  %v385 = vadd.f32 0.0, %v384
  %386 = vmatmul.bf16.gmra.mxu0 %v323
  %v387 = vpop.f32.mrf.mxu0
  %v388 = vadd.f32 0.0, %v387
  %v389 = vpop.f32.mrf.mxu0
  %v390 = vadd.f32 0.0, %v389
  %391 = vdwg.mxu0
  %s392 = scalar_lea.vmem %s4, 4
  %v393 = vld [vmem:[%s392] sm:$0x3]
  %v395 = vsel %vm325, %v393, 0
  %397 = vmatpush.bf16.msra.mxu0 0
  %398 = vmatpush.bf16.msra.mxu0 0
  %399 = vmatpush.bf16.msra.mxu0 0
  %400 = vmatpush.bf16.msra.mxu0 0
  %401 = vmatpush.bf16.msra.mxu0 0
  %402 = vmatpush.bf16.msra.mxu0 0
  %403 = vmatpush.bf16.msra.mxu0 0
  %404 = vmatpush.bf16.msra.mxu0 %v395
  %405 = vmatmul.bf16.gmra.mxu0 %v314
  %v406 = vpop.f32.mrf.mxu0
  %v407 = vadd.f32 0.0, %v406
  %v408 = vpop.f32.mrf.mxu0
  %v409 = vadd.f32 0.0, %v408
  %410 = vmatmul.bf16.gmra.mxu0 %v317
  %v411 = vpop.f32.mrf.mxu0
  %v412 = vadd.f32 0.0, %v411
  %v413 = vpop.f32.mrf.mxu0
  %v414 = vadd.f32 0.0, %v413
  %415 = vmatmul.bf16.gmra.mxu0 %v320
  %v416 = vpop.f32.mrf.mxu0
  %v417 = vadd.f32 0.0, %v416
  %v418 = vpop.f32.mrf.mxu0
  %v419 = vadd.f32 0.0, %v418
  %420 = vmatmul.bf16.gmra.mxu0 %v323
  %v421 = vpop.f32.mrf.mxu0
  %v422 = vadd.f32 0.0, %v421
  %v423 = vpop.f32.mrf.mxu0
  %v424 = vadd.f32 0.0, %v423
  %425 = vdwg.mxu0
  %v430 = vrot.slane %v373, 1
  %v431 = vrot.slane %v375, 1
  %v432 = vsel %vm280, %v430, %v431
  %v433 = vrot.slane %v378, 1
  %v434 = vsel %vm280, %v431, %v433
  %v435 = vrot.slane %v380, 1
  %v436 = vsel %vm280, %v433, %v435
  %v441 = vadd.f32 %v339, %v432
  %v442 = vadd.f32 %v341, %v434
  %v443 = vadd.f32 %v344, %v436
  %v444 = vadd.f32 %v346, %v435
  %v449 = vrot.slane %v407, 2
  %v450 = vrot.slane %v409, 2
  %v451 = vsel %vm278, %v449, %v450
  %v452 = vrot.slane %v412, 2
  %v453 = vsel %vm278, %v450, %v452
  %v454 = vrot.slane %v414, 2
  %v455 = vsel %vm278, %v452, %v454
  %v460 = vadd.f32 %v441, %v451
  %v461 = vadd.f32 %v442, %v453
  %v462 = vadd.f32 %v443, %v455
  %v463 = vadd.f32 %v444, %v454
  %v468 = vrot.slane %v383, 1
  %v469 = vsel %vm280, %v435, %v468
  %v470 = vrot.slane %v385, 1
  %v471 = vsel %vm280, %v468, %v470
  %v472 = vrot.slane %v388, 1
  %v473 = vsel %vm280, %v470, %v472
  %v474 = vrot.slane %v390, 1
  %v475 = vsel %vm280, %v472, %v474
  %v481 = vadd.f32 %v346, %v469
  %v482 = vadd.f32 %v349, %v471
  %v483 = vadd.f32 %v351, %v473
  %v484 = vadd.f32 %v354, %v475
  %v485 = vadd.f32 %v356, %v474
  %v490 = vrot.slane %v417, 2
  %v491 = vrot.slane %v419, 2
  %v492 = vsel %vm278, %v490, %v491
  %v493 = vrot.slane %v422, 2
  %v494 = vsel %vm278, %v491, %v493
  %v495 = vrot.slane %v424, 2
  %v496 = vsel %vm278, %v493, %v495
  %v502 = vadd.f32 %v481, %v490
  %v503 = vadd.f32 %v482, %v492
  %v504 = vadd.f32 %v483, %v494
  %v505 = vadd.f32 %v484, %v496
  %v506 = vadd.f32 %v485, %v495
  %s507 = scalar_lea.vmem %s4, 6
  %v508 = vld [vmem:[%s507] sm:$0x3]
  %509 = vrot.lane.b32.xlu0 %v308, 124
  %v510 = vpop.permute.xlu0 %509
  %511 = vrot.lane.b32.xlu0 %v309, 124
  %v512 = vpop.permute.xlu0 %511
  %513 = vrot.lane.b32.xlu0 %v310, 124
  %v514 = vpop.permute.xlu0 %513
  %515 = vrot.lane.b32.xlu0 %v311, 124
  %v516 = vpop.permute.xlu0 %515
  %v518 = vsel %vm312, %v510, 0
  %v521 = vsel %vm312, %v512, 0
  %v524 = vsel %vm312, %v514, 0
  %v527 = vsel %vm312, %v516, 0
  %v530 = vsel %vm325, %v508, 0
  %532 = vmatpush.bf16.msra.mxu0 0
  %533 = vmatpush.bf16.msra.mxu0 0
  %534 = vmatpush.bf16.msra.mxu0 0
  %535 = vmatpush.bf16.msra.mxu0 0
  %536 = vmatpush.bf16.msra.mxu0 0
  %537 = vmatpush.bf16.msra.mxu0 0
  %538 = vmatpush.bf16.msra.mxu0 0
  %539 = vmatpush.bf16.msra.mxu0 %v530
  %540 = vmatmul.bf16.gmra.mxu0 %v518
  %v541 = vpop.f32.mrf.mxu0
  %v542 = vadd.f32 0.0, %v541
  %v543 = vpop.f32.mrf.mxu0
  %v544 = vadd.f32 0.0, %v543
  %545 = vmatmul.bf16.gmra.mxu0 %v521
  %v546 = vpop.f32.mrf.mxu0
  %v547 = vadd.f32 0.0, %v546
  %v548 = vpop.f32.mrf.mxu0
  %v549 = vadd.f32 0.0, %v548
  %550 = vmatmul.bf16.gmra.mxu0 %v524
  %v551 = vpop.f32.mrf.mxu0
  %v552 = vadd.f32 0.0, %v551
  %v553 = vpop.f32.mrf.mxu0
  %v554 = vadd.f32 0.0, %v553
  %555 = vmatmul.bf16.gmra.mxu0 %v527
  %v556 = vpop.f32.mrf.mxu0
  %v557 = vadd.f32 0.0, %v556
  %v558 = vpop.f32.mrf.mxu0
  %v559 = vadd.f32 0.0, %v558
  %560 = vdwg.mxu0
  %s561 = scalar_lea.vmem %s4, 8
  %v562 = vld [vmem:[%s561] sm:$0x3]
  %v564 = vsel %vm325, %v562, 0
  %566 = vmatpush.bf16.msra.mxu0 0
  %567 = vmatpush.bf16.msra.mxu0 0
  %568 = vmatpush.bf16.msra.mxu0 0
  %569 = vmatpush.bf16.msra.mxu0 0
  %570 = vmatpush.bf16.msra.mxu0 0
  %571 = vmatpush.bf16.msra.mxu0 0
  %572 = vmatpush.bf16.msra.mxu0 0
  %573 = vmatpush.bf16.msra.mxu0 %v564
  %574 = vmatmul.bf16.gmra.mxu0 %v518
  %v575 = vpop.f32.mrf.mxu0
  %v576 = vadd.f32 0.0, %v575
  %v577 = vpop.f32.mrf.mxu0
  %v578 = vadd.f32 0.0, %v577
  %579 = vmatmul.bf16.gmra.mxu0 %v521
  %v580 = vpop.f32.mrf.mxu0
  %v581 = vadd.f32 0.0, %v580
  %v582 = vpop.f32.mrf.mxu0
  %v583 = vadd.f32 0.0, %v582
  %584 = vmatmul.bf16.gmra.mxu0 %v524
  %v585 = vpop.f32.mrf.mxu0
  %v586 = vadd.f32 0.0, %v585
  %v587 = vpop.f32.mrf.mxu0
  %v588 = vadd.f32 0.0, %v587
  %589 = vmatmul.bf16.gmra.mxu0 %v527
  %v590 = vpop.f32.mrf.mxu0
  %v591 = vadd.f32 0.0, %v590
  %v592 = vpop.f32.mrf.mxu0
  %v593 = vadd.f32 0.0, %v592
  %594 = vdwg.mxu0
  %s595 = scalar_lea.vmem %s4, 10
  %v596 = vld [vmem:[%s595] sm:$0x3]
  %v598 = vsel %vm325, %v596, 0
  %600 = vmatpush.bf16.msra.mxu0 0
  %601 = vmatpush.bf16.msra.mxu0 0
  %602 = vmatpush.bf16.msra.mxu0 0
  %603 = vmatpush.bf16.msra.mxu0 0
  %604 = vmatpush.bf16.msra.mxu0 0
  %605 = vmatpush.bf16.msra.mxu0 0
  %606 = vmatpush.bf16.msra.mxu0 0
  %607 = vmatpush.bf16.msra.mxu0 %v598
  %608 = vmatmul.bf16.gmra.mxu0 %v518
  %v609 = vpop.f32.mrf.mxu0
  %v610 = vadd.f32 0.0, %v609
  %v611 = vpop.f32.mrf.mxu0
  %v612 = vadd.f32 0.0, %v611
  %613 = vmatmul.bf16.gmra.mxu0 %v521
  %v614 = vpop.f32.mrf.mxu0
  %v615 = vadd.f32 0.0, %v614
  %v616 = vpop.f32.mrf.mxu0
  %v617 = vadd.f32 0.0, %v616
  %618 = vmatmul.bf16.gmra.mxu0 %v524
  %v619 = vpop.f32.mrf.mxu0
  %v620 = vadd.f32 0.0, %v619
  %v621 = vpop.f32.mrf.mxu0
  %v622 = vadd.f32 0.0, %v621
  %623 = vmatmul.bf16.gmra.mxu0 %v527
  %v624 = vpop.f32.mrf.mxu0
  %v625 = vadd.f32 0.0, %v624
  %v626 = vpop.f32.mrf.mxu0
  %v627 = vadd.f32 0.0, %v626
  %628 = vdwg.mxu0
  %v633 = vrot.slane %v576, 1
  %v634 = vrot.slane %v578, 1
  %v635 = vsel %vm280, %v633, %v634
  %v636 = vrot.slane %v581, 1
  %v637 = vsel %vm280, %v634, %v636
  %v638 = vrot.slane %v583, 1
  %v639 = vsel %vm280, %v636, %v638
  %v644 = vadd.f32 %v542, %v635
  %v645 = vadd.f32 %v544, %v637
  %v646 = vadd.f32 %v547, %v639
  %v647 = vadd.f32 %v549, %v638
  %v652 = vrot.slane %v610, 2
  %v653 = vrot.slane %v612, 2
  %v654 = vsel %vm278, %v652, %v653
  %v655 = vrot.slane %v615, 2
  %v656 = vsel %vm278, %v653, %v655
  %v657 = vrot.slane %v617, 2
  %v658 = vsel %vm278, %v655, %v657
  %v663 = vadd.f32 %v644, %v654
  %v664 = vadd.f32 %v645, %v656
  %v665 = vadd.f32 %v646, %v658
  %v666 = vadd.f32 %v647, %v657
  %v671 = vrot.slane %v586, 1
  %v672 = vsel %vm280, %v638, %v671
  %v673 = vrot.slane %v588, 1
  %v674 = vsel %vm280, %v671, %v673
  %v675 = vrot.slane %v591, 1
  %v676 = vsel %vm280, %v673, %v675
  %v677 = vrot.slane %v593, 1
  %v678 = vsel %vm280, %v675, %v677
  %v684 = vadd.f32 %v549, %v672
  %v685 = vadd.f32 %v552, %v674
  %v686 = vadd.f32 %v554, %v676
  %v687 = vadd.f32 %v557, %v678
  %v688 = vadd.f32 %v559, %v677
  %v693 = vrot.slane %v620, 2
  %v694 = vrot.slane %v622, 2
  %v695 = vsel %vm278, %v693, %v694
  %v696 = vrot.slane %v625, 2
  %v697 = vsel %vm278, %v694, %v696
  %v698 = vrot.slane %v627, 2
  %v699 = vsel %vm278, %v696, %v698
  %v705 = vadd.f32 %v684, %v693
  %v706 = vadd.f32 %v685, %v695
  %v707 = vadd.f32 %v686, %v697
  %v708 = vadd.f32 %v687, %v699
  %v709 = vadd.f32 %v688, %v698
  %714 = vrot.lane.b32.xlu0 %v663, 4
  %v715 = vpop.permute.xlu0 %714
  %716 = vrot.lane.b32.xlu0 %v664, 4
  %v717 = vpop.permute.xlu0 %716
  %718 = vrot.lane.b32.xlu0 %v665, 4
  %v719 = vpop.permute.xlu0 %718
  %720 = vrot.lane.b32.xlu0 %v666, 4
  %v721 = vpop.permute.xlu0 %720
  %v726 = vsel %vm312, %v460, %v715
  %v727 = vsel %vm312, %v461, %v717
  %v728 = vsel %vm312, %v462, %v719
  %v729 = vsel %vm312, %v463, %v721
  %735 = vrot.lane.b32.xlu0 %v705, 4
  %v736 = vpop.permute.xlu0 %735
  %737 = vrot.lane.b32.xlu0 %v706, 4
  %v738 = vpop.permute.xlu0 %737
  %739 = vrot.lane.b32.xlu0 %v707, 4
  %v740 = vpop.permute.xlu0 %739
  %741 = vrot.lane.b32.xlu0 %v708, 4
  %v742 = vpop.permute.xlu0 %741
  %743 = vrot.lane.b32.xlu0 %v709, 4
  %v744 = vpop.permute.xlu0 %743
  %v750 = vsel %vm312, %v502, %v736
  %v751 = vsel %vm312, %v503, %v738
  %v752 = vsel %vm312, %v504, %v740
  %v753 = vsel %vm312, %v505, %v742
  %v754 = vsel %vm312, %v506, %v744
  %v760 = vrot.slane %v750, 2
  %v761 = vrot.slane %v751, 2
  %v762 = vsel %vm278, %v760, %v761
  %v763 = vrot.slane %v752, 2
  %v764 = vsel %vm278, %v761, %v763
  %v765 = vrot.slane %v753, 2
  %v766 = vsel %vm278, %v763, %v765
  %v767 = vrot.slane %v754, 2
  %v768 = vsel %vm278, %v765, %v767
  %vm773 = vcmask 1043456
  %v774 = vsel %vm773, %v729, %v762
  %v775 = vld [vmem:[%s5] sm:$0x1]
  %v776 = vld [vmem:[%s6] sm:$0x1]
  %v777 = vsel %vm136, %v726, 0.0
  %v778 = vsel %vm136, %v727, 0.0
  %v779 = vadd.f32 %v777, %v778
  %v780 = vsel %vm136, %v728, 0.0
  %v781 = vadd.f32 %v779, %v780
  %v782 = vsel %vm136, %v774, 0.0
  %v783 = vadd.f32 %v781, %v782
  %v784 = vsel %vm136, %v764, 0.0
  %v785 = vadd.f32 %v783, %v784
  %v786 = vsel %vm136, %v766, 0.0
  %v787 = vadd.f32 %v785, %v786
  %v788 = vsel %vm136, %v768, 0.0
  %v789 = vadd.f32 %v787, %v788
  %v790 = vrot.slane %v789, 4
  %v791 = vadd.f32 %v789, %v790
  %v792 = vrot.slane %v791, 2
  %v793 = vadd.f32 %v791, %v792
  %v794 = vrot.slane %v793, 1
  %v795 = vadd.f32 %v793, %v794
  %v796 = vmul.f32 %v795, %v162
  %v797 = vsub.f32 %v726, %v796
  %v798 = vsub.f32 %v727, %v796
  %v799 = vsub.f32 %v728, %v796
  %v800 = vsub.f32 %v774, %v796
  %v801 = vsub.f32 %v764, %v796
  %v802 = vsub.f32 %v766, %v796
  %v803 = vsub.f32 %v768, %v796
  %v804 = vmul.f32 %v797, %v797
  %v805 = vmul.f32 %v798, %v798
  %v806 = vmul.f32 %v799, %v799
  %v807 = vmul.f32 %v800, %v800
  %v808 = vmul.f32 %v801, %v801
  %v809 = vmul.f32 %v802, %v802
  %v810 = vmul.f32 %v803, %v803
  %v811 = vsel %vm136, %v804, 0.0
  %v812 = vsel %vm136, %v805, 0.0
  %v813 = vadd.f32 %v811, %v812
  %v814 = vsel %vm136, %v806, 0.0
  %v815 = vadd.f32 %v813, %v814
  %v816 = vsel %vm136, %v807, 0.0
  %v817 = vadd.f32 %v815, %v816
  %v818 = vsel %vm136, %v808, 0.0
  %v819 = vadd.f32 %v817, %v818
  %v820 = vsel %vm136, %v809, 0.0
  %v821 = vadd.f32 %v819, %v820
  %v822 = vsel %vm136, %v810, 0.0
  %v823 = vadd.f32 %v821, %v822
  %v824 = vrot.slane %v823, 4
  %v825 = vadd.f32 %v823, %v824
  %v826 = vrot.slane %v825, 2
  %v827 = vadd.f32 %v825, %v826
  %v828 = vrot.slane %v827, 1
  %v829 = vadd.f32 %v827, %v828
  %v830 = vmul.f32 %v829, %v162
  %v831 = vadd.f32 %v830, 1e-05
  %v832 = vrsqrt.pop %v831
  %v833 = vmul.f32 %v832, %v831
  %v834 = vmul.f32 %v833, %v832
  %v835 = vmul.f32 0.5, %v834
  %v836 = vsub.f32 1.5, %v835
  %v837 = vmul.f32 %v832, %v836
  %vm838 = vweird.f32 %v831
  %vm839 = vweird.f32 %v832
  %vm840 = vmor %vm838, %vm839
  %v841 = vsel %vm840, %v832, %v837
  %v842 = vmul.f32 %v797, %v841
  %v843 = vmul.f32 %v798, %v841
  %v844 = vmul.f32 %v799, %v841
  %v845 = vmul.f32 %v800, %v841
  %v846 = vmul.f32 %v801, %v841
  %v847 = vmul.f32 %v802, %v841
  %v848 = vmul.f32 %v803, %v841
  %v850 = vperm.slane %v775, 0
  %v852 = vmul.f32 %v842, %v850
  %v853 = vmul.f32 %v843, %v850
  %v854 = vmul.f32 %v844, %v850
  %v855 = vmul.f32 %v845, %v850
  %v856 = vmul.f32 %v846, %v850
  %v857 = vmul.f32 %v847, %v850
  %v858 = vmul.f32 %v848, %v850
  %v860 = vperm.slane %v776, 0
  %v862 = vadd.f32 %v852, %v860
  %v863 = vadd.f32 %v853, %v860
  %v864 = vadd.f32 %v854, %v860
  %v865 = vadd.f32 %v855, %v860
  %v866 = vadd.f32 %v856, %v860
  %v867 = vadd.f32 %v857, %v860
  %v868 = vadd.f32 %v858, %v860
  %v869 = vmax.f32 %v862, 0.0
  %v870 = vmax.f32 %v863, 0.0
  %v871 = vmax.f32 %v864, 0.0
  %v872 = vmax.f32 %v865, 0.0
  %v873 = vmax.f32 %v866, 0.0
  %v874 = vmax.f32 %v867, 0.0
  %v875 = vmax.f32 %v868, 0.0
  %v876 = vpack.c.bf16 %v870, %v869
  %v877 = vpack.c.bf16 %v872, %v871
  %v878 = vpack.c.bf16 %v874, %v873
  %v879 = vpack.c.bf16 %v875, %v875
  %v880 = vld [vmem:[%s7] sm:$0xf]
  %v882 = vsel %vm136, %v876, 0
  %v885 = vsel %vm136, %v877, 0
  %v888 = vsel %vm136, %v878, 0
  %v891 = vsel %vm136, %v879, 0
  %v894 = vsel %vm773, %v880, 0
  %896 = vmatpush.bf16.msra.mxu0 0
  %897 = vmatpush.bf16.msra.mxu0 0
  %898 = vmatpush.bf16.msra.mxu0 0
  %899 = vmatpush.bf16.msra.mxu0 0
  %900 = vmatpush.bf16.msra.mxu0 0
  %901 = vmatpush.bf16.msra.mxu0 0
  %902 = vmatpush.bf16.msra.mxu0 0
  %903 = vmatpush.bf16.msra.mxu0 %v894
  %904 = vmatmul.bf16.gmra.mxu0 %v882
  %v905 = vpop.f32.mrf.mxu0
  %v906 = vadd.f32 0.0, %v905
  %v907 = vpop.f32.mrf.mxu0
  %v908 = vadd.f32 0.0, %v907
  %909 = vmatmul.bf16.gmra.mxu0 %v885
  %v910 = vpop.f32.mrf.mxu0
  %v911 = vadd.f32 0.0, %v910
  %v912 = vpop.f32.mrf.mxu0
  %v913 = vadd.f32 0.0, %v912
  %914 = vmatmul.bf16.gmra.mxu0 %v888
  %v915 = vpop.f32.mrf.mxu0
  %v916 = vadd.f32 0.0, %v915
  %v917 = vpop.f32.mrf.mxu0
  %v918 = vadd.f32 0.0, %v917
  %919 = vmatmul.bf16.gmra.mxu0 %v891
  %v920 = vpop.f32.mrf.mxu0
  %v921 = vadd.f32 0.0, %v920
  %v922 = vpop.f32.mrf.mxu0
  %923 = vdwg.mxu0
  %v924 = vld [vmem:[%s8] sm:$0x1]
  %v925 = vld [vmem:[%s9] sm:$0x1]
  %v926 = vsel %vm93, %v906, 0.0
  %v927 = vsel %vm93, %v908, 0.0
  %v928 = vadd.f32 %v926, %v927
  %v929 = vsel %vm93, %v911, 0.0
  %v930 = vadd.f32 %v928, %v929
  %v931 = vsel %vm93, %v913, 0.0
  %v932 = vadd.f32 %v930, %v931
  %v933 = vsel %vm93, %v916, 0.0
  %v934 = vadd.f32 %v932, %v933
  %v935 = vsel %vm93, %v918, 0.0
  %v936 = vadd.f32 %v934, %v935
  %v937 = vsel %vm93, %v921, 0.0
  %v938 = vadd.f32 %v936, %v937
  %v939 = vrot.slane %v938, 4
  %v940 = vadd.f32 %v938, %v939
  %v941 = vrot.slane %v940, 2
  %v942 = vadd.f32 %v940, %v941
  %v943 = vrot.slane %v942, 1
  %v944 = vadd.f32 %v942, %v943
  %v945 = vmul.f32 %v944, %v162
  %v946 = vsub.f32 %v906, %v945
  %v947 = vsub.f32 %v908, %v945
  %v948 = vsub.f32 %v911, %v945
  %v949 = vsub.f32 %v913, %v945
  %v950 = vsub.f32 %v916, %v945
  %v951 = vsub.f32 %v918, %v945
  %v952 = vsub.f32 %v921, %v945
  %v953 = vmul.f32 %v946, %v946
  %v954 = vmul.f32 %v947, %v947
  %v955 = vmul.f32 %v948, %v948
  %v956 = vmul.f32 %v949, %v949
  %v957 = vmul.f32 %v950, %v950
  %v958 = vmul.f32 %v951, %v951
  %v959 = vmul.f32 %v952, %v952
  %v960 = vsel %vm93, %v953, 0.0
  %v961 = vsel %vm93, %v954, 0.0
  %v962 = vadd.f32 %v960, %v961
  %v963 = vsel %vm93, %v955, 0.0
  %v964 = vadd.f32 %v962, %v963
  %v965 = vsel %vm93, %v956, 0.0
  %v966 = vadd.f32 %v964, %v965
  %v967 = vsel %vm93, %v957, 0.0
  %v968 = vadd.f32 %v966, %v967
  %v969 = vsel %vm93, %v958, 0.0
  %v970 = vadd.f32 %v968, %v969
  %v971 = vsel %vm93, %v959, 0.0
  %v972 = vadd.f32 %v970, %v971
  %v973 = vrot.slane %v972, 4
  %v974 = vadd.f32 %v972, %v973
  %v975 = vrot.slane %v974, 2
  %v976 = vadd.f32 %v974, %v975
  %v977 = vrot.slane %v976, 1
  %v978 = vadd.f32 %v976, %v977
  %v979 = vmul.f32 %v978, %v162
  %v980 = vadd.f32 %v979, 1e-05
  %v981 = vrsqrt.pop %v980
  %v982 = vmul.f32 %v981, %v980
  %v983 = vmul.f32 %v982, %v981
  %v984 = vmul.f32 0.5, %v983
  %v985 = vsub.f32 1.5, %v984
  %v986 = vmul.f32 %v981, %v985
  %vm987 = vweird.f32 %v980
  %vm988 = vweird.f32 %v981
  %vm989 = vmor %vm987, %vm988
  %v990 = vsel %vm989, %v981, %v986
  %v991 = vmul.f32 %v946, %v990
  %v992 = vmul.f32 %v947, %v990
  %v993 = vmul.f32 %v948, %v990
  %v994 = vmul.f32 %v949, %v990
  %v995 = vmul.f32 %v950, %v990
  %v996 = vmul.f32 %v951, %v990
  %v997 = vmul.f32 %v952, %v990
  %v999 = vperm.slane %v924, 0
  %v1001 = vmul.f32 %v991, %v999
  %v1002 = vmul.f32 %v992, %v999
  %v1003 = vmul.f32 %v993, %v999
  %v1004 = vmul.f32 %v994, %v999
  %v1005 = vmul.f32 %v995, %v999
  %v1006 = vmul.f32 %v996, %v999
  %v1007 = vmul.f32 %v997, %v999
  %v1009 = vperm.slane %v925, 0
  %v1011 = vadd.f32 %v1001, %v1009
  %v1012 = vadd.f32 %v1002, %v1009
  %v1013 = vadd.f32 %v1003, %v1009
  %v1014 = vadd.f32 %v1004, %v1009
  %v1015 = vadd.f32 %v1005, %v1009
  %v1016 = vadd.f32 %v1006, %v1009
  %v1017 = vadd.f32 %v1007, %v1009
  %v1018 = vunpack.c.l.bf16 %v36
  %v1019 = vunpack.c.l.bf16 %v37
  %v1020 = vunpack.c.l.bf16 %v38
  %v1021 = vunpack.c.l.bf16 %v39
  %v1022 = vunpack.c.l.bf16 %v40
  %v1023 = vunpack.c.l.bf16 %v41
  %v1024 = vunpack.c.l.bf16 %v42
  %v1025 = vadd.f32 %v1011, %v1018
  %v1026 = vadd.f32 %v1012, %v1019
  %v1027 = vadd.f32 %v1013, %v1020
  %v1028 = vadd.f32 %v1014, %v1021
  %v1029 = vadd.f32 %v1015, %v1022
  %v1030 = vadd.f32 %v1016, %v1023
  %v1031 = vadd.f32 %v1017, %v1024
  %v1032 = vmax.f32 %v1025, 0.0
  %v1033 = vmax.f32 %v1026, 0.0
  %v1034 = vmax.f32 %v1027, 0.0
  %v1035 = vmax.f32 %v1028, 0.0
  %v1036 = vmax.f32 %v1029, 0.0
  %v1037 = vmax.f32 %v1030, 0.0
  %v1038 = vmax.f32 %v1031, 0.0
  %v1039 = vpack.c.bf16 %v1032, %v1032
  %v1040 = vpack.c.bf16 %v1033, %v1033
  %v1041 = vpack.c.bf16 %v1034, %v1034
  %v1042 = vpack.c.bf16 %v1035, %v1035
  %v1043 = vpack.c.bf16 %v1036, %v1036
  %v1044 = vpack.c.bf16 %v1037, %v1037
  %v1045 = vpack.c.bf16 %v1038, %v1038
  %vm1046 = vcmask 519168
  %1047 = vst.msk [vmem:[%s10] sm:$0xf] %vm1046, %v1039
  %1048 = vst.msk [vmem:[%s10 + $0x4] sm:$0xf] %vm1046, %v1040
  %1049 = vst.msk [vmem:[%s10 + $0x8] sm:$0xf] %vm1046, %v1041
  %1050 = vst.msk [vmem:[%s10 + $0xc] sm:$0xf] %vm1046, %v1042
  %1051 = vst.msk [vmem:[%s10 + $0x10] sm:$0xf] %vm1046, %v1043
  %1052 = vst.msk [vmem:[%s10 + $0x14] sm:$0xf] %vm1046, %v1044
  %1053 = vst.msk [vmem:[%s10 + $0x18] sm:$0xf] %vm1046, %v1045
  // Predicated region
  $region42: #{resnext_forward.6} parent=0 // pred_check
    _
  $region43: #{resnext_forward.6} parent=0 // pred_check_branch
    %1055 = sbr.rel (0) target = $region45
  $region44: #{resnext_forward.6} parent=0 // pred_region
    _
  $region45: #{resnext_forward.6} parent=0 // pred_fallthru
    _
  // Predicated region
  $region46: #{resnext_forward.6} parent=0 // pred_check
    _
  $region47: #{resnext_forward.6} parent=0 // pred_check_branch
    %1057 = sbr.rel (0) target = $region49
  $region48: #{resnext_forward.6} parent=0 // pred_region
    _
  $region49: #{resnext_forward.6} parent=0 // pred_fallthru
    _

// kernel: resnext_forward.7
$region0: #{resnext_forward.7}
  #allocation0 [shape = 'u32[]', space=smem, size = 0x4, offset = 0x4, fixed_abs, tag = 'smem constant byte address 0x4 - core index']
  #allocation1 [shape = 'u32[72,128]{1,0:T(1,128)}', space=vmem, size = 0x9000, scoped, tag = 'internal scratch']
  %s0 = inlined_call_operand.vmem [shape: bf16[56,64], index: 0, kind: input, shape index: {}]
  %s1 = inlined_call_operand.vmem [shape: bf16[28,64], index: 1, kind: input, shape index: {}]
  %s2 = inlined_call_operand.vmem [shape: bf16[64,16], index: 2, kind: input, shape index: {}]
  %s3 = inlined_call_operand.vmem [shape: f32[1,16], index: 3, kind: input, shape index: {}]
  %s4 = inlined_call_operand.vmem [shape: f32[1,16], index: 4, kind: input, shape index: {}]
  %s5 = inlined_call_operand.vmem [shape: bf16[6,8,8], index: 5, kind: input, shape index: {}]
  %s6 = inlined_call_operand.vmem [shape: f32[1,16], index: 6, kind: input, shape index: {}]
  %s7 = inlined_call_operand.vmem [shape: f32[1,16], index: 7, kind: input, shape index: {}]
  %s8 = inlined_call_operand.vmem [shape: bf16[16,128], index: 8, kind: input, shape index: {}]
  %s9 = inlined_call_operand.vmem [shape: f32[1,128], index: 9, kind: input, shape index: {}]
  %s10 = inlined_call_operand.vmem [shape: f32[1,128], index: 10, kind: input, shape index: {}]
  %s11 = inlined_call_operand.vmem [shape: bf16[64,128], index: 11, kind: input, shape index: {}]
  %s12 = inlined_call_operand.vmem [shape: f32[1,128], index: 12, kind: input, shape index: {}]
  %s13 = inlined_call_operand.vmem [shape: f32[1,128], index: 13, kind: input, shape index: {}]
  %s14 = inlined_call_operand.vmem [shape: bf16[28,128], index: 14, kind: output, shape index: {}]
  %s15 = sld [smem:[#allocation0]]
  $region66: #{resnext_forward.7} parent=0
    _
  %s17 = ssub.s32 1, %s15
  %s18 = scalar_select 0, %s17, %s15
  // Predicated region
  $region2: #{resnext_forward.7} parent=0 // pred_check
    _
  $region3: #{resnext_forward.7} parent=0 // pred_check_branch
    %20 = sbr.rel (0) target = $region5
  $region4: #{resnext_forward.7} parent=0 // pred_region
    _
  $region5: #{resnext_forward.7} parent=0 // pred_fallthru
    _
  // Predicated region
  $region6: #{resnext_forward.7} parent=0 // pred_check
    _
  $region7: #{resnext_forward.7} parent=0 // pred_check_branch
    %22 = sbr.rel (0) target = $region9
  $region8: #{resnext_forward.7} parent=0 // pred_region
    _
  $region9: #{resnext_forward.7} parent=0 // pred_fallthru
    _
  // Predicated region
  $region10: #{resnext_forward.7} parent=0 // pred_check
    _
  $region11: #{resnext_forward.7} parent=0 // pred_check_branch
    %24 = sbr.rel (0) target = $region13
  $region12: #{resnext_forward.7} parent=0 // pred_region
    _
  $region13: #{resnext_forward.7} parent=0 // pred_fallthru
    _
  // Predicated region
  $region14: #{resnext_forward.7} parent=0 // pred_check
    _
  $region15: #{resnext_forward.7} parent=0 // pred_check_branch
    %26 = sbr.rel (0) target = $region17
  $region16: #{resnext_forward.7} parent=0 // pred_region
    _
  $region17: #{resnext_forward.7} parent=0 // pred_fallthru
    _
  // Predicated region
  $region18: #{resnext_forward.7} parent=0 // pred_check
    _
  $region19: #{resnext_forward.7} parent=0 // pred_check_branch
    %28 = sbr.rel (0) target = $region21
  $region20: #{resnext_forward.7} parent=0 // pred_region
    _
  $region21: #{resnext_forward.7} parent=0 // pred_fallthru
    _
  // Predicated region
  $region22: #{resnext_forward.7} parent=0 // pred_check
    _
  $region23: #{resnext_forward.7} parent=0 // pred_check_branch
    %30 = sbr.rel (0) target = $region25
  $region24: #{resnext_forward.7} parent=0 // pred_region
    _
  $region25: #{resnext_forward.7} parent=0 // pred_fallthru
    _
  // Predicated region
  $region26: #{resnext_forward.7} parent=0 // pred_check
    _
  $region27: #{resnext_forward.7} parent=0 // pred_check_branch
    %32 = sbr.rel (0) target = $region29
  $region28: #{resnext_forward.7} parent=0 // pred_region
    _
  $region29: #{resnext_forward.7} parent=0 // pred_fallthru
    _
  // Predicated region
  $region30: #{resnext_forward.7} parent=0 // pred_check
    _
  $region31: #{resnext_forward.7} parent=0 // pred_check_branch
    %34 = sbr.rel (0) target = $region33
  $region32: #{resnext_forward.7} parent=0 // pred_region
    _
  $region33: #{resnext_forward.7} parent=0 // pred_fallthru
    _
  // Predicated region
  $region34: #{resnext_forward.7} parent=0 // pred_check
    _
  $region35: #{resnext_forward.7} parent=0 // pred_check_branch
    %36 = sbr.rel (0) target = $region37
  $region36: #{resnext_forward.7} parent=0 // pred_region
    _
  $region37: #{resnext_forward.7} parent=0 // pred_fallthru
    _
  // Predicated region
  $region38: #{resnext_forward.7} parent=0 // pred_check
    _
  $region39: #{resnext_forward.7} parent=0 // pred_check_branch
    %38 = sbr.rel (0) target = $region41
  $region40: #{resnext_forward.7} parent=0 // pred_region
    _
  $region41: #{resnext_forward.7} parent=0 // pred_fallthru
    _
  // Predicated region
  $region42: #{resnext_forward.7} parent=0 // pred_check
    _
  $region43: #{resnext_forward.7} parent=0 // pred_check_branch
    %40 = sbr.rel (0) target = $region45
  $region44: #{resnext_forward.7} parent=0 // pred_region
    _
  $region45: #{resnext_forward.7} parent=0 // pred_fallthru
    _
  // Predicated region
  $region46: #{resnext_forward.7} parent=0 // pred_check
    _
  $region47: #{resnext_forward.7} parent=0 // pred_check_branch
    %42 = sbr.rel (0) target = $region49
  $region48: #{resnext_forward.7} parent=0 // pred_region
    _
  $region49: #{resnext_forward.7} parent=0 // pred_fallthru
    _
  // Predicated region
  $region50: #{resnext_forward.7} parent=0 // pred_check
    _
  $region51: #{resnext_forward.7} parent=0 // pred_check_branch
    %44 = sbr.rel (0) target = $region53
  $region52: #{resnext_forward.7} parent=0 // pred_region
    _
  $region53: #{resnext_forward.7} parent=0 // pred_fallthru
    _
  // Predicated region
  $region54: #{resnext_forward.7} parent=0 // pred_check
    _
  $region55: #{resnext_forward.7} parent=0 // pred_check_branch
    %46 = sbr.rel (0) target = $region57
  $region56: #{resnext_forward.7} parent=0 // pred_region
    _
  $region57: #{resnext_forward.7} parent=0 // pred_fallthru
    _
  %v48 = vld [vmem:[%s0] sm:$0xf]
  %v49 = vld [vmem:[%s0 + $0x4] sm:$0xf]
  %v50 = vld [vmem:[%s0 + $0x8] sm:$0xf]
  %v51 = vld [vmem:[%s0 + $0xc] sm:$0xf]
  %v52 = vld [vmem:[%s0 + $0x10] sm:$0xf]
  %v53 = vld [vmem:[%s0 + $0x14] sm:$0xf]
  %v54 = vld [vmem:[%s0 + $0x18] sm:$0xf]
  %v55 = vld [vmem:[%s2] sm:$0xf]
  %v56 = vld [vmem:[%s2 + $0x4] sm:$0xf]
  %v57 = vld [vmem:[%s2 + $0x8] sm:$0xf]
  %v58 = vld [vmem:[%s2 + $0xc] sm:$0xf]
  %v59 = vld [vmem:[%s2 + $0x10] sm:$0xf]
  %v60 = vld [vmem:[%s2 + $0x14] sm:$0xf]
  %v61 = vld [vmem:[%s2 + $0x18] sm:$0xf]
  %v62 = vld [vmem:[%s2 + $0x1c] sm:$0xf]
  %v70 = vunpack.c.l.b16 %v48
  %v71 = vunpack.c.l.b16 %v49
  %v72 = vunpack.c.l.b16 %v50
  %v73 = vunpack.c.l.b16 %v51
  %v74 = vunpack.c.l.b16 %v52
  %v75 = vunpack.c.l.b16 %v53
  %v76 = vunpack.c.l.b16 %v54
  %v77 = vpack.c.b16 %v71, %v70
  %v78 = vpack.c.b16 %v73, %v72
  %v79 = vpack.c.b16 %v75, %v74
  %v80 = vpack.c.b16 %v76, %v76
  %v89 = vunpack.c.l.b16 %v55
  %v90 = vunpack.c.l.b16 %v56
  %v91 = vunpack.c.l.b16 %v57
  %v92 = vunpack.c.l.b16 %v58
  %v93 = vunpack.c.l.b16 %v59
  %v94 = vunpack.c.l.b16 %v60
  %v95 = vunpack.c.l.b16 %v61
  %v96 = vunpack.c.l.b16 %v62
  %v97 = vpack.c.b16 %v90, %v89
  %v98 = vpack.c.b16 %v92, %v91
  %v99 = vpack.c.b16 %v94, %v93
  %v100 = vpack.c.b16 %v96, %v95
  %vm105 = vcmask 523264
  %v107 = vsel %vm105, %v77, 0
  %v110 = vsel %vm105, %v78, 0
  %v113 = vsel %vm105, %v79, 0
  %v116 = vsel %vm105, %v80, 0
  %118 = vmatpush.bf16.msra.mxu0 0
  %119 = vmatpush.bf16.msra.mxu0 0
  %120 = vmatpush.bf16.msra.mxu0 0
  %121 = vmatpush.bf16.msra.mxu0 0
  %122 = vmatpush.bf16.msra.mxu0 %v100
  %123 = vmatpush.bf16.msra.mxu0 %v99
  %124 = vmatpush.bf16.msra.mxu0 %v98
  %125 = vmatpush.bf16.msra.mxu0 %v97
  %126 = vmatmul.bf16.gmra.mxu0 %v107
  %v127 = vpop.f32.mrf.mxu0
  %v128 = vadd.f32 0.0, %v127
  %v129 = vpop.f32.mrf.mxu0
  %v130 = vadd.f32 0.0, %v129
  %131 = vmatmul.bf16.gmra.mxu0 %v110
  %v132 = vpop.f32.mrf.mxu0
  %v133 = vadd.f32 0.0, %v132
  %v134 = vpop.f32.mrf.mxu0
  %v135 = vadd.f32 0.0, %v134
  %136 = vmatmul.bf16.gmra.mxu0 %v113
  %v137 = vpop.f32.mrf.mxu0
  %v138 = vadd.f32 0.0, %v137
  %v139 = vpop.f32.mrf.mxu0
  %v140 = vadd.f32 0.0, %v139
  %141 = vmatmul.bf16.gmra.mxu0 %v116
  %v142 = vpop.f32.mrf.mxu0
  %v143 = vadd.f32 0.0, %v142
  %v144 = vpop.f32.mrf.mxu0
  %145 = vdwg.mxu0
  %v146 = vld [vmem:[%s3] sm:$0x1]
  %v147 = vld [vmem:[%s4] sm:$0x1]
  %vm148 = vcmask 130048
  %v149 = vsel %vm148, %v128, 0.0
  %v150 = vsel %vm148, %v130, 0.0
  %v151 = vadd.f32 %v149, %v150
  %v152 = vsel %vm148, %v133, 0.0
  %v153 = vadd.f32 %v151, %v152
  %v154 = vsel %vm148, %v135, 0.0
  %v155 = vadd.f32 %v153, %v154
  %v156 = vsel %vm148, %v138, 0.0
  %v157 = vadd.f32 %v155, %v156
  %v158 = vsel %vm148, %v140, 0.0
  %v159 = vadd.f32 %v157, %v158
  %v160 = vsel %vm148, %v143, 0.0
  %v161 = vadd.f32 %v159, %v160
  %v162 = vrot.slane %v161, 4
  %v163 = vadd.f32 %v161, %v162
  %v164 = vrot.slane %v163, 2
  %v165 = vadd.f32 %v163, %v164
  %v166 = vrot.slane %v165, 1
  %v167 = vadd.f32 %v165, %v166
  %v168 = vrcp.pop 56.0
  %v169 = vmul.f32 56.0, %v168
  %v170 = vsub.f32 1.0, %v169
  %v171 = vmul.f32 %v168, %v170
  %v172 = vadd.f32 %v168, %v171
  %vm173 = vweird.f32 %v168
  %v174 = vsel %vm173, %v168, %v172
  %v175 = vmul.f32 %v167, %v174
  %v176 = vsub.f32 %v128, %v175
  %v177 = vsub.f32 %v130, %v175
  %v178 = vsub.f32 %v133, %v175
  %v179 = vsub.f32 %v135, %v175
  %v180 = vsub.f32 %v138, %v175
  %v181 = vsub.f32 %v140, %v175
  %v182 = vsub.f32 %v143, %v175
  %v183 = vmul.f32 %v176, %v176
  %v184 = vmul.f32 %v177, %v177
  %v185 = vmul.f32 %v178, %v178
  %v186 = vmul.f32 %v179, %v179
  %v187 = vmul.f32 %v180, %v180
  %v188 = vmul.f32 %v181, %v181
  %v189 = vmul.f32 %v182, %v182
  %v190 = vsel %vm148, %v183, 0.0
  %v191 = vsel %vm148, %v184, 0.0
  %v192 = vadd.f32 %v190, %v191
  %v193 = vsel %vm148, %v185, 0.0
  %v194 = vadd.f32 %v192, %v193
  %v195 = vsel %vm148, %v186, 0.0
  %v196 = vadd.f32 %v194, %v195
  %v197 = vsel %vm148, %v187, 0.0
  %v198 = vadd.f32 %v196, %v197
  %v199 = vsel %vm148, %v188, 0.0
  %v200 = vadd.f32 %v198, %v199
  %v201 = vsel %vm148, %v189, 0.0
  %v202 = vadd.f32 %v200, %v201
  %v203 = vrot.slane %v202, 4
  %v204 = vadd.f32 %v202, %v203
  %v205 = vrot.slane %v204, 2
  %v206 = vadd.f32 %v204, %v205
  %v207 = vrot.slane %v206, 1
  %v208 = vadd.f32 %v206, %v207
  %v209 = vmul.f32 %v208, %v174
  %v210 = vadd.f32 %v209, 1e-05
  %v211 = vrsqrt.pop %v210
  %v212 = vmul.f32 %v211, %v210
  %v213 = vmul.f32 %v212, %v211
  %v214 = vmul.f32 0.5, %v213
  %v215 = vsub.f32 1.5, %v214
  %v216 = vmul.f32 %v211, %v215
  %vm217 = vweird.f32 %v210
  %vm218 = vweird.f32 %v211
  %vm219 = vmor %vm217, %vm218
  %v220 = vsel %vm219, %v211, %v216
  %v221 = vmul.f32 %v176, %v220
  %v222 = vmul.f32 %v177, %v220
  %v223 = vmul.f32 %v178, %v220
  %v224 = vmul.f32 %v179, %v220
  %v225 = vmul.f32 %v180, %v220
  %v226 = vmul.f32 %v181, %v220
  %v227 = vmul.f32 %v182, %v220
  %v229 = vperm.slane %v146, 0
  %v231 = vmul.f32 %v221, %v229
  %v232 = vmul.f32 %v222, %v229
  %v233 = vmul.f32 %v223, %v229
  %v234 = vmul.f32 %v224, %v229
  %v235 = vmul.f32 %v225, %v229
  %v236 = vmul.f32 %v226, %v229
  %v237 = vmul.f32 %v227, %v229
  %v239 = vperm.slane %v147, 0
  %v241 = vadd.f32 %v231, %v239
  %v242 = vadd.f32 %v232, %v239
  %v243 = vadd.f32 %v233, %v239
  %v244 = vadd.f32 %v234, %v239
  %v245 = vadd.f32 %v235, %v239
  %v246 = vadd.f32 %v236, %v239
  %v247 = vadd.f32 %v237, %v239
  %v248 = vmax.f32 %v241, 0.0
  %v249 = vmax.f32 %v242, 0.0
  %v250 = vmax.f32 %v243, 0.0
  %v251 = vmax.f32 %v244, 0.0
  %v252 = vmax.f32 %v245, 0.0
  %v253 = vmax.f32 %v246, 0.0
  %v254 = vmax.f32 %v247, 0.0
  %vm259 = vcmask 1040384
  %v260 = vrot.slane %v248, 7
  %v261 = vrot.slane %v249, 7
  %v262 = vsel %vm259, %v260, %v261
  %v263 = vrot.slane %v250, 7
  %v264 = vsel %vm259, %v261, %v263
  %v265 = vrot.slane %v251, 7
  %v266 = vsel %vm259, %v263, %v265
  %vm274 = vcmask 1042432
  %v275 = vrot.slane %v251, 5
  %v276 = vrot.slane %v252, 5
  %v277 = vsel %vm274, %v275, %v276
  %v278 = vrot.slane %v253, 5
  %v279 = vsel %vm274, %v276, %v278
  %v280 = vrot.slane %v254, 5
  %v281 = vsel %vm274, %v278, %v280
  %v287 = vsel %vm259, 0.0, %v260
  %vm288 = vcmask 1044480
  %v289 = vsel %vm288, %v266, 0.0
  %vm290 = vcmask 1045504
  %v291 = vsel %vm290, %v289, 0.0
  %vm292 = vcmask 1046528
  %v293 = vsel %vm292, %v291, %v275
  %v294 = vsel %vm274, %v280, 0.0
  %v295 = vpack.c.bf16 %v287, %v287
  %v296 = vpack.c.bf16 %v262, %v262
  %v297 = vpack.c.bf16 %v264, %v264
  %v298 = vpack.c.bf16 %v293, %v293
  %v299 = vpack.c.bf16 %v277, %v277
  %v300 = vpack.c.bf16 %v279, %v279
  %v301 = vpack.c.bf16 %v281, %v281
  %v302 = vpack.c.bf16 %v294, %v294
  %v303 = vlaneseq
  %v304 = vshrl.u32 %v303, 7
  %v305 = vadd.s32 %v304, 8
  %v306 = vlaneseq
  %v307 = vand.u32 %v306, 127
  %v308 = vmul.u32 %v304, 2
  %v309 = vmul.u32 %v305, 2
  %vm310 = vcmp.eq.s32.totalorder %v307, %v308
  %vm311 = vcmp.eq.s32.totalorder %v307, %v309
  %v312 = vsel %vm310, 1, 0
  %v313 = vsel %vm311, 1, 0
  %v314 = vcvt.s32.f32 %v312
  %v315 = vcvt.s32.f32 %v313
  %v316 = vld [vmem:[%s5] sm:$0xf]
  %v325 = vunpack.c.l.b16 %v295
  %v326 = vunpack.c.l.b16 %v296
  %v327 = vunpack.c.l.b16 %v297
  %v328 = vunpack.c.l.b16 %v298
  %v329 = vunpack.c.l.b16 %v299
  %v330 = vunpack.c.l.b16 %v300
  %v331 = vunpack.c.l.b16 %v301
  %v332 = vunpack.c.l.b16 %v302
  %v333 = vpack.c.b16 %v326, %v325
  %v334 = vpack.c.b16 %v328, %v327
  %v335 = vpack.c.b16 %v330, %v329
  %v336 = vpack.c.b16 %v332, %v331
  %vm337 = vcmask 64512
  %v339 = vsel %vm337, %v333, 0
  %v342 = vsel %vm337, %v334, 0
  %v345 = vsel %vm337, %v335, 0
  %v348 = vsel %vm337, %v336, 0
  %vm350 = vcmask 1043456
  %v352 = vsel %vm350, %v316, 0
  %354 = vmatpush.bf16.msra.mxu0 0
  %355 = vmatpush.bf16.msra.mxu0 0
  %356 = vmatpush.bf16.msra.mxu0 0
  %357 = vmatpush.bf16.msra.mxu0 0
  %358 = vmatpush.bf16.msra.mxu0 0
  %359 = vmatpush.bf16.msra.mxu0 0
  %360 = vmatpush.bf16.msra.mxu0 0
  %361 = vmatpush.bf16.msra.mxu0 %v352
  %362 = vmatmul.bf16.gmra.mxu0 %v339
  %v363 = vpop.f32.mrf.mxu0
  %v364 = vadd.f32 0.0, %v363
  %v365 = vpop.f32.mrf.mxu0
  %v366 = vadd.f32 0.0, %v365
  %367 = vmatmul.bf16.gmra.mxu0 %v342
  %v368 = vpop.f32.mrf.mxu0
  %v369 = vadd.f32 0.0, %v368
  %v370 = vpop.f32.mrf.mxu0
  %v371 = vadd.f32 0.0, %v370
  %372 = vmatmul.bf16.gmra.mxu0 %v345
  %v373 = vpop.f32.mrf.mxu0
  %v374 = vadd.f32 0.0, %v373
  %v375 = vpop.f32.mrf.mxu0
  %v376 = vadd.f32 0.0, %v375
  %377 = vmatmul.bf16.gmra.mxu0 %v348
  %v378 = vpop.f32.mrf.mxu0
  %v379 = vadd.f32 0.0, %v378
  %v380 = vpop.f32.mrf.mxu0
  %v381 = vadd.f32 0.0, %v380
  %382 = vdwg.mxu0
  %s383 = scalar_lea.vmem %s5, 4
  %v384 = vld [vmem:[%s383] sm:$0xf]
  %v386 = vsel %vm350, %v384, 0
  %388 = vmatpush.bf16.msra.mxu0 0
  %389 = vmatpush.bf16.msra.mxu0 0
  %390 = vmatpush.bf16.msra.mxu0 0
  %391 = vmatpush.bf16.msra.mxu0 0
  %392 = vmatpush.bf16.msra.mxu0 0
  %393 = vmatpush.bf16.msra.mxu0 0
  %394 = vmatpush.bf16.msra.mxu0 0
  %395 = vmatpush.bf16.msra.mxu0 %v386
  %396 = vmatmul.bf16.gmra.mxu0 %v339
  %v397 = vpop.f32.mrf.mxu0
  %v398 = vadd.f32 0.0, %v397
  %v399 = vpop.f32.mrf.mxu0
  %v400 = vadd.f32 0.0, %v399
  %401 = vmatmul.bf16.gmra.mxu0 %v342
  %v402 = vpop.f32.mrf.mxu0
  %v403 = vadd.f32 0.0, %v402
  %v404 = vpop.f32.mrf.mxu0
  %v405 = vadd.f32 0.0, %v404
  %406 = vmatmul.bf16.gmra.mxu0 %v345
  %v407 = vpop.f32.mrf.mxu0
  %v408 = vadd.f32 0.0, %v407
  %v409 = vpop.f32.mrf.mxu0
  %v410 = vadd.f32 0.0, %v409
  %411 = vmatmul.bf16.gmra.mxu0 %v348
  %v412 = vpop.f32.mrf.mxu0
  %v413 = vadd.f32 0.0, %v412
  %v414 = vpop.f32.mrf.mxu0
  %v415 = vadd.f32 0.0, %v414
  %416 = vdwg.mxu0
  %s417 = scalar_lea.vmem %s5, 8
  %v418 = vld [vmem:[%s417] sm:$0xf]
  %v420 = vsel %vm350, %v418, 0
  %422 = vmatpush.bf16.msra.mxu0 0
  %423 = vmatpush.bf16.msra.mxu0 0
  %424 = vmatpush.bf16.msra.mxu0 0
  %425 = vmatpush.bf16.msra.mxu0 0
  %426 = vmatpush.bf16.msra.mxu0 0
  %427 = vmatpush.bf16.msra.mxu0 0
  %428 = vmatpush.bf16.msra.mxu0 0
  %429 = vmatpush.bf16.msra.mxu0 %v420
  %430 = vmatmul.bf16.gmra.mxu0 %v339
  %v431 = vpop.f32.mrf.mxu0
  %v432 = vadd.f32 0.0, %v431
  %v433 = vpop.f32.mrf.mxu0
  %v434 = vadd.f32 0.0, %v433
  %435 = vmatmul.bf16.gmra.mxu0 %v342
  %v436 = vpop.f32.mrf.mxu0
  %v437 = vadd.f32 0.0, %v436
  %v438 = vpop.f32.mrf.mxu0
  %v439 = vadd.f32 0.0, %v438
  %440 = vmatmul.bf16.gmra.mxu0 %v345
  %v441 = vpop.f32.mrf.mxu0
  %v442 = vadd.f32 0.0, %v441
  %v443 = vpop.f32.mrf.mxu0
  %v444 = vadd.f32 0.0, %v443
  %445 = vmatmul.bf16.gmra.mxu0 %v348
  %v446 = vpop.f32.mrf.mxu0
  %v447 = vadd.f32 0.0, %v446
  %v448 = vpop.f32.mrf.mxu0
  %v449 = vadd.f32 0.0, %v448
  %450 = vdwg.mxu0
  %v455 = vrot.slane %v398, 1
  %v456 = vrot.slane %v400, 1
  %v457 = vsel %vm292, %v455, %v456
  %v458 = vrot.slane %v403, 1
  %v459 = vsel %vm292, %v456, %v458
  %v460 = vrot.slane %v405, 1
  %v461 = vsel %vm292, %v458, %v460
  %v466 = vadd.f32 %v364, %v457
  %v467 = vadd.f32 %v366, %v459
  %v468 = vadd.f32 %v369, %v461
  %v469 = vadd.f32 %v371, %v460
  %v474 = vrot.slane %v432, 2
  %v475 = vrot.slane %v434, 2
  %v476 = vsel %vm290, %v474, %v475
  %v477 = vrot.slane %v437, 2
  %v478 = vsel %vm290, %v475, %v477
  %v479 = vrot.slane %v439, 2
  %v480 = vsel %vm290, %v477, %v479
  %v485 = vadd.f32 %v466, %v476
  %v486 = vadd.f32 %v467, %v478
  %v487 = vadd.f32 %v468, %v480
  %v488 = vadd.f32 %v469, %v479
  %vm489 = vcmask 228352
  %v491 = vsel %vm489, %v314, 0
  %v494 = vsel %vm489, %v315, 0
  %v497 = vsel %vm350, %v488, 0
  %499 = vmatpush.msra.mxu0 0.0
  %500 = vmatpush.msra.mxu0 0.0
  %501 = vmatpush.msra.mxu0 0.0
  %502 = vmatpush.msra.mxu0 0.0
  %503 = vmatpush.msra.mxu0 0.0
  %504 = vmatpush.msra.mxu0 0.0
  %505 = vmatpush.msra.mxu0 0.0
  %506 = vmatpush.msra.mxu0 0.0
  %507 = vmatpush.msra.mxu0 0.0
  %508 = vmatpush.msra.mxu0 0.0
  %509 = vmatpush.msra.mxu0 0.0
  %510 = vmatpush.msra.mxu0 0.0
  %511 = vmatpush.msra.mxu0 %v497
  %512 = vmatpush.msra.mxu0 %v487
  %513 = vmatpush.msra.mxu0 %v486
  %514 = vmatpush.msra.mxu0 %v485
  %515 = vmatmul.f32.gmra.mxu0 %v491
  %v516 = vpop.f32.mrf.mxu0
  %v517 = vadd.f32 0.0, %v516
  %518 = vmatmul.f32.gmra.mxu0 %v494
  %v519 = vpop.f32.mrf.mxu0
  %v520 = vadd.f32 0.0, %v519
  %521 = vdwg.mxu0
  %v526 = vrot.slane %v408, 1
  %v527 = vsel %vm292, %v460, %v526
  %v528 = vrot.slane %v410, 1
  %v529 = vsel %vm292, %v526, %v528
  %v530 = vrot.slane %v413, 1
  %v531 = vsel %vm292, %v528, %v530
  %v532 = vrot.slane %v415, 1
  %v533 = vsel %vm292, %v530, %v532
  %v539 = vadd.f32 %v371, %v527
  %v540 = vadd.f32 %v374, %v529
  %v541 = vadd.f32 %v376, %v531
  %v542 = vadd.f32 %v379, %v533
  %v543 = vadd.f32 %v381, %v532
  %v548 = vrot.slane %v442, 2
  %v549 = vrot.slane %v444, 2
  %v550 = vsel %vm290, %v548, %v549
  %v551 = vrot.slane %v447, 2
  %v552 = vsel %vm290, %v549, %v551
  %v553 = vrot.slane %v449, 2
  %v554 = vsel %vm290, %v551, %v553
  %v560 = vadd.f32 %v539, %v548
  %v561 = vadd.f32 %v540, %v550
  %v562 = vadd.f32 %v541, %v552
  %v563 = vadd.f32 %v542, %v554
  %v564 = vadd.f32 %v543, %v553
  %vm570 = vcmask 1041408
  %v571 = vrot.slane %v560, 6
  %v572 = vrot.slane %v561, 6
  %v573 = vsel %vm570, %v571, %v572
  %v574 = vrot.slane %v562, 6
  %v575 = vsel %vm570, %v572, %v574
  %v576 = vrot.slane %v563, 6
  %v577 = vsel %vm570, %v574, %v576
  %v578 = vrot.slane %v564, 6
  %v579 = vsel %vm570, %v576, %v578
  %v583 = vsel %vm350, %v579, 0
  %585 = vmatpush.msra.mxu0 0.0
  %586 = vmatpush.msra.mxu0 0.0
  %587 = vmatpush.msra.mxu0 0.0
  %588 = vmatpush.msra.mxu0 0.0
  %589 = vmatpush.msra.mxu0 0.0
  %590 = vmatpush.msra.mxu0 0.0
  %591 = vmatpush.msra.mxu0 0.0
  %592 = vmatpush.msra.mxu0 0.0
  %593 = vmatpush.msra.mxu0 0.0
  %594 = vmatpush.msra.mxu0 0.0
  %595 = vmatpush.msra.mxu0 0.0
  %596 = vmatpush.msra.mxu0 0.0
  %597 = vmatpush.msra.mxu0 %v583
  %598 = vmatpush.msra.mxu0 %v577
  %599 = vmatpush.msra.mxu0 %v575
  %600 = vmatpush.msra.mxu0 %v573
  %601 = vmatmul.f32.gmra.mxu0 %v491
  %v602 = vpop.f32.mrf.mxu0
  %v603 = vadd.f32 0.0, %v602
  %604 = vmatmul.f32.gmra.mxu0 %v494
  %v605 = vpop.f32.mrf.mxu0
  %v606 = vadd.f32 0.0, %v605
  %607 = vdwg.mxu0
  %s608 = scalar_lea.vmem %s5, 12
  %v609 = vld [vmem:[%s608] sm:$0xf]
  %610 = vrot.lane.b32.xlu0 %v333, 120
  %v611 = vpop.permute.xlu0 %610
  %612 = vrot.lane.b32.xlu0 %v334, 120
  %v613 = vpop.permute.xlu0 %612
  %614 = vrot.lane.b32.xlu0 %v335, 120
  %v615 = vpop.permute.xlu0 %614
  %616 = vrot.lane.b32.xlu0 %v336, 120
  %v617 = vpop.permute.xlu0 %616
  %v619 = vsel %vm337, %v611, 0
  %v622 = vsel %vm337, %v613, 0
  %v625 = vsel %vm337, %v615, 0
  %v628 = vsel %vm337, %v617, 0
  %v631 = vsel %vm350, %v609, 0
  %633 = vmatpush.bf16.msra.mxu0 0
  %634 = vmatpush.bf16.msra.mxu0 0
  %635 = vmatpush.bf16.msra.mxu0 0
  %636 = vmatpush.bf16.msra.mxu0 0
  %637 = vmatpush.bf16.msra.mxu0 0
  %638 = vmatpush.bf16.msra.mxu0 0
  %639 = vmatpush.bf16.msra.mxu0 0
  %640 = vmatpush.bf16.msra.mxu0 %v631
  %641 = vmatmul.bf16.gmra.mxu0 %v619
  %v642 = vpop.f32.mrf.mxu0
  %v643 = vadd.f32 0.0, %v642
  %v644 = vpop.f32.mrf.mxu0
  %v645 = vadd.f32 0.0, %v644
  %646 = vmatmul.bf16.gmra.mxu0 %v622
  %v647 = vpop.f32.mrf.mxu0
  %v648 = vadd.f32 0.0, %v647
  %v649 = vpop.f32.mrf.mxu0
  %v650 = vadd.f32 0.0, %v649
  %651 = vmatmul.bf16.gmra.mxu0 %v625
  %v652 = vpop.f32.mrf.mxu0
  %v653 = vadd.f32 0.0, %v652
  %v654 = vpop.f32.mrf.mxu0
  %v655 = vadd.f32 0.0, %v654
  %656 = vmatmul.bf16.gmra.mxu0 %v628
  %v657 = vpop.f32.mrf.mxu0
  %v658 = vadd.f32 0.0, %v657
  %v659 = vpop.f32.mrf.mxu0
  %v660 = vadd.f32 0.0, %v659
  %661 = vdwg.mxu0
  %s662 = scalar_lea.vmem %s5, 16
  %v663 = vld [vmem:[%s662] sm:$0xf]
  %v665 = vsel %vm350, %v663, 0
  %667 = vmatpush.bf16.msra.mxu0 0
  %668 = vmatpush.bf16.msra.mxu0 0
  %669 = vmatpush.bf16.msra.mxu0 0
  %670 = vmatpush.bf16.msra.mxu0 0
  %671 = vmatpush.bf16.msra.mxu0 0
  %672 = vmatpush.bf16.msra.mxu0 0
  %673 = vmatpush.bf16.msra.mxu0 0
  %674 = vmatpush.bf16.msra.mxu0 %v665
  %675 = vmatmul.bf16.gmra.mxu0 %v619
  %v676 = vpop.f32.mrf.mxu0
  %v677 = vadd.f32 0.0, %v676
  %v678 = vpop.f32.mrf.mxu0
  %v679 = vadd.f32 0.0, %v678
  %680 = vmatmul.bf16.gmra.mxu0 %v622
  %v681 = vpop.f32.mrf.mxu0
  %v682 = vadd.f32 0.0, %v681
  %v683 = vpop.f32.mrf.mxu0
  %v684 = vadd.f32 0.0, %v683
  %685 = vmatmul.bf16.gmra.mxu0 %v625
  %v686 = vpop.f32.mrf.mxu0
  %v687 = vadd.f32 0.0, %v686
  %v688 = vpop.f32.mrf.mxu0
  %v689 = vadd.f32 0.0, %v688
  %690 = vmatmul.bf16.gmra.mxu0 %v628
  %v691 = vpop.f32.mrf.mxu0
  %v692 = vadd.f32 0.0, %v691
  %v693 = vpop.f32.mrf.mxu0
  %v694 = vadd.f32 0.0, %v693
  %695 = vdwg.mxu0
  %s696 = scalar_lea.vmem %s5, 20
  %v697 = vld [vmem:[%s696] sm:$0xf]
  %v699 = vsel %vm350, %v697, 0
  %701 = vmatpush.bf16.msra.mxu0 0
  %702 = vmatpush.bf16.msra.mxu0 0
  %703 = vmatpush.bf16.msra.mxu0 0
  %704 = vmatpush.bf16.msra.mxu0 0
  %705 = vmatpush.bf16.msra.mxu0 0
  %706 = vmatpush.bf16.msra.mxu0 0
  %707 = vmatpush.bf16.msra.mxu0 0
  %708 = vmatpush.bf16.msra.mxu0 %v699
  %709 = vmatmul.bf16.gmra.mxu0 %v619
  %v710 = vpop.f32.mrf.mxu0
  %v711 = vadd.f32 0.0, %v710
  %v712 = vpop.f32.mrf.mxu0
  %v713 = vadd.f32 0.0, %v712
  %714 = vmatmul.bf16.gmra.mxu0 %v622
  %v715 = vpop.f32.mrf.mxu0
  %v716 = vadd.f32 0.0, %v715
  %v717 = vpop.f32.mrf.mxu0
  %v718 = vadd.f32 0.0, %v717
  %719 = vmatmul.bf16.gmra.mxu0 %v625
  %v720 = vpop.f32.mrf.mxu0
  %v721 = vadd.f32 0.0, %v720
  %v722 = vpop.f32.mrf.mxu0
  %v723 = vadd.f32 0.0, %v722
  %724 = vmatmul.bf16.gmra.mxu0 %v628
  %v725 = vpop.f32.mrf.mxu0
  %v726 = vadd.f32 0.0, %v725
  %v727 = vpop.f32.mrf.mxu0
  %v728 = vadd.f32 0.0, %v727
  %729 = vdwg.mxu0
  %v734 = vrot.slane %v677, 1
  %v735 = vrot.slane %v679, 1
  %v736 = vsel %vm292, %v734, %v735
  %v737 = vrot.slane %v682, 1
  %v738 = vsel %vm292, %v735, %v737
  %v739 = vrot.slane %v684, 1
  %v740 = vsel %vm292, %v737, %v739
  %v745 = vadd.f32 %v643, %v736
  %v746 = vadd.f32 %v645, %v738
  %v747 = vadd.f32 %v648, %v740
  %v748 = vadd.f32 %v650, %v739
  %v753 = vrot.slane %v711, 2
  %v754 = vrot.slane %v713, 2
  %v755 = vsel %vm290, %v753, %v754
  %v756 = vrot.slane %v716, 2
  %v757 = vsel %vm290, %v754, %v756
  %v758 = vrot.slane %v718, 2
  %v759 = vsel %vm290, %v756, %v758
  %v764 = vadd.f32 %v745, %v755
  %v765 = vadd.f32 %v746, %v757
  %v766 = vadd.f32 %v747, %v759
  %v767 = vadd.f32 %v748, %v758
  %v769 = vsel %vm350, %v767, 0
  %771 = vmatpush.msra.mxu0 0.0
  %772 = vmatpush.msra.mxu0 0.0
  %773 = vmatpush.msra.mxu0 0.0
  %774 = vmatpush.msra.mxu0 0.0
  %775 = vmatpush.msra.mxu0 0.0
  %776 = vmatpush.msra.mxu0 0.0
  %777 = vmatpush.msra.mxu0 0.0
  %778 = vmatpush.msra.mxu0 0.0
  %779 = vmatpush.msra.mxu0 0.0
  %780 = vmatpush.msra.mxu0 0.0
  %781 = vmatpush.msra.mxu0 0.0
  %782 = vmatpush.msra.mxu0 0.0
  %783 = vmatpush.msra.mxu0 %v769
  %784 = vmatpush.msra.mxu0 %v766
  %785 = vmatpush.msra.mxu0 %v765
  %786 = vmatpush.msra.mxu0 %v764
  %787 = vmatmul.f32.gmra.mxu0 %v491
  %v788 = vpop.f32.mrf.mxu0
  %v789 = vadd.f32 0.0, %v788
  %790 = vmatmul.f32.gmra.mxu0 %v494
  %v791 = vpop.f32.mrf.mxu0
  %v792 = vadd.f32 0.0, %v791
  %793 = vdwg.mxu0
  %v798 = vrot.slane %v687, 1
  %v799 = vsel %vm292, %v739, %v798
  %v800 = vrot.slane %v689, 1
  %v801 = vsel %vm292, %v798, %v800
  %v802 = vrot.slane %v692, 1
  %v803 = vsel %vm292, %v800, %v802
  %v804 = vrot.slane %v694, 1
  %v805 = vsel %vm292, %v802, %v804
  %v811 = vadd.f32 %v650, %v799
  %v812 = vadd.f32 %v653, %v801
  %v813 = vadd.f32 %v655, %v803
  %v814 = vadd.f32 %v658, %v805
  %v815 = vadd.f32 %v660, %v804
  %v820 = vrot.slane %v721, 2
  %v821 = vrot.slane %v723, 2
  %v822 = vsel %vm290, %v820, %v821
  %v823 = vrot.slane %v726, 2
  %v824 = vsel %vm290, %v821, %v823
  %v825 = vrot.slane %v728, 2
  %v826 = vsel %vm290, %v823, %v825
  %v832 = vadd.f32 %v811, %v820
  %v833 = vadd.f32 %v812, %v822
  %v834 = vadd.f32 %v813, %v824
  %v835 = vadd.f32 %v814, %v826
  %v836 = vadd.f32 %v815, %v825
  %v842 = vrot.slane %v832, 6
  %v843 = vrot.slane %v833, 6
  %v844 = vsel %vm570, %v842, %v843
  %v845 = vrot.slane %v834, 6
  %v846 = vsel %vm570, %v843, %v845
  %v847 = vrot.slane %v835, 6
  %v848 = vsel %vm570, %v845, %v847
  %v849 = vrot.slane %v836, 6
  %v850 = vsel %vm570, %v847, %v849
  %v854 = vsel %vm350, %v850, 0
  %856 = vmatpush.msra.mxu0 0.0
  %857 = vmatpush.msra.mxu0 0.0
  %858 = vmatpush.msra.mxu0 0.0
  %859 = vmatpush.msra.mxu0 0.0
  %860 = vmatpush.msra.mxu0 0.0
  %861 = vmatpush.msra.mxu0 0.0
  %862 = vmatpush.msra.mxu0 0.0
  %863 = vmatpush.msra.mxu0 0.0
  %864 = vmatpush.msra.mxu0 0.0
  %865 = vmatpush.msra.mxu0 0.0
  %866 = vmatpush.msra.mxu0 0.0
  %867 = vmatpush.msra.mxu0 0.0
  %868 = vmatpush.msra.mxu0 %v854
  %869 = vmatpush.msra.mxu0 %v848
  %870 = vmatpush.msra.mxu0 %v846
  %871 = vmatpush.msra.mxu0 %v844
  %872 = vmatmul.f32.gmra.mxu0 %v491
  %v873 = vpop.f32.mrf.mxu0
  %v874 = vadd.f32 0.0, %v873
  %875 = vmatmul.f32.gmra.mxu0 %v494
  %v876 = vpop.f32.mrf.mxu0
  %v877 = vadd.f32 0.0, %v876
  %878 = vdwg.mxu0
  %881 = vrot.lane.b32.xlu0 %v789, 8
  %v882 = vpop.permute.xlu0 %881
  %883 = vrot.lane.b32.xlu0 %v792, 8
  %v884 = vpop.permute.xlu0 %883
  %v887 = vsel %vm337, %v517, %v882
  %v888 = vsel %vm337, %v520, %v884
  %891 = vrot.lane.b32.xlu0 %v874, 8
  %v892 = vpop.permute.xlu0 %891
  %893 = vrot.lane.b32.xlu0 %v877, 8
  %v894 = vpop.permute.xlu0 %893
  %v897 = vsel %vm337, %v603, %v892
  %v898 = vsel %vm337, %v606, %v894
  %v901 = vrot.slane %v897, 2
  %v902 = vrot.slane %v898, 2
  %v903 = vsel %vm290, %v901, %v902
  %v907 = vsel %vm290, %v888, %v901
  %v908 = vld [vmem:[%s6] sm:$0x1]
  %v909 = vld [vmem:[%s7] sm:$0x1]
  %v910 = vsel %vm148, %v887, 0.0
  %v911 = vsel %vm148, %v907, 0.0
  %v912 = vadd.f32 %v910, %v911
  %v913 = vsel %vm148, %v903, 0.0
  %v914 = vadd.f32 %v912, %v913
  %vm915 = vcmask 125952
  %v916 = vsel %vm915, %v902, 0.0
  %v917 = vadd.f32 %v914, %v916
  %v918 = vrot.slane %v917, 4
  %v919 = vadd.f32 %v917, %v918
  %v920 = vrot.slane %v919, 2
  %v921 = vadd.f32 %v919, %v920
  %v922 = vrot.slane %v921, 1
  %v923 = vadd.f32 %v921, %v922
  %v924 = vrcp.pop 28.0
  %v925 = vmul.f32 28.0, %v924
  %v926 = vsub.f32 1.0, %v925
  %v927 = vmul.f32 %v924, %v926
  %v928 = vadd.f32 %v924, %v927
  %vm929 = vweird.f32 %v924
  %v930 = vsel %vm929, %v924, %v928
  %v931 = vmul.f32 %v923, %v930
  %v932 = vsub.f32 %v887, %v931
  %v933 = vsub.f32 %v907, %v931
  %v934 = vsub.f32 %v903, %v931
  %v935 = vsub.f32 %v902, %v931
  %v936 = vmul.f32 %v932, %v932
  %v937 = vmul.f32 %v933, %v933
  %v938 = vmul.f32 %v934, %v934
  %v939 = vmul.f32 %v935, %v935
  %v940 = vsel %vm148, %v936, 0.0
  %v941 = vsel %vm148, %v937, 0.0
  %v942 = vadd.f32 %v940, %v941
  %v943 = vsel %vm148, %v938, 0.0
  %v944 = vadd.f32 %v942, %v943
  %v945 = vsel %vm915, %v939, 0.0
  %v946 = vadd.f32 %v944, %v945
  %v947 = vrot.slane %v946, 4
  %v948 = vadd.f32 %v946, %v947
  %v949 = vrot.slane %v948, 2
  %v950 = vadd.f32 %v948, %v949
  %v951 = vrot.slane %v950, 1
  %v952 = vadd.f32 %v950, %v951
  %v953 = vmul.f32 %v952, %v930
  %v954 = vadd.f32 %v953, 1e-05
  %v955 = vrsqrt.pop %v954
  %v956 = vmul.f32 %v955, %v954
  %v957 = vmul.f32 %v956, %v955
  %v958 = vmul.f32 0.5, %v957
  %v959 = vsub.f32 1.5, %v958
  %v960 = vmul.f32 %v955, %v959
  %vm961 = vweird.f32 %v954
  %vm962 = vweird.f32 %v955
  %vm963 = vmor %vm961, %vm962
  %v964 = vsel %vm963, %v955, %v960
  %v965 = vmul.f32 %v932, %v964
  %v966 = vmul.f32 %v933, %v964
  %v967 = vmul.f32 %v934, %v964
  %v968 = vmul.f32 %v935, %v964
  %v970 = vperm.slane %v908, 0
  %v972 = vmul.f32 %v965, %v970
  %v973 = vmul.f32 %v966, %v970
  %v974 = vmul.f32 %v967, %v970
  %v975 = vmul.f32 %v968, %v970
  %v977 = vperm.slane %v909, 0
  %v979 = vadd.f32 %v972, %v977
  %v980 = vadd.f32 %v973, %v977
  %v981 = vadd.f32 %v974, %v977
  %v982 = vadd.f32 %v975, %v977
  %v983 = vmax.f32 %v979, 0.0
  %v984 = vmax.f32 %v980, 0.0
  %v985 = vmax.f32 %v981, 0.0
  %v986 = vmax.f32 %v982, 0.0
  %v987 = vpack.c.bf16 %v984, %v983
  %v988 = vpack.c.bf16 %v986, %v985
  %v989 = vld [vmem:[%s8] sm:$0xf]
  %v990 = vld [vmem:[%s8 + $0x4] sm:$0xf]
  %v993 = vunpack.c.l.b16 %v989
  %v994 = vunpack.c.l.b16 %v990
  %v995 = vpack.c.b16 %v994, %v993
  %v998 = vsel %vm148, %v987, 0
  %v1001 = vsel %vm148, %v988, 0
  %1003 = vmatpush.bf16.msra.mxu0 0
  %1004 = vmatpush.bf16.msra.mxu0 0
  %1005 = vmatpush.bf16.msra.mxu0 0
  %1006 = vmatpush.bf16.msra.mxu0 0
  %1007 = vmatpush.bf16.msra.mxu0 0
  %1008 = vmatpush.bf16.msra.mxu0 0
  %1009 = vmatpush.bf16.msra.mxu0 0
  %1010 = vmatpush.bf16.msra.mxu0 %v995
  %1011 = vmatmul.bf16.gmra.mxu0 %v998
  %v1012 = vpop.f32.mrf.mxu0
  %v1013 = vadd.f32 0.0, %v1012
  %v1014 = vpop.f32.mrf.mxu0
  %v1015 = vadd.f32 0.0, %v1014
  %1016 = vmatmul.bf16.gmra.mxu0 %v1001
  %v1017 = vpop.f32.mrf.mxu0
  %v1018 = vadd.f32 0.0, %v1017
  %v1019 = vpop.f32.mrf.mxu0
  %v1020 = vadd.f32 0.0, %v1019
  %1021 = vdwg.mxu0
  %v1022 = vld [vmem:[%s9] sm:$0x1]
  %v1023 = vld [vmem:[%s10] sm:$0x1]
  %v1024 = vadd.f32 %v1013, %v1015
  %v1025 = vadd.f32 %v1024, %v1018
  %v1026 = vsel %vm350, %v1020, 0.0
  %v1027 = vadd.f32 %v1025, %v1026
  %v1028 = vrot.slane %v1027, 4
  %v1029 = vadd.f32 %v1027, %v1028
  %v1030 = vrot.slane %v1029, 2
  %v1031 = vadd.f32 %v1029, %v1030
  %v1032 = vrot.slane %v1031, 1
  %v1033 = vadd.f32 %v1031, %v1032
  %v1034 = vmul.f32 %v1033, %v930
  %v1035 = vsub.f32 %v1013, %v1034
  %v1036 = vsub.f32 %v1015, %v1034
  %v1037 = vsub.f32 %v1018, %v1034
  %v1038 = vsub.f32 %v1020, %v1034
  %v1039 = vmul.f32 %v1035, %v1035
  %v1040 = vmul.f32 %v1036, %v1036
  %v1041 = vmul.f32 %v1037, %v1037
  %v1042 = vmul.f32 %v1038, %v1038
  %v1043 = vadd.f32 %v1039, %v1040
  %v1044 = vadd.f32 %v1043, %v1041
  %v1045 = vsel %vm350, %v1042, 0.0
  %v1046 = vadd.f32 %v1044, %v1045
  %v1047 = vrot.slane %v1046, 4
  %v1048 = vadd.f32 %v1046, %v1047
  %v1049 = vrot.slane %v1048, 2
  %v1050 = vadd.f32 %v1048, %v1049
  %v1051 = vrot.slane %v1050, 1
  %v1052 = vadd.f32 %v1050, %v1051
  %v1053 = vmul.f32 %v1052, %v930
  %v1054 = vadd.f32 %v1053, 1e-05
  %v1055 = vrsqrt.pop %v1054
  %v1056 = vmul.f32 %v1055, %v1054
  %v1057 = vmul.f32 %v1056, %v1055
  %v1058 = vmul.f32 0.5, %v1057
  %v1059 = vsub.f32 1.5, %v1058
  %v1060 = vmul.f32 %v1055, %v1059
  %vm1061 = vweird.f32 %v1054
  %vm1062 = vweird.f32 %v1055
  %vm1063 = vmor %vm1061, %vm1062
  %v1064 = vsel %vm1063, %v1055, %v1060
  %v1065 = vmul.f32 %v1035, %v1064
  %v1066 = vmul.f32 %v1036, %v1064
  %v1067 = vmul.f32 %v1037, %v1064
  %v1068 = vmul.f32 %v1038, %v1064
  %v1070 = vperm.slane %v1022, 0
  %v1072 = vmul.f32 %v1065, %v1070
  %v1073 = vmul.f32 %v1066, %v1070
  %v1074 = vmul.f32 %v1067, %v1070
  %v1075 = vmul.f32 %v1068, %v1070
  %v1077 = vperm.slane %v1023, 0
  %v1079 = vadd.f32 %v1072, %v1077
  %v1080 = vadd.f32 %v1073, %v1077
  %v1081 = vadd.f32 %v1074, %v1077
  %v1082 = vadd.f32 %v1075, %v1077
  %v1083 = vld [vmem:[%s1] sm:$0xf]
  %v1084 = vld [vmem:[%s1 + $0x4] sm:$0xf]
  %v1085 = vld [vmem:[%s1 + $0x8] sm:$0xf]
  %v1086 = vld [vmem:[%s1 + $0xc] sm:$0x3]
  %v1087 = vld [vmem:[%s11] sm:$0xf]
  %v1088 = vld [vmem:[%s11 + $0x4] sm:$0xf]
  %v1089 = vld [vmem:[%s11 + $0x8] sm:$0xf]
  %v1090 = vld [vmem:[%s11 + $0xc] sm:$0xf]
  %v1091 = vld [vmem:[%s11 + $0x10] sm:$0xf]
  %v1092 = vld [vmem:[%s11 + $0x14] sm:$0xf]
  %v1093 = vld [vmem:[%s11 + $0x18] sm:$0xf]
  %v1094 = vld [vmem:[%s11 + $0x1c] sm:$0xf]
  %v1099 = vunpack.c.l.b16 %v1083
  %v1100 = vunpack.c.l.b16 %v1084
  %v1101 = vunpack.c.l.b16 %v1085
  %v1102 = vunpack.c.l.b16 %v1086
  %v1103 = vpack.c.b16 %v1100, %v1099
  %v1104 = vpack.c.b16 %v1102, %v1101
  %v1113 = vunpack.c.l.b16 %v1087
  %v1114 = vunpack.c.l.b16 %v1088
  %v1115 = vunpack.c.l.b16 %v1089
  %v1116 = vunpack.c.l.b16 %v1090
  %v1117 = vunpack.c.l.b16 %v1091
  %v1118 = vunpack.c.l.b16 %v1092
  %v1119 = vunpack.c.l.b16 %v1093
  %v1120 = vunpack.c.l.b16 %v1094
  %v1121 = vpack.c.b16 %v1114, %v1113
  %v1122 = vpack.c.b16 %v1116, %v1115
  %v1123 = vpack.c.b16 %v1118, %v1117
  %v1124 = vpack.c.b16 %v1120, %v1119
  %v1130 = vsel %vm105, %v1103, 0
  %v1133 = vsel %vm105, %v1104, 0
  %1135 = vmatpush.bf16.msra.mxu0 0
  %1136 = vmatpush.bf16.msra.mxu0 0
  %1137 = vmatpush.bf16.msra.mxu0 0
  %1138 = vmatpush.bf16.msra.mxu0 0
  %1139 = vmatpush.bf16.msra.mxu0 %v1124
  %1140 = vmatpush.bf16.msra.mxu0 %v1123
  %1141 = vmatpush.bf16.msra.mxu0 %v1122
  %1142 = vmatpush.bf16.msra.mxu0 %v1121
  %1143 = vmatmul.bf16.gmra.mxu0 %v1130
  %v1144 = vpop.f32.mrf.mxu0
  %v1145 = vadd.f32 0.0, %v1144
  %v1146 = vpop.f32.mrf.mxu0
  %v1147 = vadd.f32 0.0, %v1146
  %1148 = vmatmul.bf16.gmra.mxu0 %v1133
  %v1149 = vpop.f32.mrf.mxu0
  %v1150 = vadd.f32 0.0, %v1149
  %v1151 = vpop.f32.mrf.mxu0
  %v1152 = vadd.f32 0.0, %v1151
  %1153 = vdwg.mxu0
  %v1154 = vld [vmem:[%s12] sm:$0x1]
  %v1155 = vld [vmem:[%s13] sm:$0x1]
  %v1156 = vadd.f32 %v1145, %v1147
  %v1157 = vadd.f32 %v1156, %v1150
  %v1158 = vsel %vm350, %v1152, 0.0
  %v1159 = vadd.f32 %v1157, %v1158
  %v1160 = vrot.slane %v1159, 4
  %v1161 = vadd.f32 %v1159, %v1160
  %v1162 = vrot.slane %v1161, 2
  %v1163 = vadd.f32 %v1161, %v1162
  %v1164 = vrot.slane %v1163, 1
  %v1165 = vadd.f32 %v1163, %v1164
  %v1166 = vmul.f32 %v1165, %v930
  %v1167 = vsub.f32 %v1145, %v1166
  %v1168 = vsub.f32 %v1147, %v1166
  %v1169 = vsub.f32 %v1150, %v1166
  %v1170 = vsub.f32 %v1152, %v1166
  %v1171 = vmul.f32 %v1167, %v1167
  %v1172 = vmul.f32 %v1168, %v1168
  %v1173 = vmul.f32 %v1169, %v1169
  %v1174 = vmul.f32 %v1170, %v1170
  %v1175 = vadd.f32 %v1171, %v1172
  %v1176 = vadd.f32 %v1175, %v1173
  %v1177 = vsel %vm350, %v1174, 0.0
  %v1178 = vadd.f32 %v1176, %v1177
  %v1179 = vrot.slane %v1178, 4
  %v1180 = vadd.f32 %v1178, %v1179
  %v1181 = vrot.slane %v1180, 2
  %v1182 = vadd.f32 %v1180, %v1181
  %v1183 = vrot.slane %v1182, 1
  %v1184 = vadd.f32 %v1182, %v1183
  %v1185 = vmul.f32 %v1184, %v930
  %v1186 = vadd.f32 %v1185, 1e-05
  %v1187 = vrsqrt.pop %v1186
  %v1188 = vmul.f32 %v1187, %v1186
  %v1189 = vmul.f32 %v1188, %v1187
  %v1190 = vmul.f32 0.5, %v1189
  %v1191 = vsub.f32 1.5, %v1190
  %v1192 = vmul.f32 %v1187, %v1191
  %vm1193 = vweird.f32 %v1186
  %vm1194 = vweird.f32 %v1187
  %vm1195 = vmor %vm1193, %vm1194
  %v1196 = vsel %vm1195, %v1187, %v1192
  %v1197 = vmul.f32 %v1167, %v1196
  %v1198 = vmul.f32 %v1168, %v1196
  %v1199 = vmul.f32 %v1169, %v1196
  %v1200 = vmul.f32 %v1170, %v1196
  %v1202 = vperm.slane %v1154, 0
  %v1204 = vmul.f32 %v1197, %v1202
  %v1205 = vmul.f32 %v1198, %v1202
  %v1206 = vmul.f32 %v1199, %v1202
  %v1207 = vmul.f32 %v1200, %v1202
  %v1209 = vperm.slane %v1155, 0
  %v1211 = vadd.f32 %v1204, %v1209
  %v1212 = vadd.f32 %v1205, %v1209
  %v1213 = vadd.f32 %v1206, %v1209
  %v1214 = vadd.f32 %v1207, %v1209
  %v1215 = vadd.f32 %v1079, %v1211
  %v1216 = vadd.f32 %v1080, %v1212
  %v1217 = vadd.f32 %v1081, %v1213
  %v1218 = vadd.f32 %v1082, %v1214
  %v1219 = vmax.f32 %v1215, 0.0
  %v1220 = vmax.f32 %v1216, 0.0
  %v1221 = vmax.f32 %v1217, 0.0
  %v1222 = vmax.f32 %v1218, 0.0
  %v1223 = vpack.c.bf16 %v1219, %v1219
  %v1224 = vpack.c.bf16 %v1220, %v1220
  %v1225 = vpack.c.bf16 %v1221, %v1221
  %v1226 = vpack.c.bf16 %v1222, %v1222
  %1227 = vst [vmem:[%s14] sm:$0xf] %v1223
  %1228 = vst [vmem:[%s14 + $0x4] sm:$0xf] %v1224
  %1229 = vst [vmem:[%s14 + $0x8] sm:$0xf] %v1225
  %1230 = vst [vmem:[%s14 + $0xc] sm:$0x3] %v1226
  // Predicated region
  $region58: #{resnext_forward.7} parent=0 // pred_check
    _
  $region59: #{resnext_forward.7} parent=0 // pred_check_branch
    %1232 = sbr.rel (0) target = $region61
  $region60: #{resnext_forward.7} parent=0 // pred_region
    _
  $region61: #{resnext_forward.7} parent=0 // pred_fallthru
    _
  // Predicated region
  $region62: #{resnext_forward.7} parent=0 // pred_check
    _
  $region63: #{resnext_forward.7} parent=0 // pred_check_branch
    %1234 = sbr.rel (0) target = $region65
  $region64: #{resnext_forward.7} parent=0 // pred_region
    _
  $region65: #{resnext_forward.7} parent=0 // pred_fallthru
    _

// kernel: resnext_forward.9
$region0: #{resnext_forward.9}
  #allocation0 [shape = 'u32[]', space=smem, size = 0x4, offset = 0x4, fixed_abs, tag = 'smem constant byte address 0x4 - core index']
  #allocation1 [shape = 'u32[72,128]{1,0:T(1,128)}', space=vmem, size = 0x9000, scoped, tag = 'internal scratch']
  %s0 = inlined_call_operand.vmem [shape: bf16[14,256], index: 0, kind: input, shape index: {}]
  %s1 = inlined_call_operand.hbm [shape: bf16[256,128], index: 1, kind: input, shape index: {}]
  %s2 = inlined_call_operand.vmem [shape: f32[1,128], index: 2, kind: input, shape index: {}]
  %s3 = inlined_call_operand.hbm [shape: f32[2,128], index: 3, kind: output, shape index: {}]
  %s4 = sld [smem:[#allocation0]]
  $region26: #{resnext_forward.9} parent=0
    _
  %s6 = ssub.s32 1, %s4
  %s7 = scalar_select 0, %s6, %s4
  $region1: #{resnext_forward.9} parent=0
    #allocation2 [shape = 'u8[65536]{0}', space=vmem, size = 0x10000, scoped, tag = 'input window, operand 1, single buffered']
    #allocation3 [shape = 's32[1]{0}', space=sflag, size = 0x4, scoped, tag = 'scoped memory for resnext_forward.9']
    #allocation4 [shape = 's32[1]{0}', space=sflag, size = 0x4, scoped, tag = 'scoped memory for resnext_forward.9']
    #allocation5 [shape = 'u8[1024]{0}', space=vmem, size = 0x400, scoped, tag = 'output window, operand 0, single buffered']
    %8 = vsyncpa [#allocation3], 0
    %9 = vsyncpa [#allocation4], 0
    // Predicated region
    $region2: #{resnext_forward.9} parent=1 // pred_check
      _
    $region3: #{resnext_forward.9} parent=1 // pred_check_branch
      %11 = sbr.rel (0) target = $region5
    $region4: #{resnext_forward.9} parent=1 // pred_region
      _
    $region5: #{resnext_forward.9} parent=1 // pred_fallthru
      _
    // Predicated region
    $region6: #{resnext_forward.9} parent=1 // pred_check
      _
    $region7: #{resnext_forward.9} parent=1 // pred_check_branch
      %13 = sbr.rel (0) target = $region9
    $region8: #{resnext_forward.9} parent=1 // pred_region
      %15 = vsyncadd [#allocation3], 0
      %s16 = sshll.u32 %s1, 4
      %s17 = int_to_ptr.hbm [resolvable:$true] %s16
      %s18 = sshll.u32 [#allocation2], 4
      %s19 = int_to_ptr.vmem [resolvable:$true] %s18
      %24 = dma.hbm_to_vmem [thread:$0]  %s17, 2048, %s19, [#allocation3], 64, 64, 4
    $region9: #{resnext_forward.9} parent=1 // pred_fallthru
      _
    // Predicated region
    $region10: #{resnext_forward.9} parent=1 // pred_check
      _
    $region11: #{resnext_forward.9} parent=1 // pred_check_branch
      %26 = sbr.rel (0) target = $region13
    $region12: #{resnext_forward.9} parent=1 // pred_region
      _
    $region13: #{resnext_forward.9} parent=1 // pred_fallthru
      _
    // Predicated region
    $region14: #{resnext_forward.9} parent=1 // pred_check
      _
    $region15: #{resnext_forward.9} parent=1 // pred_check_branch
      %28 = sbr.rel (0) target = $region17
    $region16: #{resnext_forward.9} parent=1 // pred_region
      %30 = dma.done [#allocation3], 2048
    $region17: #{resnext_forward.9} parent=1 // pred_fallthru
      _
    %v31 = vld [vmem:[%s0] sm:$0xff]
    %v32 = vld [vmem:[%s0 + $0x8] sm:$0x77]
    %v33 = vunpack.c.l.bf16 %v31
    %v34 = vunpack.c.h.bf16 %v31
    %v35 = vunpack.c.l.bf16 %v32
    %v36 = vunpack.c.h.bf16 %v32
    %v37 = vlaneseq
    %v38 = vshrl.u32 %v37, 7
    %v39 = vlaneseq
    %v40 = vand.u32 %v39, 127
    %v41 = vmul.u32 %v38, 7
    %vm42 = vcmp.ge.s32.totalorder %v40, %v41
    %v43 = vadd.s32 %v38, 1
    %v44 = vmul.u32 %v43, 7
    %vm45 = vcmp.lt.s32.totalorder %v40, %v44
    %vm46 = vmand %vm42, %vm45
    %v47 = vsel %vm46, 0.14285715, 0.0
    %vm48 = vcmask 113664
    %v50 = vsel %vm48, %v47, 0
    %vm52 = vcmask 1045504
    %v54 = vsel %vm52, %v35, 0
    %v57 = vsel %vm52, %v36, 0
    %59 = vmatpush.msra.mxu0 0.0
    %60 = vmatpush.msra.mxu0 0.0
    %61 = vmatpush.msra.mxu0 0.0
    %62 = vmatpush.msra.mxu0 0.0
    %63 = vmatpush.msra.mxu0 0.0
    %64 = vmatpush.msra.mxu0 0.0
    %65 = vmatpush.msra.mxu0 0.0
    %66 = vmatpush.msra.mxu0 0.0
    %67 = vmatpush.msra.mxu0 0.0
    %68 = vmatpush.msra.mxu0 0.0
    %69 = vmatpush.msra.mxu0 0.0
    %70 = vmatpush.msra.mxu0 0.0
    %71 = vmatpush.msra.mxu0 0.0
    %72 = vmatpush.msra.mxu0 0.0
    %73 = vmatpush.msra.mxu0 %v54
    %74 = vmatpush.msra.mxu0 %v33
    %75 = vmatmul.f32.gmra.mxu0 %v50
    %v76 = vpop.f32.mrf.mxu0
    %v77 = vadd.f32 0.0, %v76
    %78 = vdwg.mxu0
    %79 = vmatpush.msra.mxu0 0.0
    %80 = vmatpush.msra.mxu0 0.0
    %81 = vmatpush.msra.mxu0 0.0
    %82 = vmatpush.msra.mxu0 0.0
    %83 = vmatpush.msra.mxu0 0.0
    %84 = vmatpush.msra.mxu0 0.0
    %85 = vmatpush.msra.mxu0 0.0
    %86 = vmatpush.msra.mxu0 0.0
    %87 = vmatpush.msra.mxu0 0.0
    %88 = vmatpush.msra.mxu0 0.0
    %89 = vmatpush.msra.mxu0 0.0
    %90 = vmatpush.msra.mxu0 0.0
    %91 = vmatpush.msra.mxu0 0.0
    %92 = vmatpush.msra.mxu0 0.0
    %93 = vmatpush.msra.mxu0 %v57
    %94 = vmatpush.msra.mxu0 %v34
    %95 = vmatmul.f32.gmra.mxu0 %v50
    %v96 = vpop.f32.mrf.mxu0
    %v97 = vadd.f32 0.0, %v96
    %98 = vdwg.mxu0
    %v99 = vpack.c.bf16 %v77, %v77
    %v100 = vpack.c.bf16 %v97, %v97
    %v101 = vld [vmem:[#allocation2] sm:$0xf]
    %v102 = vld [vmem:[#allocation2 + $0x4] sm:$0xf]
    %v103 = vld [vmem:[#allocation2 + $0x8] sm:$0xf]
    %v104 = vld [vmem:[#allocation2 + $0xc] sm:$0xf]
    %v105 = vld [vmem:[#allocation2 + $0x10] sm:$0xf]
    %v106 = vld [vmem:[#allocation2 + $0x14] sm:$0xf]
    %v107 = vld [vmem:[#allocation2 + $0x18] sm:$0xf]
    %v108 = vld [vmem:[#allocation2 + $0x1c] sm:$0xf]
    %v109 = vld [vmem:[#allocation2 + $0x20] sm:$0xf]
    %v110 = vld [vmem:[#allocation2 + $0x24] sm:$0xf]
    %v111 = vld [vmem:[#allocation2 + $0x28] sm:$0xf]
    %v112 = vld [vmem:[#allocation2 + $0x2c] sm:$0xf]
    %v113 = vld [vmem:[#allocation2 + $0x30] sm:$0xf]
    %v114 = vld [vmem:[#allocation2 + $0x34] sm:$0xf]
    %v115 = vld [vmem:[#allocation2 + $0x38] sm:$0xf]
    %v116 = vld [vmem:[#allocation2 + $0x3c] sm:$0xf]
    %v117 = vld [vmem:[#allocation2 + $0x40] sm:$0xf]
    %v118 = vld [vmem:[#allocation2 + $0x44] sm:$0xf]
    %v119 = vld [vmem:[#allocation2 + $0x48] sm:$0xf]
    %v120 = vld [vmem:[#allocation2 + $0x4c] sm:$0xf]
    %v121 = vld [vmem:[#allocation2 + $0x50] sm:$0xf]
    %v122 = vld [vmem:[#allocation2 + $0x54] sm:$0xf]
    %v123 = vld [vmem:[#allocation2 + $0x58] sm:$0xf]
    %v124 = vld [vmem:[#allocation2 + $0x5c] sm:$0xf]
    %v125 = vld [vmem:[#allocation2 + $0x60] sm:$0xf]
    %v126 = vld [vmem:[#allocation2 + $0x64] sm:$0xf]
    %v127 = vld [vmem:[#allocation2 + $0x68] sm:$0xf]
    %v128 = vld [vmem:[#allocation2 + $0x6c] sm:$0xf]
    %v129 = vld [vmem:[#allocation2 + $0x70] sm:$0xf]
    %v130 = vld [vmem:[#allocation2 + $0x74] sm:$0xf]
    %v131 = vld [vmem:[#allocation2 + $0x78] sm:$0xf]
    %v132 = vld [vmem:[#allocation2 + $0x7c] sm:$0xf]
    %v133 = vld [vmem:[%s2] sm:$0x1]
    %v135 = vperm.slane %v133, 0
    %v169 = vunpack.c.l.b16 %v101
    %v170 = vunpack.c.l.b16 %v102
    %v171 = vunpack.c.l.b16 %v103
    %v172 = vunpack.c.l.b16 %v104
    %v173 = vunpack.c.l.b16 %v105
    %v174 = vunpack.c.l.b16 %v106
    %v175 = vunpack.c.l.b16 %v107
    %v176 = vunpack.c.l.b16 %v108
    %v177 = vunpack.c.l.b16 %v109
    %v178 = vunpack.c.l.b16 %v110
    %v179 = vunpack.c.l.b16 %v111
    %v180 = vunpack.c.l.b16 %v112
    %v181 = vunpack.c.l.b16 %v113
    %v182 = vunpack.c.l.b16 %v114
    %v183 = vunpack.c.l.b16 %v115
    %v184 = vunpack.c.l.b16 %v116
    %v185 = vunpack.c.l.b16 %v117
    %v186 = vunpack.c.l.b16 %v118
    %v187 = vunpack.c.l.b16 %v119
    %v188 = vunpack.c.l.b16 %v120
    %v189 = vunpack.c.l.b16 %v121
    %v190 = vunpack.c.l.b16 %v122
    %v191 = vunpack.c.l.b16 %v123
    %v192 = vunpack.c.l.b16 %v124
    %v193 = vunpack.c.l.b16 %v125
    %v194 = vunpack.c.l.b16 %v126
    %v195 = vunpack.c.l.b16 %v127
    %v196 = vunpack.c.l.b16 %v128
    %v197 = vunpack.c.l.b16 %v129
    %v198 = vunpack.c.l.b16 %v130
    %v199 = vunpack.c.l.b16 %v131
    %v200 = vunpack.c.l.b16 %v132
    %v201 = vpack.c.b16 %v170, %v169
    %v202 = vpack.c.b16 %v172, %v171
    %v203 = vpack.c.b16 %v174, %v173
    %v204 = vpack.c.b16 %v176, %v175
    %v205 = vpack.c.b16 %v178, %v177
    %v206 = vpack.c.b16 %v180, %v179
    %v207 = vpack.c.b16 %v182, %v181
    %v208 = vpack.c.b16 %v184, %v183
    %v209 = vpack.c.b16 %v186, %v185
    %v210 = vpack.c.b16 %v188, %v187
    %v211 = vpack.c.b16 %v190, %v189
    %v212 = vpack.c.b16 %v192, %v191
    %v213 = vpack.c.b16 %v194, %v193
    %v214 = vpack.c.b16 %v196, %v195
    %v215 = vpack.c.b16 %v198, %v197
    %v216 = vpack.c.b16 %v200, %v199
    %233 = vmatpush.bf16.msra.mxu0 %v208
    %234 = vmatpush.bf16.msra.mxu0 %v207
    %235 = vmatpush.bf16.msra.mxu0 %v206
    %236 = vmatpush.bf16.msra.mxu0 %v205
    %237 = vmatpush.bf16.msra.mxu0 %v204
    %238 = vmatpush.bf16.msra.mxu0 %v203
    %239 = vmatpush.bf16.msra.mxu0 %v202
    %240 = vmatpush.bf16.msra.mxu0 %v201
    %241 = vmatmul.bf16.gmra.mxu0 %v99
    %v242 = vpop.f32.mrf.mxu0
    %v243 = vadd.f32 %v135, %v242
    %v244 = vpop.f32.mrf.mxu0
    %245 = vdwg.mxu0
    %246 = vmatpush.bf16.msra.mxu0 %v216
    %247 = vmatpush.bf16.msra.mxu0 %v215
    %248 = vmatpush.bf16.msra.mxu0 %v214
    %249 = vmatpush.bf16.msra.mxu0 %v213
    %250 = vmatpush.bf16.msra.mxu0 %v212
    %251 = vmatpush.bf16.msra.mxu0 %v211
    %252 = vmatpush.bf16.msra.mxu0 %v210
    %253 = vmatpush.bf16.msra.mxu0 %v209
    %254 = vmatmul.bf16.gmra.mxu0 %v100
    %v255 = vpop.f32.mrf.mxu0
    %v256 = vadd.f32 %v243, %v255
    %v257 = vpop.f32.mrf.mxu0
    %258 = vdwg.mxu0
    %259 = vst [vmem:[#allocation5] sm:$0x3] %v256
    // Predicated region
    $region18: #{resnext_forward.9} parent=1 // pred_check
      _
    $region19: #{resnext_forward.9} parent=1 // pred_check_branch
      %261 = sbr.rel (0) target = $region21
    $region20: #{resnext_forward.9} parent=1 // pred_region
      %263 = vsyncadd [#allocation4], 0
      %s265 = sshll.u32 [#allocation5], 4
      %s266 = int_to_ptr.vmem [resolvable:$true] %s265
      %s267 = sshll.u32 %s3, 4
      %s268 = int_to_ptr.hbm [resolvable:$true] %s267
      %270 = dma.vmem_to_hbm [thread:$0]  %s266, 32, %s268, [#allocation4]
    $region21: #{resnext_forward.9} parent=1 // pred_fallthru
      _
    // Predicated region
    $region22: #{resnext_forward.9} parent=1 // pred_check
      _
    $region23: #{resnext_forward.9} parent=1 // pred_check_branch
      %272 = sbr.rel (0) target = $region25
    $region24: #{resnext_forward.9} parent=1 // pred_region
      %274 = dma.done [#allocation4], 32
    $region25: #{resnext_forward.9} parent=1 // pred_fallthru
      _
    %275 = vsyncpa [#allocation3], 1
    %276 = vsyncpa [#allocation4], 1

// kernel: resnext_forward.8
$region0: #{resnext_forward.8}
  #allocation0 [shape = 'u32[]', space=smem, size = 0x4, offset = 0x4, fixed_abs, tag = 'smem constant byte address 0x4 - core index']
  #allocation1 [shape = 'u32[72,128]{1,0:T(1,128)}', space=vmem, size = 0x9000, scoped, tag = 'internal scratch']
  %s0 = inlined_call_operand.vmem [shape: bf16[28,128], index: 0, kind: input, shape index: {}]
  %s1 = inlined_call_operand.vmem [shape: bf16[14,128], index: 1, kind: input, shape index: {}]
  %s2 = inlined_call_operand.vmem [shape: bf16[128,32], index: 2, kind: input, shape index: {}]
  %s3 = inlined_call_operand.vmem [shape: f32[1,32], index: 3, kind: input, shape index: {}]
  %s4 = inlined_call_operand.vmem [shape: f32[1,32], index: 4, kind: input, shape index: {}]
  %s5 = inlined_call_operand.vmem [shape: bf16[6,16,16], index: 5, kind: input, shape index: {}]
  %s6 = inlined_call_operand.vmem [shape: f32[1,32], index: 6, kind: input, shape index: {}]
  %s7 = inlined_call_operand.vmem [shape: f32[1,32], index: 7, kind: input, shape index: {}]
  %s8 = inlined_call_operand.vmem [shape: bf16[32,256], index: 8, kind: input, shape index: {}]
  %s9 = inlined_call_operand.vmem [shape: f32[1,256], index: 9, kind: input, shape index: {}]
  %s10 = inlined_call_operand.vmem [shape: f32[1,256], index: 10, kind: input, shape index: {}]
  %s11 = inlined_call_operand.vmem [shape: bf16[128,256], index: 11, kind: input, shape index: {}]
  %s12 = inlined_call_operand.vmem [shape: f32[1,256], index: 12, kind: input, shape index: {}]
  %s13 = inlined_call_operand.vmem [shape: f32[1,256], index: 13, kind: input, shape index: {}]
  %s14 = inlined_call_operand.vmem [shape: bf16[14,256], index: 14, kind: output, shape index: {}]
  %s15 = sld [smem:[#allocation0]]
  $region66: #{resnext_forward.8} parent=0
    _
  %s17 = ssub.s32 1, %s15
  %s18 = scalar_select 0, %s17, %s15
  // Predicated region
  $region2: #{resnext_forward.8} parent=0 // pred_check
    _
  $region3: #{resnext_forward.8} parent=0 // pred_check_branch
    %20 = sbr.rel (0) target = $region5
  $region4: #{resnext_forward.8} parent=0 // pred_region
    _
  $region5: #{resnext_forward.8} parent=0 // pred_fallthru
    _
  // Predicated region
  $region6: #{resnext_forward.8} parent=0 // pred_check
    _
  $region7: #{resnext_forward.8} parent=0 // pred_check_branch
    %22 = sbr.rel (0) target = $region9
  $region8: #{resnext_forward.8} parent=0 // pred_region
    _
  $region9: #{resnext_forward.8} parent=0 // pred_fallthru
    _
  // Predicated region
  $region10: #{resnext_forward.8} parent=0 // pred_check
    _
  $region11: #{resnext_forward.8} parent=0 // pred_check_branch
    %24 = sbr.rel (0) target = $region13
  $region12: #{resnext_forward.8} parent=0 // pred_region
    _
  $region13: #{resnext_forward.8} parent=0 // pred_fallthru
    _
  // Predicated region
  $region14: #{resnext_forward.8} parent=0 // pred_check
    _
  $region15: #{resnext_forward.8} parent=0 // pred_check_branch
    %26 = sbr.rel (0) target = $region17
  $region16: #{resnext_forward.8} parent=0 // pred_region
    _
  $region17: #{resnext_forward.8} parent=0 // pred_fallthru
    _
  // Predicated region
  $region18: #{resnext_forward.8} parent=0 // pred_check
    _
  $region19: #{resnext_forward.8} parent=0 // pred_check_branch
    %28 = sbr.rel (0) target = $region21
  $region20: #{resnext_forward.8} parent=0 // pred_region
    _
  $region21: #{resnext_forward.8} parent=0 // pred_fallthru
    _
  // Predicated region
  $region22: #{resnext_forward.8} parent=0 // pred_check
    _
  $region23: #{resnext_forward.8} parent=0 // pred_check_branch
    %30 = sbr.rel (0) target = $region25
  $region24: #{resnext_forward.8} parent=0 // pred_region
    _
  $region25: #{resnext_forward.8} parent=0 // pred_fallthru
    _
  // Predicated region
  $region26: #{resnext_forward.8} parent=0 // pred_check
    _
  $region27: #{resnext_forward.8} parent=0 // pred_check_branch
    %32 = sbr.rel (0) target = $region29
  $region28: #{resnext_forward.8} parent=0 // pred_region
    _
  $region29: #{resnext_forward.8} parent=0 // pred_fallthru
    _
  // Predicated region
  $region30: #{resnext_forward.8} parent=0 // pred_check
    _
  $region31: #{resnext_forward.8} parent=0 // pred_check_branch
    %34 = sbr.rel (0) target = $region33
  $region32: #{resnext_forward.8} parent=0 // pred_region
    _
  $region33: #{resnext_forward.8} parent=0 // pred_fallthru
    _
  // Predicated region
  $region34: #{resnext_forward.8} parent=0 // pred_check
    _
  $region35: #{resnext_forward.8} parent=0 // pred_check_branch
    %36 = sbr.rel (0) target = $region37
  $region36: #{resnext_forward.8} parent=0 // pred_region
    _
  $region37: #{resnext_forward.8} parent=0 // pred_fallthru
    _
  // Predicated region
  $region38: #{resnext_forward.8} parent=0 // pred_check
    _
  $region39: #{resnext_forward.8} parent=0 // pred_check_branch
    %38 = sbr.rel (0) target = $region41
  $region40: #{resnext_forward.8} parent=0 // pred_region
    _
  $region41: #{resnext_forward.8} parent=0 // pred_fallthru
    _
  // Predicated region
  $region42: #{resnext_forward.8} parent=0 // pred_check
    _
  $region43: #{resnext_forward.8} parent=0 // pred_check_branch
    %40 = sbr.rel (0) target = $region45
  $region44: #{resnext_forward.8} parent=0 // pred_region
    _
  $region45: #{resnext_forward.8} parent=0 // pred_fallthru
    _
  // Predicated region
  $region46: #{resnext_forward.8} parent=0 // pred_check
    _
  $region47: #{resnext_forward.8} parent=0 // pred_check_branch
    %42 = sbr.rel (0) target = $region49
  $region48: #{resnext_forward.8} parent=0 // pred_region
    _
  $region49: #{resnext_forward.8} parent=0 // pred_fallthru
    _
  // Predicated region
  $region50: #{resnext_forward.8} parent=0 // pred_check
    _
  $region51: #{resnext_forward.8} parent=0 // pred_check_branch
    %44 = sbr.rel (0) target = $region53
  $region52: #{resnext_forward.8} parent=0 // pred_region
    _
  $region53: #{resnext_forward.8} parent=0 // pred_fallthru
    _
  // Predicated region
  $region54: #{resnext_forward.8} parent=0 // pred_check
    _
  $region55: #{resnext_forward.8} parent=0 // pred_check_branch
    %46 = sbr.rel (0) target = $region57
  $region56: #{resnext_forward.8} parent=0 // pred_region
    _
  $region57: #{resnext_forward.8} parent=0 // pred_fallthru
    _
  %v48 = vld [vmem:[%s0] sm:$0xf]
  %v49 = vld [vmem:[%s0 + $0x4] sm:$0xf]
  %v50 = vld [vmem:[%s0 + $0x8] sm:$0xf]
  %v51 = vld [vmem:[%s0 + $0xc] sm:$0x3]
  %v52 = vld [vmem:[%s2] sm:$0xf]
  %v53 = vld [vmem:[%s2 + $0x4] sm:$0xf]
  %v54 = vld [vmem:[%s2 + $0x8] sm:$0xf]
  %v55 = vld [vmem:[%s2 + $0xc] sm:$0xf]
  %v56 = vld [vmem:[%s2 + $0x10] sm:$0xf]
  %v57 = vld [vmem:[%s2 + $0x14] sm:$0xf]
  %v58 = vld [vmem:[%s2 + $0x18] sm:$0xf]
  %v59 = vld [vmem:[%s2 + $0x1c] sm:$0xf]
  %v60 = vld [vmem:[%s2 + $0x20] sm:$0xf]
  %v61 = vld [vmem:[%s2 + $0x24] sm:$0xf]
  %v62 = vld [vmem:[%s2 + $0x28] sm:$0xf]
  %v63 = vld [vmem:[%s2 + $0x2c] sm:$0xf]
  %v64 = vld [vmem:[%s2 + $0x30] sm:$0xf]
  %v65 = vld [vmem:[%s2 + $0x34] sm:$0xf]
  %v66 = vld [vmem:[%s2 + $0x38] sm:$0xf]
  %v67 = vld [vmem:[%s2 + $0x3c] sm:$0xf]
  %v72 = vunpack.c.l.b16 %v48
  %v73 = vunpack.c.l.b16 %v49
  %v74 = vunpack.c.l.b16 %v50
  %v75 = vunpack.c.l.b16 %v51
  %v76 = vpack.c.b16 %v73, %v72
  %v77 = vpack.c.b16 %v75, %v74
  %v96 = vunpack.c.l.b16 %v52
  %v97 = vunpack.c.l.b16 %v53
  %v98 = vunpack.c.l.b16 %v54
  %v99 = vunpack.c.l.b16 %v55
  %v100 = vunpack.c.l.b16 %v56
  %v101 = vunpack.c.l.b16 %v57
  %v102 = vunpack.c.l.b16 %v58
  %v103 = vunpack.c.l.b16 %v59
  %v104 = vunpack.c.l.b16 %v60
  %v105 = vunpack.c.l.b16 %v61
  %v106 = vunpack.c.l.b16 %v62
  %v107 = vunpack.c.l.b16 %v63
  %v108 = vunpack.c.l.b16 %v64
  %v109 = vunpack.c.l.b16 %v65
  %v110 = vunpack.c.l.b16 %v66
  %v111 = vunpack.c.l.b16 %v67
  %v112 = vpack.c.b16 %v97, %v96
  %v113 = vpack.c.b16 %v99, %v98
  %v114 = vpack.c.b16 %v101, %v100
  %v115 = vpack.c.b16 %v103, %v102
  %v116 = vpack.c.b16 %v105, %v104
  %v117 = vpack.c.b16 %v107, %v106
  %v118 = vpack.c.b16 %v109, %v108
  %v119 = vpack.c.b16 %v111, %v110
  %128 = vmatpush.bf16.msra.mxu0 %v119
  %129 = vmatpush.bf16.msra.mxu0 %v118
  %130 = vmatpush.bf16.msra.mxu0 %v117
  %131 = vmatpush.bf16.msra.mxu0 %v116
  %132 = vmatpush.bf16.msra.mxu0 %v115
  %133 = vmatpush.bf16.msra.mxu0 %v114
  %134 = vmatpush.bf16.msra.mxu0 %v113
  %135 = vmatpush.bf16.msra.mxu0 %v112
  %136 = vmatmul.bf16.gmra.mxu0 %v76
  %v137 = vpop.f32.mrf.mxu0
  %v138 = vadd.f32 0.0, %v137
  %v139 = vpop.f32.mrf.mxu0
  %v140 = vadd.f32 0.0, %v139
  %141 = vmatmul.bf16.gmra.mxu0 %v77
  %v142 = vpop.f32.mrf.mxu0
  %v143 = vadd.f32 0.0, %v142
  %v144 = vpop.f32.mrf.mxu0
  %v145 = vadd.f32 0.0, %v144
  %146 = vdwg.mxu0
  %v147 = vld [vmem:[%s3] sm:$0x1]
  %v148 = vld [vmem:[%s4] sm:$0x1]
  %vm149 = vcmask 261120
  %v150 = vsel %vm149, %v138, 0.0
  %v151 = vsel %vm149, %v140, 0.0
  %v152 = vadd.f32 %v150, %v151
  %v153 = vsel %vm149, %v143, 0.0
  %v154 = vadd.f32 %v152, %v153
  %vm155 = vcmask 257024
  %v156 = vsel %vm155, %v145, 0.0
  %v157 = vadd.f32 %v154, %v156
  %v158 = vrot.slane %v157, 4
  %v159 = vadd.f32 %v157, %v158
  %v160 = vrot.slane %v159, 2
  %v161 = vadd.f32 %v159, %v160
  %v162 = vrot.slane %v161, 1
  %v163 = vadd.f32 %v161, %v162
  %v164 = vrcp.pop 28.0
  %v165 = vmul.f32 28.0, %v164
  %v166 = vsub.f32 1.0, %v165
  %v167 = vmul.f32 %v164, %v166
  %v168 = vadd.f32 %v164, %v167
  %vm169 = vweird.f32 %v164
  %v170 = vsel %vm169, %v164, %v168
  %v171 = vmul.f32 %v163, %v170
  %v172 = vsub.f32 %v138, %v171
  %v173 = vsub.f32 %v140, %v171
  %v174 = vsub.f32 %v143, %v171
  %v175 = vsub.f32 %v145, %v171
  %v176 = vmul.f32 %v172, %v172
  %v177 = vmul.f32 %v173, %v173
  %v178 = vmul.f32 %v174, %v174
  %v179 = vmul.f32 %v175, %v175
  %v180 = vsel %vm149, %v176, 0.0
  %v181 = vsel %vm149, %v177, 0.0
  %v182 = vadd.f32 %v180, %v181
  %v183 = vsel %vm149, %v178, 0.0
  %v184 = vadd.f32 %v182, %v183
  %v185 = vsel %vm155, %v179, 0.0
  %v186 = vadd.f32 %v184, %v185
  %v187 = vrot.slane %v186, 4
  %v188 = vadd.f32 %v186, %v187
  %v189 = vrot.slane %v188, 2
  %v190 = vadd.f32 %v188, %v189
  %v191 = vrot.slane %v190, 1
  %v192 = vadd.f32 %v190, %v191
  %v193 = vmul.f32 %v192, %v170
  %v194 = vadd.f32 %v193, 1e-05
  %v195 = vrsqrt.pop %v194
  %v196 = vmul.f32 %v195, %v194
  %v197 = vmul.f32 %v196, %v195
  %v198 = vmul.f32 0.5, %v197
  %v199 = vsub.f32 1.5, %v198
  %v200 = vmul.f32 %v195, %v199
  %vm201 = vweird.f32 %v194
  %vm202 = vweird.f32 %v195
  %vm203 = vmor %vm201, %vm202
  %v204 = vsel %vm203, %v195, %v200
  %v205 = vmul.f32 %v172, %v204
  %v206 = vmul.f32 %v173, %v204
  %v207 = vmul.f32 %v174, %v204
  %v208 = vmul.f32 %v175, %v204
  %v210 = vperm.slane %v147, 0
  %v212 = vmul.f32 %v205, %v210
  %v213 = vmul.f32 %v206, %v210
  %v214 = vmul.f32 %v207, %v210
  %v215 = vmul.f32 %v208, %v210
  %v217 = vperm.slane %v148, 0
  %v219 = vadd.f32 %v212, %v217
  %v220 = vadd.f32 %v213, %v217
  %v221 = vadd.f32 %v214, %v217
  %v222 = vadd.f32 %v215, %v217
  %v223 = vmax.f32 %v219, 0.0
  %v224 = vmax.f32 %v220, 0.0
  %v225 = vmax.f32 %v221, 0.0
  %v226 = vmax.f32 %v222, 0.0
  %vm229 = vcmask 1040384
  %v230 = vrot.slane %v223, 7
  %v231 = vrot.slane %v224, 7
  %v232 = vsel %vm229, %v230, %v231
  %vm237 = vcmask 1042432
  %v238 = vrot.slane %v224, 5
  %v239 = vrot.slane %v225, 5
  %v240 = vsel %vm237, %v238, %v239
  %v241 = vrot.slane %v226, 5
  %v242 = vsel %vm237, %v239, %v241
  %v245 = vsel %vm229, 0.0, %v230
  %vm246 = vcmask 1046528
  %v247 = vsel %vm246, %v232, 0.0
  %v248 = vsel %vm229, 0.0, %v240
  %v249 = vsel %vm246, %v242, 0.0
  %v250 = vpack.c.bf16 %v245, %v245
  %v251 = vpack.c.bf16 %v247, %v247
  %v252 = vpack.c.bf16 %v248, %v248
  %v253 = vpack.c.bf16 %v249, %v249
  %v254 = vlaneseq
  %v255 = vshrl.u32 %v254, 7
  %v256 = vlaneseq
  %v257 = vand.u32 %v256, 127
  %v258 = vmul.u32 %v255, 2
  %vm259 = vcmp.eq.s32.totalorder %v257, %v258
  %v260 = vsel %vm259, 1, 0
  %v261 = vcvt.s32.f32 %v260
  %v262 = vld [vmem:[%s5] sm:$0xf]
  %v263 = vld [vmem:[%s5 + $0x4] sm:$0xf]
  %v268 = vunpack.c.l.b16 %v250
  %v269 = vunpack.c.l.b16 %v251
  %v270 = vunpack.c.l.b16 %v252
  %v271 = vunpack.c.l.b16 %v253
  %v272 = vpack.c.b16 %v269, %v268
  %v273 = vpack.c.b16 %v271, %v270
  %v276 = vunpack.c.l.b16 %v262
  %v277 = vunpack.c.l.b16 %v263
  %v278 = vpack.c.b16 %v277, %v276
  %vm280 = vcmask 130048
  %v282 = vsel %vm280, %v272, 0
  %v285 = vsel %vm280, %v273, 0
  %287 = vmatpush.bf16.msra.mxu0 0
  %288 = vmatpush.bf16.msra.mxu0 0
  %289 = vmatpush.bf16.msra.mxu0 0
  %290 = vmatpush.bf16.msra.mxu0 0
  %291 = vmatpush.bf16.msra.mxu0 0
  %292 = vmatpush.bf16.msra.mxu0 0
  %293 = vmatpush.bf16.msra.mxu0 0
  %294 = vmatpush.bf16.msra.mxu0 %v278
  %295 = vmatmul.bf16.gmra.mxu0 %v282
  %v296 = vpop.f32.mrf.mxu0
  %v297 = vadd.f32 0.0, %v296
  %v298 = vpop.f32.mrf.mxu0
  %v299 = vadd.f32 0.0, %v298
  %300 = vmatmul.bf16.gmra.mxu0 %v285
  %v301 = vpop.f32.mrf.mxu0
  %v302 = vadd.f32 0.0, %v301
  %v303 = vpop.f32.mrf.mxu0
  %v304 = vadd.f32 0.0, %v303
  %305 = vdwg.mxu0
  %s306 = scalar_lea.vmem %s5, 8
  %v307 = vld [vmem:[%s306] sm:$0xf]
  %v308 = vld [vmem:[%s306 + $0x4] sm:$0xf]
  %v311 = vunpack.c.l.b16 %v307
  %v312 = vunpack.c.l.b16 %v308
  %v313 = vpack.c.b16 %v312, %v311
  %315 = vmatpush.bf16.msra.mxu0 0
  %316 = vmatpush.bf16.msra.mxu0 0
  %317 = vmatpush.bf16.msra.mxu0 0
  %318 = vmatpush.bf16.msra.mxu0 0
  %319 = vmatpush.bf16.msra.mxu0 0
  %320 = vmatpush.bf16.msra.mxu0 0
  %321 = vmatpush.bf16.msra.mxu0 0
  %322 = vmatpush.bf16.msra.mxu0 %v313
  %323 = vmatmul.bf16.gmra.mxu0 %v282
  %v324 = vpop.f32.mrf.mxu0
  %v325 = vadd.f32 0.0, %v324
  %v326 = vpop.f32.mrf.mxu0
  %v327 = vadd.f32 0.0, %v326
  %328 = vmatmul.bf16.gmra.mxu0 %v285
  %v329 = vpop.f32.mrf.mxu0
  %v330 = vadd.f32 0.0, %v329
  %v331 = vpop.f32.mrf.mxu0
  %v332 = vadd.f32 0.0, %v331
  %333 = vdwg.mxu0
  %s334 = scalar_lea.vmem %s5, 16
  %v335 = vld [vmem:[%s334] sm:$0xf]
  %v336 = vld [vmem:[%s334 + $0x4] sm:$0xf]
  %v339 = vunpack.c.l.b16 %v335
  %v340 = vunpack.c.l.b16 %v336
  %v341 = vpack.c.b16 %v340, %v339
  %343 = vmatpush.bf16.msra.mxu0 0
  %344 = vmatpush.bf16.msra.mxu0 0
  %345 = vmatpush.bf16.msra.mxu0 0
  %346 = vmatpush.bf16.msra.mxu0 0
  %347 = vmatpush.bf16.msra.mxu0 0
  %348 = vmatpush.bf16.msra.mxu0 0
  %349 = vmatpush.bf16.msra.mxu0 0
  %350 = vmatpush.bf16.msra.mxu0 %v341
  %351 = vmatmul.bf16.gmra.mxu0 %v282
  %v352 = vpop.f32.mrf.mxu0
  %v353 = vadd.f32 0.0, %v352
  %v354 = vpop.f32.mrf.mxu0
  %v355 = vadd.f32 0.0, %v354
  %356 = vmatmul.bf16.gmra.mxu0 %v285
  %v357 = vpop.f32.mrf.mxu0
  %v358 = vadd.f32 0.0, %v357
  %v359 = vpop.f32.mrf.mxu0
  %v360 = vadd.f32 0.0, %v359
  %361 = vdwg.mxu0
  %v364 = vrot.slane %v325, 1
  %v365 = vrot.slane %v327, 1
  %v366 = vsel %vm246, %v364, %v365
  %v369 = vadd.f32 %v297, %v366
  %v370 = vadd.f32 %v299, %v365
  %vm373 = vcmask 1045504
  %v374 = vrot.slane %v353, 2
  %v375 = vrot.slane %v355, 2
  %v376 = vsel %vm373, %v374, %v375
  %v379 = vadd.f32 %v369, %v376
  %v380 = vadd.f32 %v370, %v375
  %vm381 = vcmask 113664
  %v383 = vsel %vm381, %v261, 0
  %v386 = vsel %vm373, %v380, 0
  %388 = vmatpush.msra.mxu0 0.0
  %389 = vmatpush.msra.mxu0 0.0
  %390 = vmatpush.msra.mxu0 0.0
  %391 = vmatpush.msra.mxu0 0.0
  %392 = vmatpush.msra.mxu0 0.0
  %393 = vmatpush.msra.mxu0 0.0
  %394 = vmatpush.msra.mxu0 0.0
  %395 = vmatpush.msra.mxu0 0.0
  %396 = vmatpush.msra.mxu0 0.0
  %397 = vmatpush.msra.mxu0 0.0
  %398 = vmatpush.msra.mxu0 0.0
  %399 = vmatpush.msra.mxu0 0.0
  %400 = vmatpush.msra.mxu0 0.0
  %401 = vmatpush.msra.mxu0 0.0
  %402 = vmatpush.msra.mxu0 %v386
  %403 = vmatpush.msra.mxu0 %v379
  %404 = vmatmul.f32.gmra.mxu0 %v383
  %v405 = vpop.f32.mrf.mxu0
  %v406 = vadd.f32 0.0, %v405
  %407 = vdwg.mxu0
  %v410 = vrot.slane %v330, 1
  %v411 = vrot.slane %v332, 1
  %v412 = vsel %vm246, %v410, %v411
  %v415 = vadd.f32 %v302, %v412
  %v416 = vadd.f32 %v304, %v411
  %v419 = vrot.slane %v358, 2
  %v420 = vrot.slane %v360, 2
  %v421 = vsel %vm373, %v419, %v420
  %v424 = vadd.f32 %v415, %v421
  %v425 = vadd.f32 %v416, %v420
  %v427 = vsel %vm373, %v425, 0
  %429 = vmatpush.msra.mxu0 0.0
  %430 = vmatpush.msra.mxu0 0.0
  %431 = vmatpush.msra.mxu0 0.0
  %432 = vmatpush.msra.mxu0 0.0
  %433 = vmatpush.msra.mxu0 0.0
  %434 = vmatpush.msra.mxu0 0.0
  %435 = vmatpush.msra.mxu0 0.0
  %436 = vmatpush.msra.mxu0 0.0
  %437 = vmatpush.msra.mxu0 0.0
  %438 = vmatpush.msra.mxu0 0.0
  %439 = vmatpush.msra.mxu0 0.0
  %440 = vmatpush.msra.mxu0 0.0
  %441 = vmatpush.msra.mxu0 0.0
  %442 = vmatpush.msra.mxu0 0.0
  %443 = vmatpush.msra.mxu0 %v427
  %444 = vmatpush.msra.mxu0 %v424
  %445 = vmatmul.f32.gmra.mxu0 %v383
  %v446 = vpop.f32.mrf.mxu0
  %v447 = vadd.f32 0.0, %v446
  %448 = vdwg.mxu0
  %s449 = scalar_lea.vmem %s5, 24
  %v450 = vld [vmem:[%s449] sm:$0xf]
  %v451 = vld [vmem:[%s449 + $0x4] sm:$0xf]
  %452 = vrot.lane.b32.xlu0 %v272, 112
  %v453 = vpop.permute.xlu0 %452
  %454 = vrot.lane.b32.xlu0 %v273, 112
  %v455 = vpop.permute.xlu0 %454
  %v458 = vunpack.c.l.b16 %v450
  %v459 = vunpack.c.l.b16 %v451
  %v460 = vpack.c.b16 %v459, %v458
  %v463 = vsel %vm280, %v453, 0
  %v466 = vsel %vm280, %v455, 0
  %468 = vmatpush.bf16.msra.mxu0 0
  %469 = vmatpush.bf16.msra.mxu0 0
  %470 = vmatpush.bf16.msra.mxu0 0
  %471 = vmatpush.bf16.msra.mxu0 0
  %472 = vmatpush.bf16.msra.mxu0 0
  %473 = vmatpush.bf16.msra.mxu0 0
  %474 = vmatpush.bf16.msra.mxu0 0
  %475 = vmatpush.bf16.msra.mxu0 %v460
  %476 = vmatmul.bf16.gmra.mxu0 %v463
  %v477 = vpop.f32.mrf.mxu0
  %v478 = vadd.f32 0.0, %v477
  %v479 = vpop.f32.mrf.mxu0
  %v480 = vadd.f32 0.0, %v479
  %481 = vmatmul.bf16.gmra.mxu0 %v466
  %v482 = vpop.f32.mrf.mxu0
  %v483 = vadd.f32 0.0, %v482
  %v484 = vpop.f32.mrf.mxu0
  %v485 = vadd.f32 0.0, %v484
  %486 = vdwg.mxu0
  %s487 = scalar_lea.vmem %s5, 32
  %v488 = vld [vmem:[%s487] sm:$0xf]
  %v489 = vld [vmem:[%s487 + $0x4] sm:$0xf]
  %v492 = vunpack.c.l.b16 %v488
  %v493 = vunpack.c.l.b16 %v489
  %v494 = vpack.c.b16 %v493, %v492
  %496 = vmatpush.bf16.msra.mxu0 0
  %497 = vmatpush.bf16.msra.mxu0 0
  %498 = vmatpush.bf16.msra.mxu0 0
  %499 = vmatpush.bf16.msra.mxu0 0
  %500 = vmatpush.bf16.msra.mxu0 0
  %501 = vmatpush.bf16.msra.mxu0 0
  %502 = vmatpush.bf16.msra.mxu0 0
  %503 = vmatpush.bf16.msra.mxu0 %v494
  %504 = vmatmul.bf16.gmra.mxu0 %v463
  %v505 = vpop.f32.mrf.mxu0
  %v506 = vadd.f32 0.0, %v505
  %v507 = vpop.f32.mrf.mxu0
  %v508 = vadd.f32 0.0, %v507
  %509 = vmatmul.bf16.gmra.mxu0 %v466
  %v510 = vpop.f32.mrf.mxu0
  %v511 = vadd.f32 0.0, %v510
  %v512 = vpop.f32.mrf.mxu0
  %v513 = vadd.f32 0.0, %v512
  %514 = vdwg.mxu0
  %s515 = scalar_lea.vmem %s5, 40
  %v516 = vld [vmem:[%s515] sm:$0xf]
  %v517 = vld [vmem:[%s515 + $0x4] sm:$0xf]
  %v520 = vunpack.c.l.b16 %v516
  %v521 = vunpack.c.l.b16 %v517
  %v522 = vpack.c.b16 %v521, %v520
  %524 = vmatpush.bf16.msra.mxu0 0
  %525 = vmatpush.bf16.msra.mxu0 0
  %526 = vmatpush.bf16.msra.mxu0 0
  %527 = vmatpush.bf16.msra.mxu0 0
  %528 = vmatpush.bf16.msra.mxu0 0
  %529 = vmatpush.bf16.msra.mxu0 0
  %530 = vmatpush.bf16.msra.mxu0 0
  %531 = vmatpush.bf16.msra.mxu0 %v522
  %532 = vmatmul.bf16.gmra.mxu0 %v463
  %v533 = vpop.f32.mrf.mxu0
  %v534 = vadd.f32 0.0, %v533
  %v535 = vpop.f32.mrf.mxu0
  %v536 = vadd.f32 0.0, %v535
  %537 = vmatmul.bf16.gmra.mxu0 %v466
  %v538 = vpop.f32.mrf.mxu0
  %v539 = vadd.f32 0.0, %v538
  %v540 = vpop.f32.mrf.mxu0
  %v541 = vadd.f32 0.0, %v540
  %542 = vdwg.mxu0
  %v545 = vrot.slane %v506, 1
  %v546 = vrot.slane %v508, 1
  %v547 = vsel %vm246, %v545, %v546
  %v550 = vadd.f32 %v478, %v547
  %v551 = vadd.f32 %v480, %v546
  %v554 = vrot.slane %v534, 2
  %v555 = vrot.slane %v536, 2
  %v556 = vsel %vm373, %v554, %v555
  %v559 = vadd.f32 %v550, %v556
  %v560 = vadd.f32 %v551, %v555
  %v562 = vsel %vm373, %v560, 0
  %564 = vmatpush.msra.mxu0 0.0
  %565 = vmatpush.msra.mxu0 0.0
  %566 = vmatpush.msra.mxu0 0.0
  %567 = vmatpush.msra.mxu0 0.0
  %568 = vmatpush.msra.mxu0 0.0
  %569 = vmatpush.msra.mxu0 0.0
  %570 = vmatpush.msra.mxu0 0.0
  %571 = vmatpush.msra.mxu0 0.0
  %572 = vmatpush.msra.mxu0 0.0
  %573 = vmatpush.msra.mxu0 0.0
  %574 = vmatpush.msra.mxu0 0.0
  %575 = vmatpush.msra.mxu0 0.0
  %576 = vmatpush.msra.mxu0 0.0
  %577 = vmatpush.msra.mxu0 0.0
  %578 = vmatpush.msra.mxu0 %v562
  %579 = vmatpush.msra.mxu0 %v559
  %580 = vmatmul.f32.gmra.mxu0 %v383
  %v581 = vpop.f32.mrf.mxu0
  %v582 = vadd.f32 0.0, %v581
  %583 = vdwg.mxu0
  %v586 = vrot.slane %v511, 1
  %v587 = vrot.slane %v513, 1
  %v588 = vsel %vm246, %v586, %v587
  %v591 = vadd.f32 %v483, %v588
  %v592 = vadd.f32 %v485, %v587
  %v595 = vrot.slane %v539, 2
  %v596 = vrot.slane %v541, 2
  %v597 = vsel %vm373, %v595, %v596
  %v600 = vadd.f32 %v591, %v597
  %v601 = vadd.f32 %v592, %v596
  %v603 = vsel %vm373, %v601, 0
  %605 = vmatpush.msra.mxu0 0.0
  %606 = vmatpush.msra.mxu0 0.0
  %607 = vmatpush.msra.mxu0 0.0
  %608 = vmatpush.msra.mxu0 0.0
  %609 = vmatpush.msra.mxu0 0.0
  %610 = vmatpush.msra.mxu0 0.0
  %611 = vmatpush.msra.mxu0 0.0
  %612 = vmatpush.msra.mxu0 0.0
  %613 = vmatpush.msra.mxu0 0.0
  %614 = vmatpush.msra.mxu0 0.0
  %615 = vmatpush.msra.mxu0 0.0
  %616 = vmatpush.msra.mxu0 0.0
  %617 = vmatpush.msra.mxu0 0.0
  %618 = vmatpush.msra.mxu0 0.0
  %619 = vmatpush.msra.mxu0 %v603
  %620 = vmatpush.msra.mxu0 %v600
  %621 = vmatmul.f32.gmra.mxu0 %v383
  %v622 = vpop.f32.mrf.mxu0
  %v623 = vadd.f32 0.0, %v622
  %624 = vdwg.mxu0
  %626 = vrot.lane.b32.xlu0 %v582, 16
  %v627 = vpop.permute.xlu0 %626
  %v629 = vsel %vm280, %v406, %v627
  %631 = vrot.lane.b32.xlu0 %v623, 16
  %v632 = vpop.permute.xlu0 %631
  %v634 = vsel %vm280, %v447, %v632
  %v636 = vrot.slane %v634, 1
  %v638 = vsel %vm246, %v629, %v636
  %v639 = vld [vmem:[%s6] sm:$0x1]
  %v640 = vld [vmem:[%s7] sm:$0x1]
  %v641 = vsel %vm149, %v638, 0.0
  %vm642 = vcmask 259072
  %v643 = vsel %vm642, %v636, 0.0
  %v644 = vadd.f32 %v641, %v643
  %v645 = vrot.slane %v644, 4
  %v646 = vadd.f32 %v644, %v645
  %v647 = vrot.slane %v646, 2
  %v648 = vadd.f32 %v646, %v647
  %v649 = vrot.slane %v648, 1
  %v650 = vadd.f32 %v648, %v649
  %v651 = vrcp.pop 14.0
  %v652 = vmul.f32 14.0, %v651
  %v653 = vsub.f32 1.0, %v652
  %v654 = vmul.f32 %v651, %v653
  %v655 = vadd.f32 %v651, %v654
  %vm656 = vweird.f32 %v651
  %v657 = vsel %vm656, %v651, %v655
  %v658 = vmul.f32 %v650, %v657
  %v659 = vsub.f32 %v638, %v658
  %v660 = vsub.f32 %v636, %v658
  %v661 = vmul.f32 %v659, %v659
  %v662 = vmul.f32 %v660, %v660
  %v663 = vsel %vm149, %v661, 0.0
  %v664 = vsel %vm642, %v662, 0.0
  %v665 = vadd.f32 %v663, %v664
  %v666 = vrot.slane %v665, 4
  %v667 = vadd.f32 %v665, %v666
  %v668 = vrot.slane %v667, 2
  %v669 = vadd.f32 %v667, %v668
  %v670 = vrot.slane %v669, 1
  %v671 = vadd.f32 %v669, %v670
  %v672 = vmul.f32 %v671, %v657
  %v673 = vadd.f32 %v672, 1e-05
  %v674 = vrsqrt.pop %v673
  %v675 = vmul.f32 %v674, %v673
  %v676 = vmul.f32 %v675, %v674
  %v677 = vmul.f32 0.5, %v676
  %v678 = vsub.f32 1.5, %v677
  %v679 = vmul.f32 %v674, %v678
  %vm680 = vweird.f32 %v673
  %vm681 = vweird.f32 %v674
  %vm682 = vmor %vm680, %vm681
  %v683 = vsel %vm682, %v674, %v679
  %v684 = vmul.f32 %v659, %v683
  %v685 = vmul.f32 %v660, %v683
  %v687 = vperm.slane %v639, 0
  %v689 = vmul.f32 %v684, %v687
  %v690 = vmul.f32 %v685, %v687
  %v692 = vperm.slane %v640, 0
  %v694 = vadd.f32 %v689, %v692
  %v695 = vadd.f32 %v690, %v692
  %v696 = vmax.f32 %v694, 0.0
  %v697 = vmax.f32 %v695, 0.0
  %v698 = vpack.c.bf16 %v697, %v696
  %v699 = vld [vmem:[%s8] sm:$0xff]
  %v700 = vld [vmem:[%s8 + $0x8] sm:$0xff]
  %v701 = vld [vmem:[%s8 + $0x10] sm:$0xff]
  %v702 = vld [vmem:[%s8 + $0x18] sm:$0xff]
  %v707 = vunpack.c.l.b16 %v699
  %v708 = vunpack.c.h.b16 %v699
  %v709 = vunpack.c.l.b16 %v700
  %v710 = vunpack.c.h.b16 %v700
  %v711 = vunpack.c.l.b16 %v701
  %v712 = vunpack.c.h.b16 %v701
  %v713 = vunpack.c.l.b16 %v702
  %v714 = vunpack.c.h.b16 %v702
  %v715 = vpack.c.b16 %v709, %v707
  %v716 = vpack.c.b16 %v710, %v708
  %v717 = vpack.c.b16 %v713, %v711
  %v718 = vpack.c.b16 %v714, %v712
  %v724 = vsel %vm149, %v698, 0
  %726 = vmatpush.bf16.msra.mxu0 0
  %727 = vmatpush.bf16.msra.mxu0 0
  %728 = vmatpush.bf16.msra.mxu0 0
  %729 = vmatpush.bf16.msra.mxu0 0
  %730 = vmatpush.bf16.msra.mxu0 0
  %731 = vmatpush.bf16.msra.mxu0 0
  %732 = vmatpush.bf16.msra.mxu0 %v717
  %733 = vmatpush.bf16.msra.mxu0 %v715
  %734 = vmatmul.bf16.gmra.mxu0 %v724
  %v735 = vpop.f32.mrf.mxu0
  %v736 = vadd.f32 0.0, %v735
  %v737 = vpop.f32.mrf.mxu0
  %v738 = vadd.f32 0.0, %v737
  %739 = vdwg.mxu0
  %740 = vmatpush.bf16.msra.mxu0 0
  %741 = vmatpush.bf16.msra.mxu0 0
  %742 = vmatpush.bf16.msra.mxu0 0
  %743 = vmatpush.bf16.msra.mxu0 0
  %744 = vmatpush.bf16.msra.mxu0 0
  %745 = vmatpush.bf16.msra.mxu0 0
  %746 = vmatpush.bf16.msra.mxu0 %v718
  %747 = vmatpush.bf16.msra.mxu0 %v716
  %748 = vmatmul.bf16.gmra.mxu0 %v724
  %v749 = vpop.f32.mrf.mxu0
  %v750 = vadd.f32 0.0, %v749
  %v751 = vpop.f32.mrf.mxu0
  %v752 = vadd.f32 0.0, %v751
  %753 = vdwg.mxu0
  %v754 = vld [vmem:[%s9] sm:$0x3]
  %v755 = vld [vmem:[%s10] sm:$0x3]
  %v756 = vsel %vm373, %v738, 0.0
  %v757 = vadd.f32 %v736, %v756
  %v758 = vrot.slane %v757, 4
  %v759 = vadd.f32 %v757, %v758
  %v760 = vrot.slane %v759, 2
  %v761 = vadd.f32 %v759, %v760
  %v762 = vrot.slane %v761, 1
  %v763 = vadd.f32 %v761, %v762
  %v764 = vsel %vm373, %v752, 0.0
  %v765 = vadd.f32 %v750, %v764
  %v766 = vrot.slane %v765, 4
  %v767 = vadd.f32 %v765, %v766
  %v768 = vrot.slane %v767, 2
  %v769 = vadd.f32 %v767, %v768
  %v770 = vrot.slane %v769, 1
  %v771 = vadd.f32 %v769, %v770
  %v772 = vmul.f32 %v763, %v657
  %v773 = vmul.f32 %v771, %v657
  %v774 = vsub.f32 %v736, %v772
  %v775 = vsub.f32 %v750, %v773
  %v776 = vsub.f32 %v738, %v772
  %v777 = vsub.f32 %v752, %v773
  %v778 = vmul.f32 %v774, %v774
  %v779 = vmul.f32 %v775, %v775
  %v780 = vmul.f32 %v776, %v776
  %v781 = vmul.f32 %v777, %v777
  %v782 = vsel %vm373, %v780, 0.0
  %v783 = vadd.f32 %v778, %v782
  %v784 = vrot.slane %v783, 4
  %v785 = vadd.f32 %v783, %v784
  %v786 = vrot.slane %v785, 2
  %v787 = vadd.f32 %v785, %v786
  %v788 = vrot.slane %v787, 1
  %v789 = vadd.f32 %v787, %v788
  %v790 = vsel %vm373, %v781, 0.0
  %v791 = vadd.f32 %v779, %v790
  %v792 = vrot.slane %v791, 4
  %v793 = vadd.f32 %v791, %v792
  %v794 = vrot.slane %v793, 2
  %v795 = vadd.f32 %v793, %v794
  %v796 = vrot.slane %v795, 1
  %v797 = vadd.f32 %v795, %v796
  %v798 = vmul.f32 %v789, %v657
  %v799 = vmul.f32 %v797, %v657
  %v800 = vadd.f32 %v798, 1e-05
  %v801 = vadd.f32 %v799, 1e-05
  %v802 = vrsqrt.pop %v800
  %v803 = vmul.f32 %v802, %v800
  %v804 = vmul.f32 %v803, %v802
  %v805 = vmul.f32 0.5, %v804
  %v806 = vsub.f32 1.5, %v805
  %v807 = vmul.f32 %v802, %v806
  %vm808 = vweird.f32 %v800
  %vm809 = vweird.f32 %v802
  %vm810 = vmor %vm808, %vm809
  %v811 = vsel %vm810, %v802, %v807
  %v812 = vrsqrt.pop %v801
  %v813 = vmul.f32 %v812, %v801
  %v814 = vmul.f32 %v813, %v812
  %v815 = vmul.f32 0.5, %v814
  %v816 = vsub.f32 1.5, %v815
  %v817 = vmul.f32 %v812, %v816
  %vm818 = vweird.f32 %v801
  %vm819 = vweird.f32 %v812
  %vm820 = vmor %vm818, %vm819
  %v821 = vsel %vm820, %v812, %v817
  %v822 = vmul.f32 %v774, %v811
  %v823 = vmul.f32 %v775, %v821
  %v824 = vmul.f32 %v776, %v811
  %v825 = vmul.f32 %v777, %v821
  %v827 = vperm.slane %v754, 0
  %v828 = vperm.slane %v754, 1
  %v831 = vmul.f32 %v822, %v827
  %v832 = vmul.f32 %v823, %v828
  %v833 = vmul.f32 %v824, %v827
  %v834 = vmul.f32 %v825, %v828
  %v836 = vperm.slane %v755, 0
  %v837 = vperm.slane %v755, 1
  %v840 = vadd.f32 %v831, %v836
  %v841 = vadd.f32 %v832, %v837
  %v842 = vadd.f32 %v833, %v836
  %v843 = vadd.f32 %v834, %v837
  %v844 = vld [vmem:[%s1] sm:$0xf]
  %v845 = vld [vmem:[%s1 + $0x4] sm:$0x7]
  %v846 = vld [vmem:[%s11] sm:$0xff]
  %v847 = vld [vmem:[%s11 + $0x8] sm:$0xff]
  %v848 = vld [vmem:[%s11 + $0x10] sm:$0xff]
  %v849 = vld [vmem:[%s11 + $0x18] sm:$0xff]
  %v850 = vld [vmem:[%s11 + $0x20] sm:$0xff]
  %v851 = vld [vmem:[%s11 + $0x28] sm:$0xff]
  %v852 = vld [vmem:[%s11 + $0x30] sm:$0xff]
  %v853 = vld [vmem:[%s11 + $0x38] sm:$0xff]
  %v854 = vld [vmem:[%s11 + $0x40] sm:$0xff]
  %v855 = vld [vmem:[%s11 + $0x48] sm:$0xff]
  %v856 = vld [vmem:[%s11 + $0x50] sm:$0xff]
  %v857 = vld [vmem:[%s11 + $0x58] sm:$0xff]
  %v858 = vld [vmem:[%s11 + $0x60] sm:$0xff]
  %v859 = vld [vmem:[%s11 + $0x68] sm:$0xff]
  %v860 = vld [vmem:[%s11 + $0x70] sm:$0xff]
  %v861 = vld [vmem:[%s11 + $0x78] sm:$0xff]
  %v864 = vunpack.c.l.b16 %v844
  %v865 = vunpack.c.l.b16 %v845
  %v866 = vpack.c.b16 %v865, %v864
  %v884 = vunpack.c.l.b16 %v846
  %v885 = vunpack.c.h.b16 %v846
  %v886 = vunpack.c.l.b16 %v847
  %v887 = vunpack.c.h.b16 %v847
  %v888 = vunpack.c.l.b16 %v848
  %v889 = vunpack.c.h.b16 %v848
  %v890 = vunpack.c.l.b16 %v849
  %v891 = vunpack.c.h.b16 %v849
  %v892 = vunpack.c.l.b16 %v850
  %v893 = vunpack.c.h.b16 %v850
  %v894 = vunpack.c.l.b16 %v851
  %v895 = vunpack.c.h.b16 %v851
  %v896 = vunpack.c.l.b16 %v852
  %v897 = vunpack.c.h.b16 %v852
  %v898 = vunpack.c.l.b16 %v853
  %v899 = vunpack.c.h.b16 %v853
  %v900 = vunpack.c.l.b16 %v854
  %v901 = vunpack.c.h.b16 %v854
  %v902 = vunpack.c.l.b16 %v855
  %v903 = vunpack.c.h.b16 %v855
  %v904 = vunpack.c.l.b16 %v856
  %v905 = vunpack.c.h.b16 %v856
  %v906 = vunpack.c.l.b16 %v857
  %v907 = vunpack.c.h.b16 %v857
  %v908 = vunpack.c.l.b16 %v858
  %v909 = vunpack.c.h.b16 %v858
  %v910 = vunpack.c.l.b16 %v859
  %v911 = vunpack.c.h.b16 %v859
  %v912 = vunpack.c.l.b16 %v860
  %v913 = vunpack.c.h.b16 %v860
  %v914 = vunpack.c.l.b16 %v861
  %v915 = vunpack.c.h.b16 %v861
  %v916 = vpack.c.b16 %v886, %v884
  %v917 = vpack.c.b16 %v887, %v885
  %v918 = vpack.c.b16 %v890, %v888
  %v919 = vpack.c.b16 %v891, %v889
  %v920 = vpack.c.b16 %v894, %v892
  %v921 = vpack.c.b16 %v895, %v893
  %v922 = vpack.c.b16 %v898, %v896
  %v923 = vpack.c.b16 %v899, %v897
  %v924 = vpack.c.b16 %v902, %v900
  %v925 = vpack.c.b16 %v903, %v901
  %v926 = vpack.c.b16 %v906, %v904
  %v927 = vpack.c.b16 %v907, %v905
  %v928 = vpack.c.b16 %v910, %v908
  %v929 = vpack.c.b16 %v911, %v909
  %v930 = vpack.c.b16 %v914, %v912
  %v931 = vpack.c.b16 %v915, %v913
  %948 = vmatpush.bf16.msra.mxu0 %v930
  %949 = vmatpush.bf16.msra.mxu0 %v928
  %950 = vmatpush.bf16.msra.mxu0 %v926
  %951 = vmatpush.bf16.msra.mxu0 %v924
  %952 = vmatpush.bf16.msra.mxu0 %v922
  %953 = vmatpush.bf16.msra.mxu0 %v920
  %954 = vmatpush.bf16.msra.mxu0 %v918
  %955 = vmatpush.bf16.msra.mxu0 %v916
  %956 = vmatmul.bf16.gmra.mxu0 %v866
  %v957 = vpop.f32.mrf.mxu0
  %v958 = vadd.f32 0.0, %v957
  %v959 = vpop.f32.mrf.mxu0
  %v960 = vadd.f32 0.0, %v959
  %961 = vdwg.mxu0
  %962 = vmatpush.bf16.msra.mxu0 %v931
  %963 = vmatpush.bf16.msra.mxu0 %v929
  %964 = vmatpush.bf16.msra.mxu0 %v927
  %965 = vmatpush.bf16.msra.mxu0 %v925
  %966 = vmatpush.bf16.msra.mxu0 %v923
  %967 = vmatpush.bf16.msra.mxu0 %v921
  %968 = vmatpush.bf16.msra.mxu0 %v919
  %969 = vmatpush.bf16.msra.mxu0 %v917
  %970 = vmatmul.bf16.gmra.mxu0 %v866
  %v971 = vpop.f32.mrf.mxu0
  %v972 = vadd.f32 0.0, %v971
  %v973 = vpop.f32.mrf.mxu0
  %v974 = vadd.f32 0.0, %v973
  %975 = vdwg.mxu0
  %v976 = vld [vmem:[%s12] sm:$0x3]
  %v977 = vld [vmem:[%s13] sm:$0x3]
  %v978 = vsel %vm373, %v960, 0.0
  %v979 = vadd.f32 %v958, %v978
  %v980 = vrot.slane %v979, 4
  %v981 = vadd.f32 %v979, %v980
  %v982 = vrot.slane %v981, 2
  %v983 = vadd.f32 %v981, %v982
  %v984 = vrot.slane %v983, 1
  %v985 = vadd.f32 %v983, %v984
  %v986 = vsel %vm373, %v974, 0.0
  %v987 = vadd.f32 %v972, %v986
  %v988 = vrot.slane %v987, 4
  %v989 = vadd.f32 %v987, %v988
  %v990 = vrot.slane %v989, 2
  %v991 = vadd.f32 %v989, %v990
  %v992 = vrot.slane %v991, 1
  %v993 = vadd.f32 %v991, %v992
  %v994 = vmul.f32 %v985, %v657
  %v995 = vmul.f32 %v993, %v657
  %v996 = vsub.f32 %v958, %v994
  %v997 = vsub.f32 %v972, %v995
  %v998 = vsub.f32 %v960, %v994
  %v999 = vsub.f32 %v974, %v995
  %v1000 = vmul.f32 %v996, %v996
  %v1001 = vmul.f32 %v997, %v997
  %v1002 = vmul.f32 %v998, %v998
  %v1003 = vmul.f32 %v999, %v999
  %v1004 = vsel %vm373, %v1002, 0.0
  %v1005 = vadd.f32 %v1000, %v1004
  %v1006 = vrot.slane %v1005, 4
  %v1007 = vadd.f32 %v1005, %v1006
  %v1008 = vrot.slane %v1007, 2
  %v1009 = vadd.f32 %v1007, %v1008
  %v1010 = vrot.slane %v1009, 1
  %v1011 = vadd.f32 %v1009, %v1010
  %v1012 = vsel %vm373, %v1003, 0.0
  %v1013 = vadd.f32 %v1001, %v1012
  %v1014 = vrot.slane %v1013, 4
  %v1015 = vadd.f32 %v1013, %v1014
  %v1016 = vrot.slane %v1015, 2
  %v1017 = vadd.f32 %v1015, %v1016
  %v1018 = vrot.slane %v1017, 1
  %v1019 = vadd.f32 %v1017, %v1018
  %v1020 = vmul.f32 %v1011, %v657
  %v1021 = vmul.f32 %v1019, %v657
  %v1022 = vadd.f32 %v1020, 1e-05
  %v1023 = vadd.f32 %v1021, 1e-05
  %v1024 = vrsqrt.pop %v1022
  %v1025 = vmul.f32 %v1024, %v1022
  %v1026 = vmul.f32 %v1025, %v1024
  %v1027 = vmul.f32 0.5, %v1026
  %v1028 = vsub.f32 1.5, %v1027
  %v1029 = vmul.f32 %v1024, %v1028
  %vm1030 = vweird.f32 %v1022
  %vm1031 = vweird.f32 %v1024
  %vm1032 = vmor %vm1030, %vm1031
  %v1033 = vsel %vm1032, %v1024, %v1029
  %v1034 = vrsqrt.pop %v1023
  %v1035 = vmul.f32 %v1034, %v1023
  %v1036 = vmul.f32 %v1035, %v1034
  %v1037 = vmul.f32 0.5, %v1036
  %v1038 = vsub.f32 1.5, %v1037
  %v1039 = vmul.f32 %v1034, %v1038
  %vm1040 = vweird.f32 %v1023
  %vm1041 = vweird.f32 %v1034
  %vm1042 = vmor %vm1040, %vm1041
  %v1043 = vsel %vm1042, %v1034, %v1039
  %v1044 = vmul.f32 %v996, %v1033
  %v1045 = vmul.f32 %v997, %v1043
  %v1046 = vmul.f32 %v998, %v1033
  %v1047 = vmul.f32 %v999, %v1043
  %v1049 = vperm.slane %v976, 0
  %v1050 = vperm.slane %v976, 1
  %v1053 = vmul.f32 %v1044, %v1049
  %v1054 = vmul.f32 %v1045, %v1050
  %v1055 = vmul.f32 %v1046, %v1049
  %v1056 = vmul.f32 %v1047, %v1050
  %v1058 = vperm.slane %v977, 0
  %v1059 = vperm.slane %v977, 1
  %v1062 = vadd.f32 %v1053, %v1058
  %v1063 = vadd.f32 %v1054, %v1059
  %v1064 = vadd.f32 %v1055, %v1058
  %v1065 = vadd.f32 %v1056, %v1059
  %v1066 = vadd.f32 %v840, %v1062
  %v1067 = vadd.f32 %v841, %v1063
  %v1068 = vadd.f32 %v842, %v1064
  %v1069 = vadd.f32 %v843, %v1065
  %v1070 = vmax.f32 %v1066, 0.0
  %v1071 = vmax.f32 %v1067, 0.0
  %v1072 = vmax.f32 %v1068, 0.0
  %v1073 = vmax.f32 %v1069, 0.0
  %v1074 = vpack.c.bf16 %v1071, %v1070
  %v1075 = vpack.c.bf16 %v1073, %v1072
  %1076 = vst [vmem:[%s14] sm:$0xff] %v1074
  %1077 = vst [vmem:[%s14 + $0x8] sm:$0x77] %v1075
  // Predicated region
  $region58: #{resnext_forward.8} parent=0 // pred_check
    _
  $region59: #{resnext_forward.8} parent=0 // pred_check_branch
    %1079 = sbr.rel (0) target = $region61
  $region60: #{resnext_forward.8} parent=0 // pred_region
    _
  $region61: #{resnext_forward.8} parent=0 // pred_fallthru
    _
  // Predicated region
  $region62: #{resnext_forward.8} parent=0 // pred_check
    _
  $region63: #{resnext_forward.8} parent=0 // pred_check_branch
    %1081 = sbr.rel (0) target = $region65
  $region64: #{resnext_forward.8} parent=0 // pred_region
    _
  $region65: #{resnext_forward.8} parent=0 // pred_fallthru
    _

</llo_original>
